<compile_context>
chip_gen: v7x
topology: tpu7x:2x2x1
jax: 0.10.0
libtpu: 0.0.40
codegen_flags: <defaults>
</compile_context>

<pallas_src>
import functools

import jax
import jax.numpy as jnp
import numpy as np
from jax.experimental import pallas as pl
from jax.experimental.pallas import tpu as pltpu


# ----------------------------- Pallas kernel ------------------------------

def _basenet_kernel(*refs, layer_cfg, layer_widx, shifts, g_len, s_pad):
    """Fused conv stack.

    refs = (mask_ref, w_ref_0 ... w_ref_{n_w-1}, x_ref, o_ref, buf_ref)

      mask_ref : (1, g_len) f32  -- 1.0 on interior pixels, 0.0 on pad ring/tail
      w_ref_k  : (cout, KH*KW*cin + 1) f32 -- packed weights, bias in last col
      x_ref    : (1, cin0, g_len)          -- spatially pre-padded, flat input
      o_ref    : (1, cout_last, g_len)
      buf_ref  : (c_max, s_pad + g_len + s_pad) f32 VMEM scratch holding the
                 current activation in padded flat layout (margins stay zero).
    """
    n_w = max(layer_widx) + 1
    mask_ref = refs[0]
    w_refs = refs[1:1 + n_w]
    x_ref = refs[1 + n_w]
    o_ref = refs[2 + n_w]
    buf_ref = refs[3 + n_w]

    taps = len(shifts)
    n_layers = len(layer_cfg)

    # Zero the scratch: shift margins + pad ring must read as zeros.
    buf_ref[...] = jnp.zeros(buf_ref.shape, buf_ref.dtype)

    # Stage the (padded, flattened) input as layer 0's activation.
    cin0 = layer_cfg[0][0]
    buf_ref[0:cin0, s_pad:s_pad + g_len] = (
        x_ref[...].reshape(cin0, g_len).astype(jnp.float32))

    interior = mask_ref[...]                                   # (1, g_len)

    for li, (cin, cout, relu) in enumerate(layer_cfg):
        w_ref = w_refs[layer_widx[li]]
        # Bias column -> accumulator init (lane broadcast).
        b_col = w_ref[:, taps * cin:taps * cin + 1]            # (cout, 1)
        acc = jnp.broadcast_to(b_col, (cout, g_len))
        # KH*KW shifted multiply-accumulates on the VPU.
        for t, s in enumerate(shifts):
            tap = buf_ref[0:cin, s_pad + s:s_pad + s + g_len]  # (cin, g_len)
            for ci in range(cin):
                w_col = w_ref[:, t * cin + ci:t * cin + ci + 1]  # (cout, 1)
                acc = acc + w_col * tap[ci:ci + 1, :]
        if relu:
            acc = jnp.maximum(acc, 0.0)
        if li + 1 < n_layers:
            # Zero the pad ring / tail and stage as the next layer's input.
            buf_ref[0:cout, s_pad:s_pad + g_len] = acc * interior
        else:
            o_ref[...] = acc.astype(o_ref.dtype).reshape(o_ref.shape)


# ------------------------------ host helpers -------------------------------

def _pack_layer(w, b):
    """(KH,KW,Cin,Cout) weights + (Cout,) bias -> (Cout, KH*KW*Cin + 1)."""
    kh, kw, cin, cout = w.shape
    wt = jnp.transpose(jnp.reshape(w, (kh * kw * cin, cout)))  # (cout, taps*cin)
    return jnp.concatenate([wt, jnp.reshape(b, (cout, 1))], axis=1).astype(jnp.float32)


def _interior_mask(H, W, KH, KW, g_pad):
    ph, pw = KH // 2, KW // 2
    Hp, Wp = H + 2 * ph, W + 2 * pw
    m = np.zeros((Hp, Wp), np.float32)
    m[ph:ph + H, pw:pw + W] = 1.0
    flat = np.zeros((1, g_pad), np.float32)
    flat[0, :Hp * Wp] = m.reshape(-1)
    return jnp.asarray(flat)


def _layer_specs(params, layer_count):
    if layer_count == 1:
        return [(params["conv_single_w"], params["conv_single_b"], False)]
    specs = [(params["convi_w"], params["convi_b"], True)]
    for _ in range(layer_count - 2):
        specs.append((params["convm_w"], params["convm_b"], True))
    specs.append((params["convl_w"], params["convl_b"], False))
    return specs


# ------------------------------ forward -----------------------------------

def basenet_forward(params, x_nchw, *, layer_count, kern_size):
    specs = _layer_specs(params, layer_count)
    N, C0, H, W = x_nchw.shape
    KH = KW = kern_size
    assert KH % 2 == 1, "odd kernel sizes only ('same' padding)"
    ph, pw = KH // 2, KW // 2
    Hp, Wp = H + 2 * ph, W + 2 * pw
    G = Hp * Wp
    g_pad = ((G + 127) // 128) * 128           # lane-dense flat spatial length
    s_max = ph * Wp + pw                       # max |tap shift|
    s_pad = ((s_max + 127) // 128) * 128       # lane-aligned scratch margin
    taps = KH * KW
    shifts = tuple((dy - ph) * Wp + (dx - pw)
                   for dy in range(KH) for dx in range(KW))

    # Pack + dedupe per-layer weights (convm is shared by all middle layers).
    packed, layer_widx, layer_cfg, seen = [], [], [], {}
    for (w, b, relu) in specs:
        key = id(w)
        if key not in seen:
            seen[key] = len(packed)
            packed.append(_pack_layer(w, b))
        layer_widx.append(seen[key])
        layer_cfg.append((int(w.shape[2]), int(w.shape[3]), bool(relu)))
    layer_cfg = tuple(layer_cfg)
    layer_widx = tuple(layer_widx)
    cout_last = layer_cfg[-1][1]
    c_max = max(max(ci, co) for ci, co, _ in layer_cfg)

    mask = _interior_mask(H, W, KH, KW, g_pad)

    # One cheap spatial pad of the 1-channel input, then flatten to the
    # lane-dense (N, C, g_pad) layout; no per-layer HBM padding after this.
    xp = jnp.pad(x_nchw, ((0, 0), (0, 0), (ph, ph), (pw, pw)))
    xf = jnp.reshape(xp, (N, C0, G))
    xf = jnp.pad(xf, ((0, 0), (0, 0), (0, g_pad - G)))

    kernel = functools.partial(
        _basenet_kernel, layer_cfg=layer_cfg, layer_widx=layer_widx,
        shifts=shifts, g_len=g_pad, s_pad=s_pad)

    flops = 2 * N * H * W * taps * sum(ci * co for ci, co, _ in layer_cfg)
    bytes_accessed = 4 * (int(xf.size) + N * cout_last * g_pad
                          + sum(int(p.size) for p in packed) + int(mask.size))

    in_specs = (
        [pl.BlockSpec((1, g_pad), lambda n: (0, 0))]                   # mask
        + [pl.BlockSpec(p.shape, lambda n: (0, 0)) for p in packed]    # weights
        + [pl.BlockSpec((1, C0, g_pad), lambda n: (n, 0, 0))]          # x
    )
    out_specs = pl.BlockSpec((1, cout_last, g_pad), lambda n: (n, 0, 0))

    yf = pl.pallas_call(
        kernel,
        out_shape=jax.ShapeDtypeStruct((N, cout_last, g_pad), x_nchw.dtype),
        grid=(N,),
        in_specs=in_specs,
        out_specs=out_specs,
        scratch_shapes=[pltpu.VMEM((c_max, s_pad + g_pad + s_pad), jnp.float32)],
        compiler_params=pltpu.CompilerParams(
            dimension_semantics=("parallel",),     # batch across TCs on v7x
            vmem_limit_bytes=32 * 1024 * 1024),
        cost_estimate=pl.CostEstimate(flops=int(flops), transcendentals=0,
                                      bytes_accessed=int(bytes_accessed)),
    )(mask, *packed, xf)

    # Padded flat layout -> NCHW interior (matches PyTorch output convention).
    y = yf[:, :, :G].reshape(N, cout_last, Hp, Wp)
    return y[:, :, ph:ph + H, pw:pw + W]


# --------------------------- parameter init -------------------------------

def _init_conv(key, kh, kw, cin, cout):
    kw_key, kb_key = jax.random.split(key)
    fan_in = cin * kh * kw
    bound = 1.0 / np.sqrt(fan_in)
    # weights in kernel layout (KH, KW, Cin, Cout)
    w = jax.random.uniform(kw_key, (kh, kw, cin, cout), jnp.float32,
                           minval=-bound, maxval=bound)
    b = jax.random.uniform(kb_key, (cout,), jnp.float32,
                           minval=-bound, maxval=bound)
    return w, b


def init_basenet_params(key, kern_size, kern_count):
    k1, k2, k3, k4 = jax.random.split(key, 4)
    p = {}
    p["convi_w"], p["convi_b"] = _init_conv(k1, kern_size, kern_size, 1, kern_count)
    p["convm_w"], p["convm_b"] = _init_conv(k2, kern_size, kern_size, kern_count, kern_count)
    p["convl_w"], p["convl_b"] = _init_conv(k3, kern_size, kern_size, kern_count, 3)
    p["conv_single_w"], p["conv_single_b"] = _init_conv(k4, kern_size, kern_size, 1, 3)
    return p


# --------------------------- JAX reference --------------------------------

def _ref_conv(x_nchw, w, b, relu):
    kh, kw = w.shape[0], w.shape[1]
    y = jax.lax.conv_general_dilated(
        x_nchw, w, window_strides=(1, 1),
        padding=[(kh // 2, kh // 2), (kw // 2, kw // 2)],
        dimension_numbers=("NCHW", "HWIO", "NCHW"))
    y = y + b.reshape(1, -1, 1, 1)
    return jnp.maximum(y, 0.0) if relu else y


def basenet_forward_ref(params, x_nchw, layer_count):
    y = x_nchw
    for (w, b, relu) in _layer_specs(params, layer_count):
        y = _ref_conv(y, w, b, relu)
    return y


# ------------------------------- main --------------------------------------

if __name__ == "__main__":
    layer_count = 3
    kern_size = 3
    kern_count = 4

    key = jax.random.PRNGKey(0)
    pkey, xkey = jax.random.split(key)
    params = init_basenet_params(pkey, kern_size, kern_count)

    # grayscale NCHW input, as in the PyTorch module
    x = jax.random.normal(xkey, (2, 1, 16, 16), jnp.float32)

    fwd = jax.jit(functools.partial(basenet_forward,
                                    layer_count=layer_count,
                                    kern_size=kern_size))
    out = jax.block_until_ready(fwd(params, x))

    ref = basenet_forward_ref(params, x, layer_count)
    assert out.shape == (2, 3, 16, 16), out.shape
    max_err = float(jnp.max(jnp.abs(out - ref)))
    assert max_err < 1e-4, max_err

    print("KERNEL_OK")
</pallas_src>

<mosaic_0001>
module attributes {stable_mosaic.version = 11 : i64} {
  func.func @_basenet_kernel(%arg0: i32, %arg1: memref<1x384xf32, #tpu.memory_space<vmem>>, %arg2: memref<4x10xf32, #tpu.memory_space<vmem>>, %arg3: memref<4x37xf32, #tpu.memory_space<vmem>>, %arg4: memref<3x37xf32, #tpu.memory_space<vmem>>, %arg5: memref<1x1x384xf32, #tpu.memory_space<vmem>>, %arg6: memref<1x3x384xf32, #tpu.memory_space<vmem>>, %arg7: memref<4x640xf32, #tpu.memory_space<vmem>>) attributes {dimension_semantics = [#tpu.dimension_semantics<parallel>], iteration_bounds = array<i64: 2>, scalar_prefetch = 0 : i64, scratch_operands = 1 : i64, tpu.core_type = #tpu.core_type<tc>, window_params = [{pipeline_mode = #tpu.pipeline_mode<synchronous>, transform_indices = @transform_0, window_bounds = array<i64: 1, 384>}, {pipeline_mode = #tpu.pipeline_mode<synchronous>, transform_indices = @transform_1, window_bounds = array<i64: 4, 10>}, {pipeline_mode = #tpu.pipeline_mode<synchronous>, transform_indices = @transform_2, window_bounds = array<i64: 4, 37>}, {pipeline_mode = #tpu.pipeline_mode<synchronous>, transform_indices = @transform_3, window_bounds = array<i64: 3, 37>}, {transform_indices = @transform_4, window_bounds = array<i64: 1, 1, 384>}, {transform_indices = @transform_5, window_bounds = array<i64: 1, 3, 384>}]} {
    %cst = arith.constant 0.000000e+00 : f32
    %0 = vector.broadcast %cst : f32 to vector<4x640xf32>
    %c0 = arith.constant 0 : index
    %c0_0 = arith.constant 0 : index
    %1 = vector.load %arg7[%c0, %c0_0] : memref<4x640xf32, #tpu.memory_space<vmem>>, vector<4x640xf32>
    tpu.vector_store %arg7[%c0, %c0_0], %0 {strides = array<i32>} : memref<4x640xf32, #tpu.memory_space<vmem>>, vector<4x640xf32>,
    %c0_1 = arith.constant 0 : index
    %c0_2 = arith.constant 0 : index
    %c0_3 = arith.constant 0 : index
    %2 = vector.load %arg5[%c0_1, %c0_2, %c0_3] : memref<1x1x384xf32, #tpu.memory_space<vmem>>, vector<1x1x384xf32>
    %3 = vector.shape_cast %2 : vector<1x1x384xf32> to vector<1x384xf32>
    %c0_4 = arith.constant 0 : index
    %c128 = arith.constant 128 : index
    %4 = vector.load %arg7[%c0_4, %c128] : memref<4x640xf32, #tpu.memory_space<vmem>>, vector<1x384xf32>
    tpu.vector_store %arg7[%c0_4, %c128], %3 {strides = array<i32>} : memref<4x640xf32, #tpu.memory_space<vmem>>, vector<1x384xf32>,
    %c0_5 = arith.constant 0 : index
    %c0_6 = arith.constant 0 : index
    %5 = vector.load %arg1[%c0_5, %c0_6] : memref<1x384xf32, #tpu.memory_space<vmem>>, vector<1x384xf32>
    %c0_7 = arith.constant 0 : index
    %c9 = arith.constant 9 : index
    %6 = vector.load %arg2[%c0_7, %c9] : memref<4x10xf32, #tpu.memory_space<vmem>>, vector<4x1xf32>
    %7 = vector.shape_cast %6 : vector<4x1xf32> to vector<4x1xf32>
    %8 = vector.broadcast %7 : vector<4x1xf32> to vector<4x384xf32>
    %c0_8 = arith.constant 0 : index
    %c109 = arith.constant 109 : index
    %9 = vector.load %arg7[%c0_8, %c109] : memref<4x640xf32, #tpu.memory_space<vmem>>, vector<1x384xf32>
    %c0_9 = arith.constant 0 : index
    %c0_10 = arith.constant 0 : index
    %10 = vector.load %arg2[%c0_9, %c0_10] : memref<4x10xf32, #tpu.memory_space<vmem>>, vector<4x1xf32>
    %11 = vector.broadcast %10 : vector<4x1xf32> to vector<4x384xf32>
    %12 = vector.broadcast %9 : vector<1x384xf32> to vector<4x384xf32>
    %13 = arith.mulf %11, %12 : vector<4x384xf32>
    %14 = arith.addf %8, %13 : vector<4x384xf32>
    %c0_11 = arith.constant 0 : index
    %c110 = arith.constant 110 : index
    %15 = vector.load %arg7[%c0_11, %c110] : memref<4x640xf32, #tpu.memory_space<vmem>>, vector<1x384xf32>
    %c0_12 = arith.constant 0 : index
    %c1 = arith.constant 1 : index
    %16 = vector.load %arg2[%c0_12, %c1] : memref<4x10xf32, #tpu.memory_space<vmem>>, vector<4x1xf32>
    %17 = vector.broadcast %16 : vector<4x1xf32> to vector<4x384xf32>
    %18 = vector.broadcast %15 : vector<1x384xf32> to vector<4x384xf32>
    %19 = arith.mulf %17, %18 : vector<4x384xf32>
    %20 = arith.addf %14, %19 : vector<4x384xf32>
    %c0_13 = arith.constant 0 : index
    %c111 = arith.constant 111 : index
    %21 = vector.load %arg7[%c0_13, %c111] : memref<4x640xf32, #tpu.memory_space<vmem>>, vector<1x384xf32>
    %c0_14 = arith.constant 0 : index
    %c2 = arith.constant 2 : index
    %22 = vector.load %arg2[%c0_14, %c2] : memref<4x10xf32, #tpu.memory_space<vmem>>, vector<4x1xf32>
    %23 = vector.broadcast %22 : vector<4x1xf32> to vector<4x384xf32>
    %24 = vector.broadcast %21 : vector<1x384xf32> to vector<4x384xf32>
    %25 = arith.mulf %23, %24 : vector<4x384xf32>
    %26 = arith.addf %20, %25 : vector<4x384xf32>
    %c0_15 = arith.constant 0 : index
    %c127 = arith.constant 127 : index
    %27 = vector.load %arg7[%c0_15, %c127] : memref<4x640xf32, #tpu.memory_space<vmem>>, vector<1x384xf32>
    %c0_16 = arith.constant 0 : index
    %c3 = arith.constant 3 : index
    %28 = vector.load %arg2[%c0_16, %c3] : memref<4x10xf32, #tpu.memory_space<vmem>>, vector<4x1xf32>
    %29 = vector.broadcast %28 : vector<4x1xf32> to vector<4x384xf32>
    %30 = vector.broadcast %27 : vector<1x384xf32> to vector<4x384xf32>
    %31 = arith.mulf %29, %30 : vector<4x384xf32>
    %32 = arith.addf %26, %31 : vector<4x384xf32>
    %c0_17 = arith.constant 0 : index
    %c128_18 = arith.constant 128 : index
    %33 = vector.load %arg7[%c0_17, %c128_18] : memref<4x640xf32, #tpu.memory_space<vmem>>, vector<1x384xf32>
    %c0_19 = arith.constant 0 : index
    %c4 = arith.constant 4 : index
    %34 = vector.load %arg2[%c0_19, %c4] : memref<4x10xf32, #tpu.memory_space<vmem>>, vector<4x1xf32>
    %35 = vector.broadcast %34 : vector<4x1xf32> to vector<4x384xf32>
    %36 = vector.broadcast %33 : vector<1x384xf32> to vector<4x384xf32>
    %37 = arith.mulf %35, %36 : vector<4x384xf32>
    %38 = arith.addf %32, %37 : vector<4x384xf32>
    %c0_20 = arith.constant 0 : index
    %c129 = arith.constant 129 : index
    %39 = vector.load %arg7[%c0_20, %c129] : memref<4x640xf32, #tpu.memory_space<vmem>>, vector<1x384xf32>
    %c0_21 = arith.constant 0 : index
    %c5 = arith.constant 5 : index
    %40 = vector.load %arg2[%c0_21, %c5] : memref<4x10xf32, #tpu.memory_space<vmem>>, vector<4x1xf32>
    %41 = vector.broadcast %40 : vector<4x1xf32> to vector<4x384xf32>
    %42 = vector.broadcast %39 : vector<1x384xf32> to vector<4x384xf32>
    %43 = arith.mulf %41, %42 : vector<4x384xf32>
    %44 = arith.addf %38, %43 : vector<4x384xf32>
    %c0_22 = arith.constant 0 : index
    %c145 = arith.constant 145 : index
    %45 = vector.load %arg7[%c0_22, %c145] : memref<4x640xf32, #tpu.memory_space<vmem>>, vector<1x384xf32>
    %c0_23 = arith.constant 0 : index
    %c6 = arith.constant 6 : index
    %46 = vector.load %arg2[%c0_23, %c6] : memref<4x10xf32, #tpu.memory_space<vmem>>, vector<4x1xf32>
    %47 = vector.broadcast %46 : vector<4x1xf32> to vector<4x384xf32>
    %48 = vector.broadcast %45 : vector<1x384xf32> to vector<4x384xf32>
    %49 = arith.mulf %47, %48 : vector<4x384xf32>
    %50 = arith.addf %44, %49 : vector<4x384xf32>
    %c0_24 = arith.constant 0 : index
    %c146 = arith.constant 146 : index
    %51 = vector.load %arg7[%c0_24, %c146] : memref<4x640xf32, #tpu.memory_space<vmem>>, vector<1x384xf32>
    %c0_25 = arith.constant 0 : index
    %c7 = arith.constant 7 : index
    %52 = vector.load %arg2[%c0_25, %c7] : memref<4x10xf32, #tpu.memory_space<vmem>>, vector<4x1xf32>
    %53 = vector.broadcast %52 : vector<4x1xf32> to vector<4x384xf32>
    %54 = vector.broadcast %51 : vector<1x384xf32> to vector<4x384xf32>
    %55 = arith.mulf %53, %54 : vector<4x384xf32>
    %56 = arith.addf %50, %55 : vector<4x384xf32>
    %c0_26 = arith.constant 0 : index
    %c147 = arith.constant 147 : index
    %57 = vector.load %arg7[%c0_26, %c147] : memref<4x640xf32, #tpu.memory_space<vmem>>, vector<1x384xf32>
    %c0_27 = arith.constant 0 : index
    %c8 = arith.constant 8 : index
    %58 = vector.load %arg2[%c0_27, %c8] : memref<4x10xf32, #tpu.memory_space<vmem>>, vector<4x1xf32>
    %59 = vector.broadcast %58 : vector<4x1xf32> to vector<4x384xf32>
    %60 = vector.broadcast %57 : vector<1x384xf32> to vector<4x384xf32>
    %61 = arith.mulf %59, %60 : vector<4x384xf32>
    %62 = arith.addf %56, %61 : vector<4x384xf32>
    %cst_28 = arith.constant 0.000000e+00 : f32
    %63 = vector.broadcast %cst_28 : f32 to vector<4x384xf32>
    %64 = arith.maximumf %62, %63 : vector<4x384xf32>
    %65 = vector.broadcast %5 : vector<1x384xf32> to vector<4x384xf32>
    %66 = arith.mulf %64, %65 : vector<4x384xf32>
    %c0_29 = arith.constant 0 : index
    %c128_30 = arith.constant 128 : index
    %67 = vector.load %arg7[%c0_29, %c128_30] : memref<4x640xf32, #tpu.memory_space<vmem>>, vector<4x384xf32>
    tpu.vector_store %arg7[%c0_29, %c128_30], %66 {strides = array<i32>} : memref<4x640xf32, #tpu.memory_space<vmem>>, vector<4x384xf32>,
    %c0_31 = arith.constant 0 : index
    %c36 = arith.constant 36 : index
    %68 = vector.load %arg3[%c0_31, %c36] : memref<4x37xf32, #tpu.memory_space<vmem>>, vector<4x1xf32>
    %69 = vector.shape_cast %68 : vector<4x1xf32> to vector<4x1xf32>
    %70 = vector.broadcast %69 : vector<4x1xf32> to vector<4x384xf32>
    %c0_32 = arith.constant 0 : index
    %c109_33 = arith.constant 109 : index
    %71 = vector.load %arg7[%c0_32, %c109_33] : memref<4x640xf32, #tpu.memory_space<vmem>>, vector<4x384xf32>
    %c0_34 = arith.constant 0 : index
    %c0_35 = arith.constant 0 : index
    %72 = vector.load %arg3[%c0_34, %c0_35] : memref<4x37xf32, #tpu.memory_space<vmem>>, vector<4x1xf32>
    %73 = vector.extract_strided_slice %71 {offsets = [0, 0], sizes = [1, 384], strides = [1, 1]} : vector<4x384xf32> to vector<1x384xf32>
    %74 = vector.broadcast %72 : vector<4x1xf32> to vector<4x384xf32>
    %75 = vector.broadcast %73 : vector<1x384xf32> to vector<4x384xf32>
    %76 = arith.mulf %74, %75 : vector<4x384xf32>
    %77 = arith.addf %70, %76 : vector<4x384xf32>
    %c0_36 = arith.constant 0 : index
    %c1_37 = arith.constant 1 : index
    %78 = vector.load %arg3[%c0_36, %c1_37] : memref<4x37xf32, #tpu.memory_space<vmem>>, vector<4x1xf32>
    %79 = vector.extract_strided_slice %71 {offsets = [1, 0], sizes = [1, 384], strides = [1, 1]} : vector<4x384xf32> to vector<1x384xf32>
    %80 = vector.broadcast %78 : vector<4x1xf32> to vector<4x384xf32>
    %81 = vector.broadcast %79 : vector<1x384xf32> to vector<4x384xf32>
    %82 = arith.mulf %80, %81 : vector<4x384xf32>
    %83 = arith.addf %77, %82 : vector<4x384xf32>
    %c0_38 = arith.constant 0 : index
    %c2_39 = arith.constant 2 : index
    %84 = vector.load %arg3[%c0_38, %c2_39] : memref<4x37xf32, #tpu.memory_space<vmem>>, vector<4x1xf32>
    %85 = vector.extract_strided_slice %71 {offsets = [2, 0], sizes = [1, 384], strides = [1, 1]} : vector<4x384xf32> to vector<1x384xf32>
    %86 = vector.broadcast %84 : vector<4x1xf32> to vector<4x384xf32>
    %87 = vector.broadcast %85 : vector<1x384xf32> to vector<4x384xf32>
    %88 = arith.mulf %86, %87 : vector<4x384xf32>
    %89 = arith.addf %83, %88 : vector<4x384xf32>
    %c0_40 = arith.constant 0 : index
    %c3_41 = arith.constant 3 : index
    %90 = vector.load %arg3[%c0_40, %c3_41] : memref<4x37xf32, #tpu.memory_space<vmem>>, vector<4x1xf32>
    %91 = vector.extract_strided_slice %71 {offsets = [3, 0], sizes = [1, 384], strides = [1, 1]} : vector<4x384xf32> to vector<1x384xf32>
    %92 = vector.broadcast %90 : vector<4x1xf32> to vector<4x384xf32>
    %93 = vector.broadcast %91 : vector<1x384xf32> to vector<4x384xf32>
    %94 = arith.mulf %92, %93 : vector<4x384xf32>
    %95 = arith.addf %89, %94 : vector<4x384xf32>
    %c0_42 = arith.constant 0 : index
    %c110_43 = arith.constant 110 : index
    %96 = vector.load %arg7[%c0_42, %c110_43] : memref<4x640xf32, #tpu.memory_space<vmem>>, vector<4x384xf32>
    %c0_44 = arith.constant 0 : index
    %c4_45 = arith.constant 4 : index
    %97 = vector.load %arg3[%c0_44, %c4_45] : memref<4x37xf32, #tpu.memory_space<vmem>>, vector<4x1xf32>
    %98 = vector.extract_strided_slice %96 {offsets = [0, 0], sizes = [1, 384], strides = [1, 1]} : vector<4x384xf32> to vector<1x384xf32>
    %99 = vector.broadcast %97 : vector<4x1xf32> to vector<4x384xf32>
    %100 = vector.broadcast %98 : vector<1x384xf32> to vector<4x384xf32>
    %101 = arith.mulf %99, %100 : vector<4x384xf32>
    %102 = arith.addf %95, %101 : vector<4x384xf32>
    %c0_46 = arith.constant 0 : index
    %c5_47 = arith.constant 5 : index
    %103 = vector.load %arg3[%c0_46, %c5_47] : memref<4x37xf32, #tpu.memory_space<vmem>>, vector<4x1xf32>
    %104 = vector.extract_strided_slice %96 {offsets = [1, 0], sizes = [1, 384], strides = [1, 1]} : vector<4x384xf32> to vector<1x384xf32>
    %105 = vector.broadcast %103 : vector<4x1xf32> to vector<4x384xf32>
    %106 = vector.broadcast %104 : vector<1x384xf32> to vector<4x384xf32>
    %107 = arith.mulf %105, %106 : vector<4x384xf32>
    %108 = arith.addf %102, %107 : vector<4x384xf32>
    %c0_48 = arith.constant 0 : index
    %c6_49 = arith.constant 6 : index
    %109 = vector.load %arg3[%c0_48, %c6_49] : memref<4x37xf32, #tpu.memory_space<vmem>>, vector<4x1xf32>
    %110 = vector.extract_strided_slice %96 {offsets = [2, 0], sizes = [1, 384], strides = [1, 1]} : vector<4x384xf32> to vector<1x384xf32>
    %111 = vector.broadcast %109 : vector<4x1xf32> to vector<4x384xf32>
    %112 = vector.broadcast %110 : vector<1x384xf32> to vector<4x384xf32>
    %113 = arith.mulf %111, %112 : vector<4x384xf32>
    %114 = arith.addf %108, %113 : vector<4x384xf32>
    %c0_50 = arith.constant 0 : index
    %c7_51 = arith.constant 7 : index
    %115 = vector.load %arg3[%c0_50, %c7_51] : memref<4x37xf32, #tpu.memory_space<vmem>>, vector<4x1xf32>
    %116 = vector.extract_strided_slice %96 {offsets = [3, 0], sizes = [1, 384], strides = [1, 1]} : vector<4x384xf32> to vector<1x384xf32>
    %117 = vector.broadcast %115 : vector<4x1xf32> to vector<4x384xf32>
    %118 = vector.broadcast %116 : vector<1x384xf32> to vector<4x384xf32>
    %119 = arith.mulf %117, %118 : vector<4x384xf32>
    %120 = arith.addf %114, %119 : vector<4x384xf32>
    %c0_52 = arith.constant 0 : index
    %c111_53 = arith.constant 111 : index
    %121 = vector.load %arg7[%c0_52, %c111_53] : memref<4x640xf32, #tpu.memory_space<vmem>>, vector<4x384xf32>
    %c0_54 = arith.constant 0 : index
    %c8_55 = arith.constant 8 : index
    %122 = vector.load %arg3[%c0_54, %c8_55] : memref<4x37xf32, #tpu.memory_space<vmem>>, vector<4x1xf32>
    %123 = vector.extract_strided_slice %121 {offsets = [0, 0], sizes = [1, 384], strides = [1, 1]} : vector<4x384xf32> to vector<1x384xf32>
    %124 = vector.broadcast %122 : vector<4x1xf32> to vector<4x384xf32>
    %125 = vector.broadcast %123 : vector<1x384xf32> to vector<4x384xf32>
    %126 = arith.mulf %124, %125 : vector<4x384xf32>
    %127 = arith.addf %120, %126 : vector<4x384xf32>
    %c0_56 = arith.constant 0 : index
    %c9_57 = arith.constant 9 : index
    %128 = vector.load %arg3[%c0_56, %c9_57] : memref<4x37xf32, #tpu.memory_space<vmem>>, vector<4x1xf32>
    %129 = vector.extract_strided_slice %121 {offsets = [1, 0], sizes = [1, 384], strides = [1, 1]} : vector<4x384xf32> to vector<1x384xf32>
    %130 = vector.broadcast %128 : vector<4x1xf32> to vector<4x384xf32>
    %131 = vector.broadcast %129 : vector<1x384xf32> to vector<4x384xf32>
    %132 = arith.mulf %130, %131 : vector<4x384xf32>
    %133 = arith.addf %127, %132 : vector<4x384xf32>
    %c0_58 = arith.constant 0 : index
    %c10 = arith.constant 10 : index
    %134 = vector.load %arg3[%c0_58, %c10] : memref<4x37xf32, #tpu.memory_space<vmem>>, vector<4x1xf32>
    %135 = vector.extract_strided_slice %121 {offsets = [2, 0], sizes = [1, 384], strides = [1, 1]} : vector<4x384xf32> to vector<1x384xf32>
    %136 = vector.broadcast %134 : vector<4x1xf32> to vector<4x384xf32>
    %137 = vector.broadcast %135 : vector<1x384xf32> to vector<4x384xf32>
    %138 = arith.mulf %136, %137 : vector<4x384xf32>
    %139 = arith.addf %133, %138 : vector<4x384xf32>
    %c0_59 = arith.constant 0 : index
    %c11 = arith.constant 11 : index
    %140 = vector.load %arg3[%c0_59, %c11] : memref<4x37xf32, #tpu.memory_space<vmem>>, vector<4x1xf32>
    %141 = vector.extract_strided_slice %121 {offsets = [3, 0], sizes = [1, 384], strides = [1, 1]} : vector<4x384xf32> to vector<1x384xf32>
    %142 = vector.broadcast %140 : vector<4x1xf32> to vector<4x384xf32>
    %143 = vector.broadcast %141 : vector<1x384xf32> to vector<4x384xf32>
    %144 = arith.mulf %142, %143 : vector<4x384xf32>
    %145 = arith.addf %139, %144 : vector<4x384xf32>
    %c0_60 = arith.constant 0 : index
    %c127_61 = arith.constant 127 : index
    %146 = vector.load %arg7[%c0_60, %c127_61] : memref<4x640xf32, #tpu.memory_space<vmem>>, vector<4x384xf32>
    %c0_62 = arith.constant 0 : index
    %c12 = arith.constant 12 : index
    %147 = vector.load %arg3[%c0_62, %c12] : memref<4x37xf32, #tpu.memory_space<vmem>>, vector<4x1xf32>
    %148 = vector.extract_strided_slice %146 {offsets = [0, 0], sizes = [1, 384], strides = [1, 1]} : vector<4x384xf32> to vector<1x384xf32>
    %149 = vector.broadcast %147 : vector<4x1xf32> to vector<4x384xf32>
    %150 = vector.broadcast %148 : vector<1x384xf32> to vector<4x384xf32>
    %151 = arith.mulf %149, %150 : vector<4x384xf32>
    %152 = arith.addf %145, %151 : vector<4x384xf32>
    %c0_63 = arith.constant 0 : index
    %c13 = arith.constant 13 : index
    %153 = vector.load %arg3[%c0_63, %c13] : memref<4x37xf32, #tpu.memory_space<vmem>>, vector<4x1xf32>
    %154 = vector.extract_strided_slice %146 {offsets = [1, 0], sizes = [1, 384], strides = [1, 1]} : vector<4x384xf32> to vector<1x384xf32>
    %155 = vector.broadcast %153 : vector<4x1xf32> to vector<4x384xf32>
    %156 = vector.broadcast %154 : vector<1x384xf32> to vector<4x384xf32>
    %157 = arith.mulf %155, %156 : vector<4x384xf32>
    %158 = arith.addf %152, %157 : vector<4x384xf32>
    %c0_64 = arith.constant 0 : index
    %c14 = arith.constant 14 : index
    %159 = vector.load %arg3[%c0_64, %c14] : memref<4x37xf32, #tpu.memory_space<vmem>>, vector<4x1xf32>
    %160 = vector.extract_strided_slice %146 {offsets = [2, 0], sizes = [1, 384], strides = [1, 1]} : vector<4x384xf32> to vector<1x384xf32>
    %161 = vector.broadcast %159 : vector<4x1xf32> to vector<4x384xf32>
    %162 = vector.broadcast %160 : vector<1x384xf32> to vector<4x384xf32>
    %163 = arith.mulf %161, %162 : vector<4x384xf32>
    %164 = arith.addf %158, %163 : vector<4x384xf32>
    %c0_65 = arith.constant 0 : index
    %c15 = arith.constant 15 : index
    %165 = vector.load %arg3[%c0_65, %c15] : memref<4x37xf32, #tpu.memory_space<vmem>>, vector<4x1xf32>
    %166 = vector.extract_strided_slice %146 {offsets = [3, 0], sizes = [1, 384], strides = [1, 1]} : vector<4x384xf32> to vector<1x384xf32>
    %167 = vector.broadcast %165 : vector<4x1xf32> to vector<4x384xf32>
    %168 = vector.broadcast %166 : vector<1x384xf32> to vector<4x384xf32>
    %169 = arith.mulf %167, %168 : vector<4x384xf32>
    %170 = arith.addf %164, %169 : vector<4x384xf32>
    %c0_66 = arith.constant 0 : index
    %c128_67 = arith.constant 128 : index
    %171 = vector.load %arg7[%c0_66, %c128_67] : memref<4x640xf32, #tpu.memory_space<vmem>>, vector<4x384xf32>
    %c0_68 = arith.constant 0 : index
    %c16 = arith.constant 16 : index
    %172 = vector.load %arg3[%c0_68, %c16] : memref<4x37xf32, #tpu.memory_space<vmem>>, vector<4x1xf32>
    %173 = vector.extract_strided_slice %171 {offsets = [0, 0], sizes = [1, 384], strides = [1, 1]} : vector<4x384xf32> to vector<1x384xf32>
    %174 = vector.broadcast %172 : vector<4x1xf32> to vector<4x384xf32>
    %175 = vector.broadcast %173 : vector<1x384xf32> to vector<4x384xf32>
    %176 = arith.mulf %174, %175 : vector<4x384xf32>
    %177 = arith.addf %170, %176 : vector<4x384xf32>
    %c0_69 = arith.constant 0 : index
    %c17 = arith.constant 17 : index
    %178 = vector.load %arg3[%c0_69, %c17] : memref<4x37xf32, #tpu.memory_space<vmem>>, vector<4x1xf32>
    %179 = vector.extract_strided_slice %171 {offsets = [1, 0], sizes = [1, 384], strides = [1, 1]} : vector<4x384xf32> to vector<1x384xf32>
    %180 = vector.broadcast %178 : vector<4x1xf32> to vector<4x384xf32>
    %181 = vector.broadcast %179 : vector<1x384xf32> to vector<4x384xf32>
    %182 = arith.mulf %180, %181 : vector<4x384xf32>
    %183 = arith.addf %177, %182 : vector<4x384xf32>
    %c0_70 = arith.constant 0 : index
    %c18 = arith.constant 18 : index
    %184 = vector.load %arg3[%c0_70, %c18] : memref<4x37xf32, #tpu.memory_space<vmem>>, vector<4x1xf32>
    %185 = vector.extract_strided_slice %171 {offsets = [2, 0], sizes = [1, 384], strides = [1, 1]} : vector<4x384xf32> to vector<1x384xf32>
    %186 = vector.broadcast %184 : vector<4x1xf32> to vector<4x384xf32>
    %187 = vector.broadcast %185 : vector<1x384xf32> to vector<4x384xf32>
    %188 = arith.mulf %186, %187 : vector<4x384xf32>
    %189 = arith.addf %183, %188 : vector<4x384xf32>
    %c0_71 = arith.constant 0 : index
    %c19 = arith.constant 19 : index
    %190 = vector.load %arg3[%c0_71, %c19] : memref<4x37xf32, #tpu.memory_space<vmem>>, vector<4x1xf32>
    %191 = vector.extract_strided_slice %171 {offsets = [3, 0], sizes = [1, 384], strides = [1, 1]} : vector<4x384xf32> to vector<1x384xf32>
    %192 = vector.broadcast %190 : vector<4x1xf32> to vector<4x384xf32>
    %193 = vector.broadcast %191 : vector<1x384xf32> to vector<4x384xf32>
    %194 = arith.mulf %192, %193 : vector<4x384xf32>
    %195 = arith.addf %189, %194 : vector<4x384xf32>
    %c0_72 = arith.constant 0 : index
    %c129_73 = arith.constant 129 : index
    %196 = vector.load %arg7[%c0_72, %c129_73] : memref<4x640xf32, #tpu.memory_space<vmem>>, vector<4x384xf32>
    %c0_74 = arith.constant 0 : index
    %c20 = arith.constant 20 : index
    %197 = vector.load %arg3[%c0_74, %c20] : memref<4x37xf32, #tpu.memory_space<vmem>>, vector<4x1xf32>
    %198 = vector.extract_strided_slice %196 {offsets = [0, 0], sizes = [1, 384], strides = [1, 1]} : vector<4x384xf32> to vector<1x384xf32>
    %199 = vector.broadcast %197 : vector<4x1xf32> to vector<4x384xf32>
    %200 = vector.broadcast %198 : vector<1x384xf32> to vector<4x384xf32>
    %201 = arith.mulf %199, %200 : vector<4x384xf32>
    %202 = arith.addf %195, %201 : vector<4x384xf32>
    %c0_75 = arith.constant 0 : index
    %c21 = arith.constant 21 : index
    %203 = vector.load %arg3[%c0_75, %c21] : memref<4x37xf32, #tpu.memory_space<vmem>>, vector<4x1xf32>
    %204 = vector.extract_strided_slice %196 {offsets = [1, 0], sizes = [1, 384], strides = [1, 1]} : vector<4x384xf32> to vector<1x384xf32>
    %205 = vector.broadcast %203 : vector<4x1xf32> to vector<4x384xf32>
    %206 = vector.broadcast %204 : vector<1x384xf32> to vector<4x384xf32>
    %207 = arith.mulf %205, %206 : vector<4x384xf32>
    %208 = arith.addf %202, %207 : vector<4x384xf32>
    %c0_76 = arith.constant 0 : index
    %c22 = arith.constant 22 : index
    %209 = vector.load %arg3[%c0_76, %c22] : memref<4x37xf32, #tpu.memory_space<vmem>>, vector<4x1xf32>
    %210 = vector.extract_strided_slice %196 {offsets = [2, 0], sizes = [1, 384], strides = [1, 1]} : vector<4x384xf32> to vector<1x384xf32>
    %211 = vector.broadcast %209 : vector<4x1xf32> to vector<4x384xf32>
    %212 = vector.broadcast %210 : vector<1x384xf32> to vector<4x384xf32>
    %213 = arith.mulf %211, %212 : vector<4x384xf32>
    %214 = arith.addf %208, %213 : vector<4x384xf32>
    %c0_77 = arith.constant 0 : index
    %c23 = arith.constant 23 : index
    %215 = vector.load %arg3[%c0_77, %c23] : memref<4x37xf32, #tpu.memory_space<vmem>>, vector<4x1xf32>
    %216 = vector.extract_strided_slice %196 {offsets = [3, 0], sizes = [1, 384], strides = [1, 1]} : vector<4x384xf32> to vector<1x384xf32>
    %217 = vector.broadcast %215 : vector<4x1xf32> to vector<4x384xf32>
    %218 = vector.broadcast %216 : vector<1x384xf32> to vector<4x384xf32>
    %219 = arith.mulf %217, %218 : vector<4x384xf32>
    %220 = arith.addf %214, %219 : vector<4x384xf32>
    %c0_78 = arith.constant 0 : index
    %c145_79 = arith.constant 145 : index
    %221 = vector.load %arg7[%c0_78, %c145_79] : memref<4x640xf32, #tpu.memory_space<vmem>>, vector<4x384xf32>
    %c0_80 = arith.constant 0 : index
    %c24 = arith.constant 24 : index
    %222 = vector.load %arg3[%c0_80, %c24] : memref<4x37xf32, #tpu.memory_space<vmem>>, vector<4x1xf32>
    %223 = vector.extract_strided_slice %221 {offsets = [0, 0], sizes = [1, 384], strides = [1, 1]} : vector<4x384xf32> to vector<1x384xf32>
    %224 = vector.broadcast %222 : vector<4x1xf32> to vector<4x384xf32>
    %225 = vector.broadcast %223 : vector<1x384xf32> to vector<4x384xf32>
    %226 = arith.mulf %224, %225 : vector<4x384xf32>
    %227 = arith.addf %220, %226 : vector<4x384xf32>
    %c0_81 = arith.constant 0 : index
    %c25 = arith.constant 25 : index
    %228 = vector.load %arg3[%c0_81, %c25] : memref<4x37xf32, #tpu.memory_space<vmem>>, vector<4x1xf32>
    %229 = vector.extract_strided_slice %221 {offsets = [1, 0], sizes = [1, 384], strides = [1, 1]} : vector<4x384xf32> to vector<1x384xf32>
    %230 = vector.broadcast %228 : vector<4x1xf32> to vector<4x384xf32>
    %231 = vector.broadcast %229 : vector<1x384xf32> to vector<4x384xf32>
    %232 = arith.mulf %230, %231 : vector<4x384xf32>
    %233 = arith.addf %227, %232 : vector<4x384xf32>
    %c0_82 = arith.constant 0 : index
    %c26 = arith.constant 26 : index
    %234 = vector.load %arg3[%c0_82, %c26] : memref<4x37xf32, #tpu.memory_space<vmem>>, vector<4x1xf32>
    %235 = vector.extract_strided_slice %221 {offsets = [2, 0], sizes = [1, 384], strides = [1, 1]} : vector<4x384xf32> to vector<1x384xf32>
    %236 = vector.broadcast %234 : vector<4x1xf32> to vector<4x384xf32>
    %237 = vector.broadcast %235 : vector<1x384xf32> to vector<4x384xf32>
    %238 = arith.mulf %236, %237 : vector<4x384xf32>
    %239 = arith.addf %233, %238 : vector<4x384xf32>
    %c0_83 = arith.constant 0 : index
    %c27 = arith.constant 27 : index
    %240 = vector.load %arg3[%c0_83, %c27] : memref<4x37xf32, #tpu.memory_space<vmem>>, vector<4x1xf32>
    %241 = vector.extract_strided_slice %221 {offsets = [3, 0], sizes = [1, 384], strides = [1, 1]} : vector<4x384xf32> to vector<1x384xf32>
    %242 = vector.broadcast %240 : vector<4x1xf32> to vector<4x384xf32>
    %243 = vector.broadcast %241 : vector<1x384xf32> to vector<4x384xf32>
    %244 = arith.mulf %242, %243 : vector<4x384xf32>
    %245 = arith.addf %239, %244 : vector<4x384xf32>
    %c0_84 = arith.constant 0 : index
    %c146_85 = arith.constant 146 : index
    %246 = vector.load %arg7[%c0_84, %c146_85] : memref<4x640xf32, #tpu.memory_space<vmem>>, vector<4x384xf32>
    %c0_86 = arith.constant 0 : index
    %c28 = arith.constant 28 : index
    %247 = vector.load %arg3[%c0_86, %c28] : memref<4x37xf32, #tpu.memory_space<vmem>>, vector<4x1xf32>
    %248 = vector.extract_strided_slice %246 {offsets = [0, 0], sizes = [1, 384], strides = [1, 1]} : vector<4x384xf32> to vector<1x384xf32>
    %249 = vector.broadcast %247 : vector<4x1xf32> to vector<4x384xf32>
    %250 = vector.broadcast %248 : vector<1x384xf32> to vector<4x384xf32>
    %251 = arith.mulf %249, %250 : vector<4x384xf32>
    %252 = arith.addf %245, %251 : vector<4x384xf32>
    %c0_87 = arith.constant 0 : index
    %c29 = arith.constant 29 : index
    %253 = vector.load %arg3[%c0_87, %c29] : memref<4x37xf32, #tpu.memory_space<vmem>>, vector<4x1xf32>
    %254 = vector.extract_strided_slice %246 {offsets = [1, 0], sizes = [1, 384], strides = [1, 1]} : vector<4x384xf32> to vector<1x384xf32>
    %255 = vector.broadcast %253 : vector<4x1xf32> to vector<4x384xf32>
    %256 = vector.broadcast %254 : vector<1x384xf32> to vector<4x384xf32>
    %257 = arith.mulf %255, %256 : vector<4x384xf32>
    %258 = arith.addf %252, %257 : vector<4x384xf32>
    %c0_88 = arith.constant 0 : index
    %c30 = arith.constant 30 : index
    %259 = vector.load %arg3[%c0_88, %c30] : memref<4x37xf32, #tpu.memory_space<vmem>>, vector<4x1xf32>
    %260 = vector.extract_strided_slice %246 {offsets = [2, 0], sizes = [1, 384], strides = [1, 1]} : vector<4x384xf32> to vector<1x384xf32>
    %261 = vector.broadcast %259 : vector<4x1xf32> to vector<4x384xf32>
    %262 = vector.broadcast %260 : vector<1x384xf32> to vector<4x384xf32>
    %263 = arith.mulf %261, %262 : vector<4x384xf32>
    %264 = arith.addf %258, %263 : vector<4x384xf32>
    %c0_89 = arith.constant 0 : index
    %c31 = arith.constant 31 : index
    %265 = vector.load %arg3[%c0_89, %c31] : memref<4x37xf32, #tpu.memory_space<vmem>>, vector<4x1xf32>
    %266 = vector.extract_strided_slice %246 {offsets = [3, 0], sizes = [1, 384], strides = [1, 1]} : vector<4x384xf32> to vector<1x384xf32>
    %267 = vector.broadcast %265 : vector<4x1xf32> to vector<4x384xf32>
    %268 = vector.broadcast %266 : vector<1x384xf32> to vector<4x384xf32>
    %269 = arith.mulf %267, %268 : vector<4x384xf32>
    %270 = arith.addf %264, %269 : vector<4x384xf32>
    %c0_90 = arith.constant 0 : index
    %c147_91 = arith.constant 147 : index
    %271 = vector.load %arg7[%c0_90, %c147_91] : memref<4x640xf32, #tpu.memory_space<vmem>>, vector<4x384xf32>
    %c0_92 = arith.constant 0 : index
    %c32 = arith.constant 32 : index
    %272 = vector.load %arg3[%c0_92, %c32] : memref<4x37xf32, #tpu.memory_space<vmem>>, vector<4x1xf32>
    %273 = vector.extract_strided_slice %271 {offsets = [0, 0], sizes = [1, 384], strides = [1, 1]} : vector<4x384xf32> to vector<1x384xf32>
    %274 = vector.broadcast %272 : vector<4x1xf32> to vector<4x384xf32>
    %275 = vector.broadcast %273 : vector<1x384xf32> to vector<4x384xf32>
    %276 = arith.mulf %274, %275 : vector<4x384xf32>
    %277 = arith.addf %270, %276 : vector<4x384xf32>
    %c0_93 = arith.constant 0 : index
    %c33 = arith.constant 33 : index
    %278 = vector.load %arg3[%c0_93, %c33] : memref<4x37xf32, #tpu.memory_space<vmem>>, vector<4x1xf32>
    %279 = vector.extract_strided_slice %271 {offsets = [1, 0], sizes = [1, 384], strides = [1, 1]} : vector<4x384xf32> to vector<1x384xf32>
    %280 = vector.broadcast %278 : vector<4x1xf32> to vector<4x384xf32>
    %281 = vector.broadcast %279 : vector<1x384xf32> to vector<4x384xf32>
    %282 = arith.mulf %280, %281 : vector<4x384xf32>
    %283 = arith.addf %277, %282 : vector<4x384xf32>
    %c0_94 = arith.constant 0 : index
    %c34 = arith.constant 34 : index
    %284 = vector.load %arg3[%c0_94, %c34] : memref<4x37xf32, #tpu.memory_space<vmem>>, vector<4x1xf32>
    %285 = vector.extract_strided_slice %271 {offsets = [2, 0], sizes = [1, 384], strides = [1, 1]} : vector<4x384xf32> to vector<1x384xf32>
    %286 = vector.broadcast %284 : vector<4x1xf32> to vector<4x384xf32>
    %287 = vector.broadcast %285 : vector<1x384xf32> to vector<4x384xf32>
    %288 = arith.mulf %286, %287 : vector<4x384xf32>
    %289 = arith.addf %283, %288 : vector<4x384xf32>
    %c0_95 = arith.constant 0 : index
    %c35 = arith.constant 35 : index
    %290 = vector.load %arg3[%c0_95, %c35] : memref<4x37xf32, #tpu.memory_space<vmem>>, vector<4x1xf32>
    %291 = vector.extract_strided_slice %271 {offsets = [3, 0], sizes = [1, 384], strides = [1, 1]} : vector<4x384xf32> to vector<1x384xf32>
    %292 = vector.broadcast %290 : vector<4x1xf32> to vector<4x384xf32>
    %293 = vector.broadcast %291 : vector<1x384xf32> to vector<4x384xf32>
    %294 = arith.mulf %292, %293 : vector<4x384xf32>
    %295 = arith.addf %289, %294 : vector<4x384xf32>
    %cst_96 = arith.constant 0.000000e+00 : f32
    %296 = vector.broadcast %cst_96 : f32 to vector<4x384xf32>
    %297 = arith.maximumf %295, %296 : vector<4x384xf32>
    %298 = vector.broadcast %5 : vector<1x384xf32> to vector<4x384xf32>
    %299 = arith.mulf %297, %298 : vector<4x384xf32>
    %c0_97 = arith.constant 0 : index
    %c128_98 = arith.constant 128 : index
    %300 = vector.load %arg7[%c0_97, %c128_98] : memref<4x640xf32, #tpu.memory_space<vmem>>, vector<4x384xf32>
    tpu.vector_store %arg7[%c0_97, %c128_98], %299 {strides = array<i32>} : memref<4x640xf32, #tpu.memory_space<vmem>>, vector<4x384xf32>,
    %c0_99 = arith.constant 0 : index
    %c36_100 = arith.constant 36 : index
    %301 = vector.load %arg4[%c0_99, %c36_100] : memref<3x37xf32, #tpu.memory_space<vmem>>, vector<3x1xf32>
    %302 = vector.shape_cast %301 : vector<3x1xf32> to vector<3x1xf32>
    %303 = vector.broadcast %302 : vector<3x1xf32> to vector<3x384xf32>
    %c0_101 = arith.constant 0 : index
    %c109_102 = arith.constant 109 : index
    %304 = vector.load %arg7[%c0_101, %c109_102] : memref<4x640xf32, #tpu.memory_space<vmem>>, vector<4x384xf32>
    %c0_103 = arith.constant 0 : index
    %c0_104 = arith.constant 0 : index
    %305 = vector.load %arg4[%c0_103, %c0_104] : memref<3x37xf32, #tpu.memory_space<vmem>>, vector<3x1xf32>
    %306 = vector.extract_strided_slice %304 {offsets = [0, 0], sizes = [1, 384], strides = [1, 1]} : vector<4x384xf32> to vector<1x384xf32>
    %307 = vector.broadcast %305 : vector<3x1xf32> to vector<3x384xf32>
    %308 = vector.broadcast %306 : vector<1x384xf32> to vector<3x384xf32>
    %309 = arith.mulf %307, %308 : vector<3x384xf32>
    %310 = arith.addf %303, %309 : vector<3x384xf32>
    %c0_105 = arith.constant 0 : index
    %c1_106 = arith.constant 1 : index
    %311 = vector.load %arg4[%c0_105, %c1_106] : memref<3x37xf32, #tpu.memory_space<vmem>>, vector<3x1xf32>
    %312 = vector.extract_strided_slice %304 {offsets = [1, 0], sizes = [1, 384], strides = [1, 1]} : vector<4x384xf32> to vector<1x384xf32>
    %313 = vector.broadcast %311 : vector<3x1xf32> to vector<3x384xf32>
    %314 = vector.broadcast %312 : vector<1x384xf32> to vector<3x384xf32>
    %315 = arith.mulf %313, %314 : vector<3x384xf32>
    %316 = arith.addf %310, %315 : vector<3x384xf32>
    %c0_107 = arith.constant 0 : index
    %c2_108 = arith.constant 2 : index
    %317 = vector.load %arg4[%c0_107, %c2_108] : memref<3x37xf32, #tpu.memory_space<vmem>>, vector<3x1xf32>
    %318 = vector.extract_strided_slice %304 {offsets = [2, 0], sizes = [1, 384], strides = [1, 1]} : vector<4x384xf32> to vector<1x384xf32>
    %319 = vector.broadcast %317 : vector<3x1xf32> to vector<3x384xf32>
    %320 = vector.broadcast %318 : vector<1x384xf32> to vector<3x384xf32>
    %321 = arith.mulf %319, %320 : vector<3x384xf32>
    %322 = arith.addf %316, %321 : vector<3x384xf32>
    %c0_109 = arith.constant 0 : index
    %c3_110 = arith.constant 3 : index
    %323 = vector.load %arg4[%c0_109, %c3_110] : memref<3x37xf32, #tpu.memory_space<vmem>>, vector<3x1xf32>
    %324 = vector.extract_strided_slice %304 {offsets = [3, 0], sizes = [1, 384], strides = [1, 1]} : vector<4x384xf32> to vector<1x384xf32>
    %325 = vector.broadcast %323 : vector<3x1xf32> to vector<3x384xf32>
    %326 = vector.broadcast %324 : vector<1x384xf32> to vector<3x384xf32>
    %327 = arith.mulf %325, %326 : vector<3x384xf32>
    %328 = arith.addf %322, %327 : vector<3x384xf32>
    %c0_111 = arith.constant 0 : index
    %c110_112 = arith.constant 110 : index
    %329 = vector.load %arg7[%c0_111, %c110_112] : memref<4x640xf32, #tpu.memory_space<vmem>>, vector<4x384xf32>
    %c0_113 = arith.constant 0 : index
    %c4_114 = arith.constant 4 : index
    %330 = vector.load %arg4[%c0_113, %c4_114] : memref<3x37xf32, #tpu.memory_space<vmem>>, vector<3x1xf32>
    %331 = vector.extract_strided_slice %329 {offsets = [0, 0], sizes = [1, 384], strides = [1, 1]} : vector<4x384xf32> to vector<1x384xf32>
    %332 = vector.broadcast %330 : vector<3x1xf32> to vector<3x384xf32>
    %333 = vector.broadcast %331 : vector<1x384xf32> to vector<3x384xf32>
    %334 = arith.mulf %332, %333 : vector<3x384xf32>
    %335 = arith.addf %328, %334 : vector<3x384xf32>
    %c0_115 = arith.constant 0 : index
    %c5_116 = arith.constant 5 : index
    %336 = vector.load %arg4[%c0_115, %c5_116] : memref<3x37xf32, #tpu.memory_space<vmem>>, vector<3x1xf32>
    %337 = vector.extract_strided_slice %329 {offsets = [1, 0], sizes = [1, 384], strides = [1, 1]} : vector<4x384xf32> to vector<1x384xf32>
    %338 = vector.broadcast %336 : vector<3x1xf32> to vector<3x384xf32>
    %339 = vector.broadcast %337 : vector<1x384xf32> to vector<3x384xf32>
    %340 = arith.mulf %338, %339 : vector<3x384xf32>
    %341 = arith.addf %335, %340 : vector<3x384xf32>
    %c0_117 = arith.constant 0 : index
    %c6_118 = arith.constant 6 : index
    %342 = vector.load %arg4[%c0_117, %c6_118] : memref<3x37xf32, #tpu.memory_space<vmem>>, vector<3x1xf32>
    %343 = vector.extract_strided_slice %329 {offsets = [2, 0], sizes = [1, 384], strides = [1, 1]} : vector<4x384xf32> to vector<1x384xf32>
    %344 = vector.broadcast %342 : vector<3x1xf32> to vector<3x384xf32>
    %345 = vector.broadcast %343 : vector<1x384xf32> to vector<3x384xf32>
    %346 = arith.mulf %344, %345 : vector<3x384xf32>
    %347 = arith.addf %341, %346 : vector<3x384xf32>
    %c0_119 = arith.constant 0 : index
    %c7_120 = arith.constant 7 : index
    %348 = vector.load %arg4[%c0_119, %c7_120] : memref<3x37xf32, #tpu.memory_space<vmem>>, vector<3x1xf32>
    %349 = vector.extract_strided_slice %329 {offsets = [3, 0], sizes = [1, 384], strides = [1, 1]} : vector<4x384xf32> to vector<1x384xf32>
    %350 = vector.broadcast %348 : vector<3x1xf32> to vector<3x384xf32>
    %351 = vector.broadcast %349 : vector<1x384xf32> to vector<3x384xf32>
    %352 = arith.mulf %350, %351 : vector<3x384xf32>
    %353 = arith.addf %347, %352 : vector<3x384xf32>
    %c0_121 = arith.constant 0 : index
    %c111_122 = arith.constant 111 : index
    %354 = vector.load %arg7[%c0_121, %c111_122] : memref<4x640xf32, #tpu.memory_space<vmem>>, vector<4x384xf32>
    %c0_123 = arith.constant 0 : index
    %c8_124 = arith.constant 8 : index
    %355 = vector.load %arg4[%c0_123, %c8_124] : memref<3x37xf32, #tpu.memory_space<vmem>>, vector<3x1xf32>
    %356 = vector.extract_strided_slice %354 {offsets = [0, 0], sizes = [1, 384], strides = [1, 1]} : vector<4x384xf32> to vector<1x384xf32>
    %357 = vector.broadcast %355 : vector<3x1xf32> to vector<3x384xf32>
    %358 = vector.broadcast %356 : vector<1x384xf32> to vector<3x384xf32>
    %359 = arith.mulf %357, %358 : vector<3x384xf32>
    %360 = arith.addf %353, %359 : vector<3x384xf32>
    %c0_125 = arith.constant 0 : index
    %c9_126 = arith.constant 9 : index
    %361 = vector.load %arg4[%c0_125, %c9_126] : memref<3x37xf32, #tpu.memory_space<vmem>>, vector<3x1xf32>
    %362 = vector.extract_strided_slice %354 {offsets = [1, 0], sizes = [1, 384], strides = [1, 1]} : vector<4x384xf32> to vector<1x384xf32>
    %363 = vector.broadcast %361 : vector<3x1xf32> to vector<3x384xf32>
    %364 = vector.broadcast %362 : vector<1x384xf32> to vector<3x384xf32>
    %365 = arith.mulf %363, %364 : vector<3x384xf32>
    %366 = arith.addf %360, %365 : vector<3x384xf32>
    %c0_127 = arith.constant 0 : index
    %c10_128 = arith.constant 10 : index
    %367 = vector.load %arg4[%c0_127, %c10_128] : memref<3x37xf32, #tpu.memory_space<vmem>>, vector<3x1xf32>
    %368 = vector.extract_strided_slice %354 {offsets = [2, 0], sizes = [1, 384], strides = [1, 1]} : vector<4x384xf32> to vector<1x384xf32>
    %369 = vector.broadcast %367 : vector<3x1xf32> to vector<3x384xf32>
    %370 = vector.broadcast %368 : vector<1x384xf32> to vector<3x384xf32>
    %371 = arith.mulf %369, %370 : vector<3x384xf32>
    %372 = arith.addf %366, %371 : vector<3x384xf32>
    %c0_129 = arith.constant 0 : index
    %c11_130 = arith.constant 11 : index
    %373 = vector.load %arg4[%c0_129, %c11_130] : memref<3x37xf32, #tpu.memory_space<vmem>>, vector<3x1xf32>
    %374 = vector.extract_strided_slice %354 {offsets = [3, 0], sizes = [1, 384], strides = [1, 1]} : vector<4x384xf32> to vector<1x384xf32>
    %375 = vector.broadcast %373 : vector<3x1xf32> to vector<3x384xf32>
    %376 = vector.broadcast %374 : vector<1x384xf32> to vector<3x384xf32>
    %377 = arith.mulf %375, %376 : vector<3x384xf32>
    %378 = arith.addf %372, %377 : vector<3x384xf32>
    %c0_131 = arith.constant 0 : index
    %c127_132 = arith.constant 127 : index
    %379 = vector.load %arg7[%c0_131, %c127_132] : memref<4x640xf32, #tpu.memory_space<vmem>>, vector<4x384xf32>
    %c0_133 = arith.constant 0 : index
    %c12_134 = arith.constant 12 : index
    %380 = vector.load %arg4[%c0_133, %c12_134] : memref<3x37xf32, #tpu.memory_space<vmem>>, vector<3x1xf32>
    %381 = vector.extract_strided_slice %379 {offsets = [0, 0], sizes = [1, 384], strides = [1, 1]} : vector<4x384xf32> to vector<1x384xf32>
    %382 = vector.broadcast %380 : vector<3x1xf32> to vector<3x384xf32>
    %383 = vector.broadcast %381 : vector<1x384xf32> to vector<3x384xf32>
    %384 = arith.mulf %382, %383 : vector<3x384xf32>
    %385 = arith.addf %378, %384 : vector<3x384xf32>
    %c0_135 = arith.constant 0 : index
    %c13_136 = arith.constant 13 : index
    %386 = vector.load %arg4[%c0_135, %c13_136] : memref<3x37xf32, #tpu.memory_space<vmem>>, vector<3x1xf32>
    %387 = vector.extract_strided_slice %379 {offsets = [1, 0], sizes = [1, 384], strides = [1, 1]} : vector<4x384xf32> to vector<1x384xf32>
    %388 = vector.broadcast %386 : vector<3x1xf32> to vector<3x384xf32>
    %389 = vector.broadcast %387 : vector<1x384xf32> to vector<3x384xf32>
    %390 = arith.mulf %388, %389 : vector<3x384xf32>
    %391 = arith.addf %385, %390 : vector<3x384xf32>
    %c0_137 = arith.constant 0 : index
    %c14_138 = arith.constant 14 : index
    %392 = vector.load %arg4[%c0_137, %c14_138] : memref<3x37xf32, #tpu.memory_space<vmem>>, vector<3x1xf32>
    %393 = vector.extract_strided_slice %379 {offsets = [2, 0], sizes = [1, 384], strides = [1, 1]} : vector<4x384xf32> to vector<1x384xf32>
    %394 = vector.broadcast %392 : vector<3x1xf32> to vector<3x384xf32>
    %395 = vector.broadcast %393 : vector<1x384xf32> to vector<3x384xf32>
    %396 = arith.mulf %394, %395 : vector<3x384xf32>
    %397 = arith.addf %391, %396 : vector<3x384xf32>
    %c0_139 = arith.constant 0 : index
    %c15_140 = arith.constant 15 : index
    %398 = vector.load %arg4[%c0_139, %c15_140] : memref<3x37xf32, #tpu.memory_space<vmem>>, vector<3x1xf32>
    %399 = vector.extract_strided_slice %379 {offsets = [3, 0], sizes = [1, 384], strides = [1, 1]} : vector<4x384xf32> to vector<1x384xf32>
    %400 = vector.broadcast %398 : vector<3x1xf32> to vector<3x384xf32>
    %401 = vector.broadcast %399 : vector<1x384xf32> to vector<3x384xf32>
    %402 = arith.mulf %400, %401 : vector<3x384xf32>
    %403 = arith.addf %397, %402 : vector<3x384xf32>
    %c0_141 = arith.constant 0 : index
    %c128_142 = arith.constant 128 : index
    %404 = vector.load %arg7[%c0_141, %c128_142] : memref<4x640xf32, #tpu.memory_space<vmem>>, vector<4x384xf32>
    %c0_143 = arith.constant 0 : index
    %c16_144 = arith.constant 16 : index
    %405 = vector.load %arg4[%c0_143, %c16_144] : memref<3x37xf32, #tpu.memory_space<vmem>>, vector<3x1xf32>
    %406 = vector.extract_strided_slice %404 {offsets = [0, 0], sizes = [1, 384], strides = [1, 1]} : vector<4x384xf32> to vector<1x384xf32>
    %407 = vector.broadcast %405 : vector<3x1xf32> to vector<3x384xf32>
    %408 = vector.broadcast %406 : vector<1x384xf32> to vector<3x384xf32>
    %409 = arith.mulf %407, %408 : vector<3x384xf32>
    %410 = arith.addf %403, %409 : vector<3x384xf32>
    %c0_145 = arith.constant 0 : index
    %c17_146 = arith.constant 17 : index
    %411 = vector.load %arg4[%c0_145, %c17_146] : memref<3x37xf32, #tpu.memory_space<vmem>>, vector<3x1xf32>
    %412 = vector.extract_strided_slice %404 {offsets = [1, 0], sizes = [1, 384], strides = [1, 1]} : vector<4x384xf32> to vector<1x384xf32>
    %413 = vector.broadcast %411 : vector<3x1xf32> to vector<3x384xf32>
    %414 = vector.broadcast %412 : vector<1x384xf32> to vector<3x384xf32>
    %415 = arith.mulf %413, %414 : vector<3x384xf32>
    %416 = arith.addf %410, %415 : vector<3x384xf32>
    %c0_147 = arith.constant 0 : index
    %c18_148 = arith.constant 18 : index
    %417 = vector.load %arg4[%c0_147, %c18_148] : memref<3x37xf32, #tpu.memory_space<vmem>>, vector<3x1xf32>
    %418 = vector.extract_strided_slice %404 {offsets = [2, 0], sizes = [1, 384], strides = [1, 1]} : vector<4x384xf32> to vector<1x384xf32>
    %419 = vector.broadcast %417 : vector<3x1xf32> to vector<3x384xf32>
    %420 = vector.broadcast %418 : vector<1x384xf32> to vector<3x384xf32>
    %421 = arith.mulf %419, %420 : vector<3x384xf32>
    %422 = arith.addf %416, %421 : vector<3x384xf32>
    %c0_149 = arith.constant 0 : index
    %c19_150 = arith.constant 19 : index
    %423 = vector.load %arg4[%c0_149, %c19_150] : memref<3x37xf32, #tpu.memory_space<vmem>>, vector<3x1xf32>
    %424 = vector.extract_strided_slice %404 {offsets = [3, 0], sizes = [1, 384], strides = [1, 1]} : vector<4x384xf32> to vector<1x384xf32>
    %425 = vector.broadcast %423 : vector<3x1xf32> to vector<3x384xf32>
    %426 = vector.broadcast %424 : vector<1x384xf32> to vector<3x384xf32>
    %427 = arith.mulf %425, %426 : vector<3x384xf32>
    %428 = arith.addf %422, %427 : vector<3x384xf32>
    %c0_151 = arith.constant 0 : index
    %c129_152 = arith.constant 129 : index
    %429 = vector.load %arg7[%c0_151, %c129_152] : memref<4x640xf32, #tpu.memory_space<vmem>>, vector<4x384xf32>
    %c0_153 = arith.constant 0 : index
    %c20_154 = arith.constant 20 : index
    %430 = vector.load %arg4[%c0_153, %c20_154] : memref<3x37xf32, #tpu.memory_space<vmem>>, vector<3x1xf32>
    %431 = vector.extract_strided_slice %429 {offsets = [0, 0], sizes = [1, 384], strides = [1, 1]} : vector<4x384xf32> to vector<1x384xf32>
    %432 = vector.broadcast %430 : vector<3x1xf32> to vector<3x384xf32>
    %433 = vector.broadcast %431 : vector<1x384xf32> to vector<3x384xf32>
    %434 = arith.mulf %432, %433 : vector<3x384xf32>
    %435 = arith.addf %428, %434 : vector<3x384xf32>
    %c0_155 = arith.constant 0 : index
    %c21_156 = arith.constant 21 : index
    %436 = vector.load %arg4[%c0_155, %c21_156] : memref<3x37xf32, #tpu.memory_space<vmem>>, vector<3x1xf32>
    %437 = vector.extract_strided_slice %429 {offsets = [1, 0], sizes = [1, 384], strides = [1, 1]} : vector<4x384xf32> to vector<1x384xf32>
    %438 = vector.broadcast %436 : vector<3x1xf32> to vector<3x384xf32>
    %439 = vector.broadcast %437 : vector<1x384xf32> to vector<3x384xf32>
    %440 = arith.mulf %438, %439 : vector<3x384xf32>
    %441 = arith.addf %435, %440 : vector<3x384xf32>
    %c0_157 = arith.constant 0 : index
    %c22_158 = arith.constant 22 : index
    %442 = vector.load %arg4[%c0_157, %c22_158] : memref<3x37xf32, #tpu.memory_space<vmem>>, vector<3x1xf32>
    %443 = vector.extract_strided_slice %429 {offsets = [2, 0], sizes = [1, 384], strides = [1, 1]} : vector<4x384xf32> to vector<1x384xf32>
    %444 = vector.broadcast %442 : vector<3x1xf32> to vector<3x384xf32>
    %445 = vector.broadcast %443 : vector<1x384xf32> to vector<3x384xf32>
    %446 = arith.mulf %444, %445 : vector<3x384xf32>
    %447 = arith.addf %441, %446 : vector<3x384xf32>
    %c0_159 = arith.constant 0 : index
    %c23_160 = arith.constant 23 : index
    %448 = vector.load %arg4[%c0_159, %c23_160] : memref<3x37xf32, #tpu.memory_space<vmem>>, vector<3x1xf32>
    %449 = vector.extract_strided_slice %429 {offsets = [3, 0], sizes = [1, 384], strides = [1, 1]} : vector<4x384xf32> to vector<1x384xf32>
    %450 = vector.broadcast %448 : vector<3x1xf32> to vector<3x384xf32>
    %451 = vector.broadcast %449 : vector<1x384xf32> to vector<3x384xf32>
    %452 = arith.mulf %450, %451 : vector<3x384xf32>
    %453 = arith.addf %447, %452 : vector<3x384xf32>
    %c0_161 = arith.constant 0 : index
    %c145_162 = arith.constant 145 : index
    %454 = vector.load %arg7[%c0_161, %c145_162] : memref<4x640xf32, #tpu.memory_space<vmem>>, vector<4x384xf32>
    %c0_163 = arith.constant 0 : index
    %c24_164 = arith.constant 24 : index
    %455 = vector.load %arg4[%c0_163, %c24_164] : memref<3x37xf32, #tpu.memory_space<vmem>>, vector<3x1xf32>
    %456 = vector.extract_strided_slice %454 {offsets = [0, 0], sizes = [1, 384], strides = [1, 1]} : vector<4x384xf32> to vector<1x384xf32>
    %457 = vector.broadcast %455 : vector<3x1xf32> to vector<3x384xf32>
    %458 = vector.broadcast %456 : vector<1x384xf32> to vector<3x384xf32>
    %459 = arith.mulf %457, %458 : vector<3x384xf32>
    %460 = arith.addf %453, %459 : vector<3x384xf32>
    %c0_165 = arith.constant 0 : index
    %c25_166 = arith.constant 25 : index
    %461 = vector.load %arg4[%c0_165, %c25_166] : memref<3x37xf32, #tpu.memory_space<vmem>>, vector<3x1xf32>
    %462 = vector.extract_strided_slice %454 {offsets = [1, 0], sizes = [1, 384], strides = [1, 1]} : vector<4x384xf32> to vector<1x384xf32>
    %463 = vector.broadcast %461 : vector<3x1xf32> to vector<3x384xf32>
    %464 = vector.broadcast %462 : vector<1x384xf32> to vector<3x384xf32>
    %465 = arith.mulf %463, %464 : vector<3x384xf32>
    %466 = arith.addf %460, %465 : vector<3x384xf32>
    %c0_167 = arith.constant 0 : index
    %c26_168 = arith.constant 26 : index
    %467 = vector.load %arg4[%c0_167, %c26_168] : memref<3x37xf32, #tpu.memory_space<vmem>>, vector<3x1xf32>
    %468 = vector.extract_strided_slice %454 {offsets = [2, 0], sizes = [1, 384], strides = [1, 1]} : vector<4x384xf32> to vector<1x384xf32>
    %469 = vector.broadcast %467 : vector<3x1xf32> to vector<3x384xf32>
    %470 = vector.broadcast %468 : vector<1x384xf32> to vector<3x384xf32>
    %471 = arith.mulf %469, %470 : vector<3x384xf32>
    %472 = arith.addf %466, %471 : vector<3x384xf32>
    %c0_169 = arith.constant 0 : index
    %c27_170 = arith.constant 27 : index
    %473 = vector.load %arg4[%c0_169, %c27_170] : memref<3x37xf32, #tpu.memory_space<vmem>>, vector<3x1xf32>
    %474 = vector.extract_strided_slice %454 {offsets = [3, 0], sizes = [1, 384], strides = [1, 1]} : vector<4x384xf32> to vector<1x384xf32>
    %475 = vector.broadcast %473 : vector<3x1xf32> to vector<3x384xf32>
    %476 = vector.broadcast %474 : vector<1x384xf32> to vector<3x384xf32>
    %477 = arith.mulf %475, %476 : vector<3x384xf32>
    %478 = arith.addf %472, %477 : vector<3x384xf32>
    %c0_171 = arith.constant 0 : index
    %c146_172 = arith.constant 146 : index
    %479 = vector.load %arg7[%c0_171, %c146_172] : memref<4x640xf32, #tpu.memory_space<vmem>>, vector<4x384xf32>
    %c0_173 = arith.constant 0 : index
    %c28_174 = arith.constant 28 : index
    %480 = vector.load %arg4[%c0_173, %c28_174] : memref<3x37xf32, #tpu.memory_space<vmem>>, vector<3x1xf32>
    %481 = vector.extract_strided_slice %479 {offsets = [0, 0], sizes = [1, 384], strides = [1, 1]} : vector<4x384xf32> to vector<1x384xf32>
    %482 = vector.broadcast %480 : vector<3x1xf32> to vector<3x384xf32>
    %483 = vector.broadcast %481 : vector<1x384xf32> to vector<3x384xf32>
    %484 = arith.mulf %482, %483 : vector<3x384xf32>
    %485 = arith.addf %478, %484 : vector<3x384xf32>
    %c0_175 = arith.constant 0 : index
    %c29_176 = arith.constant 29 : index
    %486 = vector.load %arg4[%c0_175, %c29_176] : memref<3x37xf32, #tpu.memory_space<vmem>>, vector<3x1xf32>
    %487 = vector.extract_strided_slice %479 {offsets = [1, 0], sizes = [1, 384], strides = [1, 1]} : vector<4x384xf32> to vector<1x384xf32>
    %488 = vector.broadcast %486 : vector<3x1xf32> to vector<3x384xf32>
    %489 = vector.broadcast %487 : vector<1x384xf32> to vector<3x384xf32>
    %490 = arith.mulf %488, %489 : vector<3x384xf32>
    %491 = arith.addf %485, %490 : vector<3x384xf32>
    %c0_177 = arith.constant 0 : index
    %c30_178 = arith.constant 30 : index
    %492 = vector.load %arg4[%c0_177, %c30_178] : memref<3x37xf32, #tpu.memory_space<vmem>>, vector<3x1xf32>
    %493 = vector.extract_strided_slice %479 {offsets = [2, 0], sizes = [1, 384], strides = [1, 1]} : vector<4x384xf32> to vector<1x384xf32>
    %494 = vector.broadcast %492 : vector<3x1xf32> to vector<3x384xf32>
    %495 = vector.broadcast %493 : vector<1x384xf32> to vector<3x384xf32>
    %496 = arith.mulf %494, %495 : vector<3x384xf32>
    %497 = arith.addf %491, %496 : vector<3x384xf32>
    %c0_179 = arith.constant 0 : index
    %c31_180 = arith.constant 31 : index
    %498 = vector.load %arg4[%c0_179, %c31_180] : memref<3x37xf32, #tpu.memory_space<vmem>>, vector<3x1xf32>
    %499 = vector.extract_strided_slice %479 {offsets = [3, 0], sizes = [1, 384], strides = [1, 1]} : vector<4x384xf32> to vector<1x384xf32>
    %500 = vector.broadcast %498 : vector<3x1xf32> to vector<3x384xf32>
    %501 = vector.broadcast %499 : vector<1x384xf32> to vector<3x384xf32>
    %502 = arith.mulf %500, %501 : vector<3x384xf32>
    %503 = arith.addf %497, %502 : vector<3x384xf32>
    %c0_181 = arith.constant 0 : index
    %c147_182 = arith.constant 147 : index
    %504 = vector.load %arg7[%c0_181, %c147_182] : memref<4x640xf32, #tpu.memory_space<vmem>>, vector<4x384xf32>
    %c0_183 = arith.constant 0 : index
    %c32_184 = arith.constant 32 : index
    %505 = vector.load %arg4[%c0_183, %c32_184] : memref<3x37xf32, #tpu.memory_space<vmem>>, vector<3x1xf32>
    %506 = vector.extract_strided_slice %504 {offsets = [0, 0], sizes = [1, 384], strides = [1, 1]} : vector<4x384xf32> to vector<1x384xf32>
    %507 = vector.broadcast %505 : vector<3x1xf32> to vector<3x384xf32>
    %508 = vector.broadcast %506 : vector<1x384xf32> to vector<3x384xf32>
    %509 = arith.mulf %507, %508 : vector<3x384xf32>
    %510 = arith.addf %503, %509 : vector<3x384xf32>
    %c0_185 = arith.constant 0 : index
    %c33_186 = arith.constant 33 : index
    %511 = vector.load %arg4[%c0_185, %c33_186] : memref<3x37xf32, #tpu.memory_space<vmem>>, vector<3x1xf32>
    %512 = vector.extract_strided_slice %504 {offsets = [1, 0], sizes = [1, 384], strides = [1, 1]} : vector<4x384xf32> to vector<1x384xf32>
    %513 = vector.broadcast %511 : vector<3x1xf32> to vector<3x384xf32>
    %514 = vector.broadcast %512 : vector<1x384xf32> to vector<3x384xf32>
    %515 = arith.mulf %513, %514 : vector<3x384xf32>
    %516 = arith.addf %510, %515 : vector<3x384xf32>
    %c0_187 = arith.constant 0 : index
    %c34_188 = arith.constant 34 : index
    %517 = vector.load %arg4[%c0_187, %c34_188] : memref<3x37xf32, #tpu.memory_space<vmem>>, vector<3x1xf32>
    %518 = vector.extract_strided_slice %504 {offsets = [2, 0], sizes = [1, 384], strides = [1, 1]} : vector<4x384xf32> to vector<1x384xf32>
    %519 = vector.broadcast %517 : vector<3x1xf32> to vector<3x384xf32>
    %520 = vector.broadcast %518 : vector<1x384xf32> to vector<3x384xf32>
    %521 = arith.mulf %519, %520 : vector<3x384xf32>
    %522 = arith.addf %516, %521 : vector<3x384xf32>
    %c0_189 = arith.constant 0 : index
    %c35_190 = arith.constant 35 : index
    %523 = vector.load %arg4[%c0_189, %c35_190] : memref<3x37xf32, #tpu.memory_space<vmem>>, vector<3x1xf32>
    %524 = vector.extract_strided_slice %504 {offsets = [3, 0], sizes = [1, 384], strides = [1, 1]} : vector<4x384xf32> to vector<1x384xf32>
    %525 = vector.broadcast %523 : vector<3x1xf32> to vector<3x384xf32>
    %526 = vector.broadcast %524 : vector<1x384xf32> to vector<3x384xf32>
    %527 = arith.mulf %525, %526 : vector<3x384xf32>
    %528 = arith.addf %522, %527 : vector<3x384xf32>
    %529 = vector.shape_cast %528 : vector<3x384xf32> to vector<1x3x384xf32>
    %c0_191 = arith.constant 0 : index
    %c0_192 = arith.constant 0 : index
    %c0_193 = arith.constant 0 : index
    %530 = vector.load %arg6[%c0_191, %c0_192, %c0_193] : memref<1x3x384xf32, #tpu.memory_space<vmem>>, vector<1x3x384xf32>
    tpu.vector_store %arg6[%c0_191, %c0_192, %c0_193], %529 {strides = array<i32>} : memref<1x3x384xf32, #tpu.memory_space<vmem>>, vector<1x3x384xf32>,
    return
  }
  func.func @transform_0(%arg0: i32) -> (i32, i32) {
    %c0_i32 = arith.constant 0 : i32
    %c0_i32_0 = arith.constant 0 : i32
    %c0_i32_1 = arith.constant 0 : i32
    return %c0_i32, %c0_i32_0 : i32, i32
  }
  func.func @transform_1(%arg0: i32) -> (i32, i32) {
    %c0_i32 = arith.constant 0 : i32
    %c0_i32_0 = arith.constant 0 : i32
    %c0_i32_1 = arith.constant 0 : i32
    return %c0_i32, %c0_i32_0 : i32, i32
  }
  func.func @transform_2(%arg0: i32) -> (i32, i32) {
    %c0_i32 = arith.constant 0 : i32
    %c0_i32_0 = arith.constant 0 : i32
    %c0_i32_1 = arith.constant 0 : i32
    return %c0_i32, %c0_i32_0 : i32, i32
  }
  func.func @transform_3(%arg0: i32) -> (i32, i32) {
    %c0_i32 = arith.constant 0 : i32
    %c0_i32_0 = arith.constant 0 : i32
    %c0_i32_1 = arith.constant 0 : i32
    return %c0_i32, %c0_i32_0 : i32, i32
  }
  func.func @transform_4(%arg0: i32) -> (i32, i32, i32) {
    %c0_i32 = arith.constant 0 : i32
    %c0_i32_0 = arith.constant 0 : i32
    %c0_i32_1 = arith.constant 0 : i32
    return %arg0, %c0_i32, %c0_i32_0 : i32, i32, i32
  }
  func.func @transform_5(%arg0: i32) -> (i32, i32, i32) {
    %c0_i32 = arith.constant 0 : i32
    %c0_i32_0 = arith.constant 0 : i32
    %c0_i32_1 = arith.constant 0 : i32
    return %arg0, %c0_i32, %c0_i32_0 : i32, i32, i32
  }
}

</mosaic_0001>

<llo_original>
// kernel: basenet_forward.1
$region0: #{basenet_forward.1}
  #allocation0 [shape = 'u32[]', space=smem, size = 0x4, offset = 0x4, fixed_abs, tag = 'smem constant byte address 0x4 - core index']
  #allocation1 [shape = 'u32[144,128]{1,0:T(1,128)}', space=vmem, size = 0x12000, scoped, tag = 'internal scratch']
  #allocation2 [shape = 'f32[4,640]{1,0:T(4,128)}', space=vmem, size = 0x2800, scoped, tag = 'scratch operand']
  %s0 = inlined_call_operand.vmem [shape: f32[1,384], index: 0, kind: input, shape index: {}]
  %s1 = inlined_call_operand.vmem [shape: f32[4,10], index: 1, kind: input, shape index: {}]
  %s2 = inlined_call_operand.vmem [shape: f32[4,37], index: 2, kind: input, shape index: {}]
  %s3 = inlined_call_operand.vmem [shape: f32[3,37], index: 3, kind: input, shape index: {}]
  %s4 = inlined_call_operand.vmem [shape: f32[2,1,384], index: 4, kind: input, shape index: {}]
  %s5 = inlined_call_operand.vmem [shape: f32[2,3,384], index: 5, kind: output, shape index: {}]
  %s6 = sld [smem:[#allocation0]]
  $region53: #{basenet_forward.1} parent=0
    _
  %s8 = ssub.s32 1, %s6
  %s9 = scalar_select 0, %s8, %s6
  loop: start=0, step=1, limit=4
  $region2: #{basenet_forward.1} parent=0 // loop_pre_header
    _
  $region3: #{basenet_forward.1} parent=0 // loop_header
    %s11 = sphi 0, %s15
    %p12 = scmp.ge.s32.totalorder %s11, 4
    %s19 = sphi 0, %s19
    %s21 = sphi 0, %s19
    %s22 = sphi 0, %s21
    %s36 = sphi 0, %s22
    %s40 = sphi 0, %s40
    %s42 = sphi 0, %s40
    %s43 = sphi 0, %s42
    %s57 = sphi 0, %s43
    %s61 = sphi 0, %s61
    %s63 = sphi 0, %s61
    %s64 = sphi 0, %s63
    %s78 = sphi 0, %s64
    %s82 = sphi 0, %s82
    %s84 = sphi 0, %s82
    %s85 = sphi 0, %s84
    %s99 = sphi 0, %s85
    %s105 = sphi 0, %s107
    %s108 = sphi 0, %s105
    %s109 = sphi 0, %s108
    %s125 = sphi 0, %s109
    %s131 = sphi 0, %s133
    %s134 = sphi 0, %s131
    %s135 = sphi 0, %s134
    %s151 = sphi 0, %s135
  $region4: #{basenet_forward.1} parent=0 // loop_header_branch
    %14 = sbr.rel (%p12) target = $region8
  $region5: #{basenet_forward.1} parent=0 // loop_body
    %s16 = ssub.s32 %s11, 1
    %s17 = ssub.s32 %s11, 2
    %s18 = sadd.s32 %s11, 1
    %s20 = sadd.s32 %s19, 1
    %p23 = scmp.eq.s32.totalorder %s11, 1
    %p24 = scmp.ne.s32.totalorder %s19, %s21
    %p25 = scmp.eq.s32.totalorder %s11, 0
    %p26 = por %p24, %p25
    %p27 = scmp.ne.s32.totalorder %s19, %s21
    %p28 = scmp.eq.s32.totalorder %s16, 1
    %p29 = por %p27, %p28
    %p30 = scmp.ne.s32.totalorder %s21, %s22
    %p31 = scmp.eq.s32.totalorder %s16, 0
    %p32 = por %p30, %p31
    %p33 = scmp.ne.s32.totalorder %s21, %s22
    %p34 = scmp.eq.s32.totalorder %s17, 1
    %p35 = por %p33, %p34
    %p37 = scmp.ne.s32.totalorder %s22, %s36
    %p38 = scmp.eq.s32.totalorder %s17, 0
    %p39 = por %p37, %p38
    %s41 = sadd.s32 %s40, 1
    %p44 = scmp.eq.s32.totalorder %s11, 1
    %p45 = scmp.ne.s32.totalorder %s40, %s42
    %p46 = scmp.eq.s32.totalorder %s11, 0
    %p47 = por %p45, %p46
    %p48 = scmp.ne.s32.totalorder %s40, %s42
    %p49 = scmp.eq.s32.totalorder %s16, 1
    %p50 = por %p48, %p49
    %p51 = scmp.ne.s32.totalorder %s42, %s43
    %p52 = scmp.eq.s32.totalorder %s16, 0
    %p53 = por %p51, %p52
    %p54 = scmp.ne.s32.totalorder %s42, %s43
    %p55 = scmp.eq.s32.totalorder %s17, 1
    %p56 = por %p54, %p55
    %p58 = scmp.ne.s32.totalorder %s43, %s57
    %p59 = scmp.eq.s32.totalorder %s17, 0
    %p60 = por %p58, %p59
    %s62 = sadd.s32 %s61, 1
    %p65 = scmp.eq.s32.totalorder %s11, 1
    %p66 = scmp.ne.s32.totalorder %s61, %s63
    %p67 = scmp.eq.s32.totalorder %s11, 0
    %p68 = por %p66, %p67
    %p69 = scmp.ne.s32.totalorder %s61, %s63
    %p70 = scmp.eq.s32.totalorder %s16, 1
    %p71 = por %p69, %p70
    %p72 = scmp.ne.s32.totalorder %s63, %s64
    %p73 = scmp.eq.s32.totalorder %s16, 0
    %p74 = por %p72, %p73
    %p75 = scmp.ne.s32.totalorder %s63, %s64
    %p76 = scmp.eq.s32.totalorder %s17, 1
    %p77 = por %p75, %p76
    %p79 = scmp.ne.s32.totalorder %s64, %s78
    %p80 = scmp.eq.s32.totalorder %s17, 0
    %p81 = por %p79, %p80
    %s83 = sadd.s32 %s82, 1
    %p86 = scmp.eq.s32.totalorder %s11, 1
    %p87 = scmp.ne.s32.totalorder %s82, %s84
    %p88 = scmp.eq.s32.totalorder %s11, 0
    %p89 = por %p87, %p88
    %p90 = scmp.ne.s32.totalorder %s82, %s84
    %p91 = scmp.eq.s32.totalorder %s16, 1
    %p92 = por %p90, %p91
    %p93 = scmp.ne.s32.totalorder %s84, %s85
    %p94 = scmp.eq.s32.totalorder %s16, 0
    %p95 = por %p93, %p94
    %p96 = scmp.ne.s32.totalorder %s84, %s85
    %p97 = scmp.eq.s32.totalorder %s17, 1
    %p98 = por %p96, %p97
    %p100 = scmp.ne.s32.totalorder %s85, %s99
    %p101 = scmp.eq.s32.totalorder %s17, 0
    %p102 = por %p100, %p101
    %s103 = ssub.s32 %s11, %s18
    %p104 = scmp.eq.s32.totalorder %s103, 0
    %s106 = sadd.s32 %s105, 1
    %s107 = scalar_select %p104, %s105, %s106
    %p110 = pneg %p104
    %p111 = scmp.eq.s32.totalorder %s11, 1
    %p112 = por %p110, %p111
    %p113 = scmp.ne.s32.totalorder %s105, %s108
    %p114 = scmp.eq.s32.totalorder %s11, 0
    %p115 = por %p113, %p114
    %p116 = scmp.ne.s32.totalorder %s105, %s108
    %p117 = scmp.eq.s32.totalorder %s16, 1
    %p118 = por %p116, %p117
    %p119 = scmp.ne.s32.totalorder %s108, %s109
    %p120 = scmp.eq.s32.totalorder %s16, 0
    %p121 = por %p119, %p120
    %p122 = scmp.ne.s32.totalorder %s108, %s109
    %p123 = scmp.eq.s32.totalorder %s17, 1
    %p124 = por %p122, %p123
    %p126 = scmp.ne.s32.totalorder %s109, %s125
    %p127 = scmp.eq.s32.totalorder %s17, 0
    %p128 = por %p126, %p127
    %s129 = ssub.s32 %s11, %s18
    %p130 = scmp.eq.s32.totalorder %s129, 0
    %s132 = sadd.s32 %s131, 1
    %s133 = scalar_select %p130, %s131, %s132
    %p136 = pneg %p130
    %p137 = scmp.eq.s32.totalorder %s11, 1
    %p138 = por %p136, %p137
    %p139 = scmp.ne.s32.totalorder %s131, %s134
    %p140 = scmp.eq.s32.totalorder %s11, 0
    %p141 = por %p139, %p140
    %p142 = scmp.ne.s32.totalorder %s131, %s134
    %p143 = scmp.eq.s32.totalorder %s16, 1
    %p144 = por %p142, %p143
    %p145 = scmp.ne.s32.totalorder %s134, %s135
    %p146 = scmp.eq.s32.totalorder %s16, 0
    %p147 = por %p145, %p146
    %p148 = scmp.ne.s32.totalorder %s134, %s135
    %p149 = scmp.eq.s32.totalorder %s17, 1
    %p150 = por %p148, %p149
    %p152 = scmp.ne.s32.totalorder %s135, %s151
    %p153 = scmp.eq.s32.totalorder %s17, 0
    %p154 = por %p152, %p153
    %p155 = scmp.le.s32.totalorder 1, %s11
    %p156 = scmp.lt.s32.totalorder %s11, 3
    %p157 = pnand %p155, %p156
    %p158 = pneg %p157
    // Predicated region
    $region9: #{basenet_forward.1} parent=5 // pred_check
      _
    $region10: #{basenet_forward.1} parent=5 // pred_check_branch
      %160 = sbr.rel (%p157) target = $region12
    $region11: #{basenet_forward.1} parent=5 // pred_region
      %s161 = ssub.s32 %s11, 1
      // Predicated region
      $region13: #{basenet_forward.1} parent=11 // pred_check
        %p162 = pneg %p32
      $region14: #{basenet_forward.1} parent=11 // pred_check_branch
        %164 = sbr.rel (%p162) target = $region16
      $region15: #{basenet_forward.1} parent=11 // pred_region
        _
      $region16: #{basenet_forward.1} parent=11 // pred_fallthru
        _
      // Predicated region
      $region17: #{basenet_forward.1} parent=11 // pred_check
        %p165 = pneg %p53
      $region18: #{basenet_forward.1} parent=11 // pred_check_branch
        %167 = sbr.rel (%p165) target = $region20
      $region19: #{basenet_forward.1} parent=11 // pred_region
        _
      $region20: #{basenet_forward.1} parent=11 // pred_fallthru
        _
      // Predicated region
      $region21: #{basenet_forward.1} parent=11 // pred_check
        %p168 = pneg %p74
      $region22: #{basenet_forward.1} parent=11 // pred_check_branch
        %170 = sbr.rel (%p168) target = $region24
      $region23: #{basenet_forward.1} parent=11 // pred_region
        _
      $region24: #{basenet_forward.1} parent=11 // pred_fallthru
        _
      // Predicated region
      $region25: #{basenet_forward.1} parent=11 // pred_check
        %p171 = pneg %p95
      $region26: #{basenet_forward.1} parent=11 // pred_check_branch
        %173 = sbr.rel (%p171) target = $region28
      $region27: #{basenet_forward.1} parent=11 // pred_region
        _
      $region28: #{basenet_forward.1} parent=11 // pred_fallthru
        _
    $region12: #{basenet_forward.1} parent=5 // pred_fallthru
      _
    %p174 = scmp.lt.s32.totalorder %s11, 2
    // Predicated region
    $region29: #{basenet_forward.1} parent=5 // pred_check
      %p175 = pneg %p174
    $region30: #{basenet_forward.1} parent=5 // pred_check_branch
      %177 = sbr.rel (%p175) target = $region32
    $region31: #{basenet_forward.1} parent=5 // pred_region
      // Predicated region
      $region33: #{basenet_forward.1} parent=31 // pred_check
        %p178 = pneg %p115
      $region34: #{basenet_forward.1} parent=31 // pred_check_branch
        %180 = sbr.rel (%p178) target = $region36
      $region35: #{basenet_forward.1} parent=31 // pred_region
        %p181 = scmp.lt.s32.totalorder %s11, 1
        %s182 = scalar_select %p181, %s11, 1
        %s183 = smul.addr %s182, 3
        %s184 = scalar_lea.vmem %s4, %s183
      $region36: #{basenet_forward.1} parent=31 // pred_fallthru
        _
    $region32: #{basenet_forward.1} parent=5 // pred_fallthru
      _
    %p185 = scmp.le.s32.totalorder 1, %s11
    %p186 = scmp.lt.s32.totalorder %s11, 3
    %p187 = pnand %p185, %p186
    %p188 = pneg %p187
    // Predicated region
    $region37: #{basenet_forward.1} parent=5 // pred_check
      _
    $region38: #{basenet_forward.1} parent=5 // pred_check_branch
      %190 = sbr.rel (%p187) target = $region40
    $region39: #{basenet_forward.1} parent=5 // pred_region
      %s191 = ssub.s32 %s11, 1
      %p192 = pneg %p32
      %p193 = pneg %p29
      %p194 = pneg %p53
      %p195 = pneg %p50
      %p196 = pneg %p74
      %p197 = pneg %p71
      %p198 = pneg %p95
      %p199 = pneg %p92
      %p200 = scmp.lt.s32.totalorder %s16, 1
      %s201 = scalar_select %p200, %s16, 1
      %s202 = smul.addr %s201, 3
      %s203 = scalar_lea.vmem %s4, %s202
      %p204 = pneg %p121
      %p205 = pneg %p118
      %p206 = pneg %p147
      %p207 = pneg %p144
      %p208 = scmp.lt.s32.totalorder %s16, 1
      %s209 = scalar_select %p208, %s16, 1
      %s210 = smul.addr %s209, 3
      %s211 = smul.addr %s210, 4
      %s212 = scalar_lea.vmem %s5, %s211
      %p213 = scmp.lt.s32.totalorder %s16, 1
      %s214 = scalar_select %p213, %s16, 1
      %s215 = smul.addr %s214, 3
      %s216 = scalar_lea.vmem %s4, %s215
      %p217 = scmp.lt.s32.totalorder %s16, 1
      %s218 = scalar_select %p217, %s16, 1
      %s219 = smul.addr %s218, 3
      %s220 = smul.addr %s219, 4
      %s221 = scalar_lea.vmem %s5, %s220
      %222 = vst [vmem:[#allocation2] sm:$0xff] 0.0
      %223 = vst [vmem:[#allocation2 + $0x8] sm:$0xff] 0.0
      %224 = vst [vmem:[#allocation2 + $0x10] sm:$0xf] 0.0
      %v225 = vld [vmem:[%s216] sm:$0x7]
      %v226 = vlaneseq
      %vm227 = vcmp.ge.s32.totalorder %v226, 0
      %vm228 = vcmp.lt.s32.totalorder %v226, 384
      %vm229 = vmand %vm227, %vm228
      %s230 = scalar_lea.vmem [#allocation2], 4
      %231 = vst.msk [vmem:[%s230] ss:$4 sm:$0x7] %vm229, %v225
      %v232 = vld [vmem:[%s0] sm:$0x7]
      %v233 = vld [vmem:[%s1] sm:$0xf]
      %235 = vset.pattern.permute.xlu0 9
      %236 = vperm.xlu0 %235, %v233
      %v237 = vpop.permute.xlu0 %236
      %v239 = vld [vmem:[#allocation2] ss:$4 sm:$0xf]
      %240 = vset.pattern.permute.xlu0 0
      %241 = vperm.xlu0 %240, %v233
      %v242 = vpop.permute.xlu0 %241
      %v245 = vlaneseq
      %v246 = vshrl.u32 %v245, 7
      %v247 = vsub.s32 0, %v246
      %v248 = vrot.slane %v239, %v247
      %v249 = vlaneseq
      %v250 = vshrl.u32 %v249, 7
      %v251 = vsub.s32 1, %v250
      %v252 = vrot.slane %v239, %v251
      %v253 = vlaneseq
      %v254 = vshrl.u32 %v253, 7
      %v255 = vsub.s32 2, %v254
      %v256 = vrot.slane %v239, %v255
      %v257 = vlaneseq
      %v258 = vshrl.u32 %v257, 7
      %v259 = vsub.s32 3, %v258
      %v260 = vrot.slane %v239, %v259
      %v265 = vmul.f32 %v242, %v248
      %v266 = vmul.f32 %v242, %v252
      %v267 = vmul.f32 %v242, %v256
      %v268 = vmul.f32 %v242, %v260
      %v269 = vadd.f32 %v237, %v265
      %v270 = vadd.f32 %v237, %v266
      %v271 = vadd.f32 %v237, %v267
      %v272 = vadd.f32 %v237, %v268
      %273 = vset.pattern.permute.xlu0 1
      %274 = vperm.xlu0 %273, %v233
      %v275 = vpop.permute.xlu0 %274
      %v277 = vmul.f32 %v275, %v248
      %v278 = vmul.f32 %v275, %v252
      %v279 = vmul.f32 %v275, %v256
      %v280 = vmul.f32 %v275, %v260
      %285 = vrot.lane.b32.xlu0 %v277, 127
      %v286 = vpop.permute.xlu0 %285
      %287 = vrot.lane.b32.xlu0 %v278, 127
      %v288 = vpop.permute.xlu0 %287
      %289 = vrot.lane.b32.xlu0 %v279, 127
      %v290 = vpop.permute.xlu0 %289
      %291 = vrot.lane.b32.xlu0 %v280, 127
      %v292 = vpop.permute.xlu0 %291
      %vm293 = vcmask 1039360
      %v294 = vsel %vm293, %v286, %v288
      %v295 = vsel %vm293, %v288, %v290
      %v296 = vsel %vm293, %v290, %v292
      %v301 = vadd.f32 %v269, %v294
      %v302 = vadd.f32 %v270, %v295
      %v303 = vadd.f32 %v271, %v296
      %v304 = vadd.f32 %v272, %v292
      %305 = vset.pattern.permute.xlu0 2
      %306 = vperm.xlu0 %305, %v233
      %v307 = vpop.permute.xlu0 %306
      %v309 = vmul.f32 %v307, %v248
      %v310 = vmul.f32 %v307, %v252
      %v311 = vmul.f32 %v307, %v256
      %v312 = vmul.f32 %v307, %v260
      %317 = vrot.lane.b32.xlu0 %v309, 126
      %v318 = vpop.permute.xlu0 %317
      %319 = vrot.lane.b32.xlu0 %v310, 126
      %v320 = vpop.permute.xlu0 %319
      %321 = vrot.lane.b32.xlu0 %v311, 126
      %v322 = vpop.permute.xlu0 %321
      %323 = vrot.lane.b32.xlu0 %v312, 126
      %v324 = vpop.permute.xlu0 %323
      %vm325 = vcmask 1031168
      %v326 = vsel %vm325, %v318, %v320
      %v327 = vsel %vm325, %v320, %v322
      %v328 = vsel %vm325, %v322, %v324
      %v333 = vadd.f32 %v301, %v326
      %v334 = vadd.f32 %v302, %v327
      %v335 = vadd.f32 %v303, %v328
      %v336 = vadd.f32 %v304, %v324
      %337 = vset.pattern.permute.xlu0 3
      %338 = vperm.xlu0 %337, %v233
      %v339 = vpop.permute.xlu0 %338
      %v341 = vmul.f32 %v339, %v248
      %v342 = vmul.f32 %v339, %v252
      %v343 = vmul.f32 %v339, %v256
      %v344 = vmul.f32 %v339, %v260
      %349 = vrot.lane.b32.xlu0 %v341, 110
      %v350 = vpop.permute.xlu0 %349
      %351 = vrot.lane.b32.xlu0 %v342, 110
      %v352 = vpop.permute.xlu0 %351
      %353 = vrot.lane.b32.xlu0 %v343, 110
      %v354 = vpop.permute.xlu0 %353
      %355 = vrot.lane.b32.xlu0 %v344, 110
      %v356 = vpop.permute.xlu0 %355
      %vm357 = vcmask 900096
      %v358 = vsel %vm357, %v350, %v352
      %v359 = vsel %vm357, %v352, %v354
      %v360 = vsel %vm357, %v354, %v356
      %v365 = vadd.f32 %v333, %v358
      %v366 = vadd.f32 %v334, %v359
      %v367 = vadd.f32 %v335, %v360
      %v368 = vadd.f32 %v336, %v356
      %v369 = vld [vmem:[%s230] ss:$4 sm:$0x7]
      %370 = vset.pattern.permute.xlu0 4
      %371 = vperm.xlu0 %370, %v233
      %v372 = vpop.permute.xlu0 %371
      %v375 = vlaneseq
      %v376 = vshrl.u32 %v375, 7
      %v377 = vsub.s32 0, %v376
      %v378 = vrot.slane %v369, %v377
      %v379 = vlaneseq
      %v380 = vshrl.u32 %v379, 7
      %v381 = vsub.s32 1, %v380
      %v382 = vrot.slane %v369, %v381
      %v383 = vlaneseq
      %v384 = vshrl.u32 %v383, 7
      %v385 = vsub.s32 2, %v384
      %v386 = vrot.slane %v369, %v385
      %v390 = vmul.f32 %v372, %v378
      %v391 = vmul.f32 %v372, %v382
      %v392 = vmul.f32 %v372, %v386
      %396 = vrot.lane.b32.xlu0 %v390, 109
      %v397 = vpop.permute.xlu0 %396
      %398 = vrot.lane.b32.xlu0 %v391, 109
      %v399 = vpop.permute.xlu0 %398
      %400 = vrot.lane.b32.xlu0 %v392, 109
      %v401 = vpop.permute.xlu0 %400
      %vm402 = vcmask 891904
      %v403 = vsel %vm402, %v397, %v399
      %v404 = vsel %vm402, %v399, %v401
      %v409 = vadd.f32 %v365, %v397
      %v410 = vadd.f32 %v366, %v403
      %v411 = vadd.f32 %v367, %v404
      %v412 = vadd.f32 %v368, %v401
      %s413 = scalar_lea.vmem [#allocation2], 4
      %v414 = vld [vmem:[%s413] ss:$4 sm:$0xf]
      %415 = vset.pattern.permute.xlu0 5
      %416 = vperm.xlu0 %415, %v233
      %v417 = vpop.permute.xlu0 %416
      %v420 = vlaneseq
      %v421 = vshrl.u32 %v420, 7
      %v422 = vsub.s32 0, %v421
      %v423 = vrot.slane %v414, %v422
      %v424 = vlaneseq
      %v425 = vshrl.u32 %v424, 7
      %v426 = vsub.s32 1, %v425
      %v427 = vrot.slane %v414, %v426
      %v428 = vlaneseq
      %v429 = vshrl.u32 %v428, 7
      %v430 = vsub.s32 2, %v429
      %v431 = vrot.slane %v414, %v430
      %v432 = vlaneseq
      %v433 = vshrl.u32 %v432, 7
      %v434 = vsub.s32 3, %v433
      %v435 = vrot.slane %v414, %v434
      %v440 = vmul.f32 %v417, %v423
      %v441 = vmul.f32 %v417, %v427
      %v442 = vmul.f32 %v417, %v431
      %v443 = vmul.f32 %v417, %v435
      %448 = vrot.lane.b32.xlu0 %v440, 108
      %v449 = vpop.permute.xlu0 %448
      %450 = vrot.lane.b32.xlu0 %v441, 108
      %v451 = vpop.permute.xlu0 %450
      %452 = vrot.lane.b32.xlu0 %v442, 108
      %v453 = vpop.permute.xlu0 %452
      %454 = vrot.lane.b32.xlu0 %v443, 108
      %v455 = vpop.permute.xlu0 %454
      %vm456 = vcmask 883712
      %v457 = vsel %vm456, %v449, %v451
      %v458 = vsel %vm456, %v451, %v453
      %v459 = vsel %vm456, %v453, %v455
      %v464 = vadd.f32 %v409, %v449
      %v465 = vadd.f32 %v410, %v457
      %v466 = vadd.f32 %v411, %v458
      %v467 = vadd.f32 %v412, %v459
      %468 = vset.pattern.permute.xlu0 6
      %469 = vperm.xlu0 %468, %v233
      %v470 = vpop.permute.xlu0 %469
      %v472 = vmul.f32 %v470, %v423
      %v473 = vmul.f32 %v470, %v427
      %v474 = vmul.f32 %v470, %v431
      %v475 = vmul.f32 %v470, %v435
      %480 = vrot.lane.b32.xlu0 %v472, 92
      %v481 = vpop.permute.xlu0 %480
      %482 = vrot.lane.b32.xlu0 %v473, 92
      %v483 = vpop.permute.xlu0 %482
      %484 = vrot.lane.b32.xlu0 %v474, 92
      %v485 = vpop.permute.xlu0 %484
      %486 = vrot.lane.b32.xlu0 %v475, 92
      %v487 = vpop.permute.xlu0 %486
      %vm488 = vcmask 752640
      %v489 = vsel %vm488, %v481, %v483
      %v490 = vsel %vm488, %v483, %v485
      %v491 = vsel %vm488, %v485, %v487
      %v496 = vadd.f32 %v464, %v481
      %v497 = vadd.f32 %v465, %v489
      %v498 = vadd.f32 %v466, %v490
      %v499 = vadd.f32 %v467, %v491
      %500 = vset.pattern.permute.xlu0 7
      %501 = vperm.xlu0 %500, %v233
      %v502 = vpop.permute.xlu0 %501
      %v504 = vmul.f32 %v502, %v423
      %v505 = vmul.f32 %v502, %v427
      %v506 = vmul.f32 %v502, %v431
      %v507 = vmul.f32 %v502, %v435
      %512 = vrot.lane.b32.xlu0 %v504, 91
      %v513 = vpop.permute.xlu0 %512
      %514 = vrot.lane.b32.xlu0 %v505, 91
      %v515 = vpop.permute.xlu0 %514
      %516 = vrot.lane.b32.xlu0 %v506, 91
      %v517 = vpop.permute.xlu0 %516
      %518 = vrot.lane.b32.xlu0 %v507, 91
      %v519 = vpop.permute.xlu0 %518
      %vm520 = vcmask 744448
      %v521 = vsel %vm520, %v513, %v515
      %v522 = vsel %vm520, %v515, %v517
      %v523 = vsel %vm520, %v517, %v519
      %v528 = vadd.f32 %v496, %v513
      %v529 = vadd.f32 %v497, %v521
      %v530 = vadd.f32 %v498, %v522
      %v531 = vadd.f32 %v499, %v523
      %532 = vset.pattern.permute.xlu0 8
      %533 = vperm.xlu0 %532, %v233
      %v534 = vpop.permute.xlu0 %533
      %v536 = vmul.f32 %v534, %v423
      %v537 = vmul.f32 %v534, %v427
      %v538 = vmul.f32 %v534, %v431
      %v539 = vmul.f32 %v534, %v435
      %544 = vrot.lane.b32.xlu0 %v536, 90
      %v545 = vpop.permute.xlu0 %544
      %546 = vrot.lane.b32.xlu0 %v537, 90
      %v547 = vpop.permute.xlu0 %546
      %548 = vrot.lane.b32.xlu0 %v538, 90
      %v549 = vpop.permute.xlu0 %548
      %550 = vrot.lane.b32.xlu0 %v539, 90
      %v551 = vpop.permute.xlu0 %550
      %vm552 = vcmask 736256
      %v553 = vsel %vm552, %v545, %v547
      %v554 = vsel %vm552, %v547, %v549
      %v555 = vsel %vm552, %v549, %v551
      %v560 = vadd.f32 %v528, %v545
      %v561 = vadd.f32 %v529, %v553
      %v562 = vadd.f32 %v530, %v554
      %v563 = vadd.f32 %v531, %v555
      %v564 = vmax.f32 %v560, 0.0
      %v565 = vmax.f32 %v561, 0.0
      %v566 = vmax.f32 %v562, 0.0
      %v567 = vmax.f32 %v563, 0.0
      %v569 = vlaneseq
      %v570 = vshrl.u32 %v569, 7
      %v571 = vsub.s32 0, %v570
      %v572 = vrot.slane %v232, %v571
      %v573 = vlaneseq
      %v574 = vshrl.u32 %v573, 7
      %v575 = vsub.s32 1, %v574
      %v576 = vrot.slane %v232, %v575
      %v577 = vlaneseq
      %v578 = vshrl.u32 %v577, 7
      %v579 = vsub.s32 2, %v578
      %v580 = vrot.slane %v232, %v579
      %581 = vrot.lane.b32.xlu0 %v572, 109
      %v582 = vpop.permute.xlu0 %581
      %583 = vrot.lane.b32.xlu0 %v576, 109
      %v584 = vpop.permute.xlu0 %583
      %585 = vrot.lane.b32.xlu0 %v580, 109
      %v586 = vpop.permute.xlu0 %585
      %v587 = vsel %vm402, %v582, %v584
      %v588 = vsel %vm402, %v584, %v586
      %v593 = vmul.f32 %v564, %v582
      %v594 = vmul.f32 %v565, %v587
      %v595 = vmul.f32 %v566, %v588
      %v596 = vmul.f32 %v567, %v586
      %v601 = vcombine.low %v593, %v594
      %v602 = vcombine.low %v595, %v596
      %603 = vrot.lane.b32.xlu0 %v601, 19
      %v604 = vpop.permute.xlu0 %603
      %605 = vrot.lane.b32.xlu0 %v602, 19
      %v606 = vpop.permute.xlu0 %605
      %v607 = vrot.slane %v604, 4
      %v608 = vrot.slane %v606, 4
      %vm609 = vcmask 1043456
      %v610 = vsel %vm609, %v607, %v608
      %vm611 = vcmask 154624
      %v612 = vsel %vm611, %v604, %v610
      %v613 = vsel %vm611, %v606, %v608
      %616 = vst [vmem:[#allocation2 + $0x4] sm:$0xff] %v612
      %617 = vst [vmem:[#allocation2 + $0xc] sm:$0xf] %v613
      %v618 = vld [vmem:[%s2] sm:$0xf]
      %620 = vset.pattern.permute.xlu0 36
      %621 = vperm.xlu0 %620, %v618
      %v622 = vpop.permute.xlu0 %621
      %v624 = vld [vmem:[#allocation2] sm:$0xff]
      %v625 = vld [vmem:[#allocation2 + $0x8] sm:$0xff]
      %626 = vset.pattern.permute.xlu0 0
      %627 = vperm.xlu0 %626, %v618
      %v628 = vpop.permute.xlu0 %627
      %v632 = vlaneseq
      %v633 = vshrl.u32 %v632, 7
      %v634 = vsub.s32 0, %v633
      %v635 = vrot.slane %v624, %v634
      %v636 = vlaneseq
      %v637 = vshrl.u32 %v636, 7
      %v638 = vsub.s32 4, %v637
      %v639 = vrot.slane %v624, %v638
      %v640 = vlaneseq
      %v641 = vshrl.u32 %v640, 7
      %v642 = vsub.s32 0, %v641
      %v643 = vrot.slane %v625, %v642
      %v644 = vlaneseq
      %v645 = vshrl.u32 %v644, 7
      %v646 = vsub.s32 4, %v645
      %v647 = vrot.slane %v625, %v646
      %v652 = vlaneseq
      %v653 = vshrl.u32 %v652, 7
      %v654 = vsub.s32 0, %v653
      %v655 = vrot.slane %v635, %v654
      %v656 = vlaneseq
      %v657 = vshrl.u32 %v656, 7
      %v658 = vsub.s32 0, %v657
      %v659 = vrot.slane %v639, %v658
      %v660 = vlaneseq
      %v661 = vshrl.u32 %v660, 7
      %v662 = vsub.s32 0, %v661
      %v663 = vrot.slane %v643, %v662
      %v664 = vlaneseq
      %v665 = vshrl.u32 %v664, 7
      %v666 = vsub.s32 0, %v665
      %v667 = vrot.slane %v647, %v666
      %v668 = vmul.f32 %v628, %v655
      %v669 = vmul.f32 %v628, %v659
      %v670 = vmul.f32 %v628, %v663
      %v671 = vmul.f32 %v628, %v667
      %v672 = vadd.f32 %v622, %v668
      %v673 = vadd.f32 %v622, %v669
      %v674 = vadd.f32 %v622, %v670
      %v675 = vadd.f32 %v622, %v671
      %676 = vset.pattern.permute.xlu0 1
      %677 = vperm.xlu0 %676, %v618
      %v678 = vpop.permute.xlu0 %677
      %v680 = vlaneseq
      %v681 = vshrl.u32 %v680, 7
      %v682 = vsub.s32 1, %v681
      %v683 = vrot.slane %v624, %v682
      %v684 = vlaneseq
      %v685 = vshrl.u32 %v684, 7
      %v686 = vsub.s32 5, %v685
      %v687 = vrot.slane %v624, %v686
      %v688 = vlaneseq
      %v689 = vshrl.u32 %v688, 7
      %v690 = vsub.s32 1, %v689
      %v691 = vrot.slane %v625, %v690
      %v692 = vlaneseq
      %v693 = vshrl.u32 %v692, 7
      %v694 = vsub.s32 5, %v693
      %v695 = vrot.slane %v625, %v694
      %v700 = vlaneseq
      %v701 = vshrl.u32 %v700, 7
      %v702 = vsub.s32 1, %v701
      %v703 = vrot.slane %v683, %v702
      %v704 = vlaneseq
      %v705 = vshrl.u32 %v704, 7
      %v706 = vsub.s32 1, %v705
      %v707 = vrot.slane %v687, %v706
      %v708 = vlaneseq
      %v709 = vshrl.u32 %v708, 7
      %v710 = vsub.s32 1, %v709
      %v711 = vrot.slane %v691, %v710
      %v712 = vlaneseq
      %v713 = vshrl.u32 %v712, 7
      %v714 = vsub.s32 1, %v713
      %v715 = vrot.slane %v695, %v714
      %v716 = vmul.f32 %v678, %v703
      %v717 = vmul.f32 %v678, %v707
      %v718 = vmul.f32 %v678, %v711
      %v719 = vmul.f32 %v678, %v715
      %v720 = vadd.f32 %v672, %v716
      %v721 = vadd.f32 %v673, %v717
      %v722 = vadd.f32 %v674, %v718
      %v723 = vadd.f32 %v675, %v719
      %724 = vset.pattern.permute.xlu0 2
      %725 = vperm.xlu0 %724, %v618
      %v726 = vpop.permute.xlu0 %725
      %v728 = vlaneseq
      %v729 = vshrl.u32 %v728, 7
      %v730 = vsub.s32 2, %v729
      %v731 = vrot.slane %v624, %v730
      %v732 = vlaneseq
      %v733 = vshrl.u32 %v732, 7
      %v734 = vsub.s32 6, %v733
      %v735 = vrot.slane %v624, %v734
      %v736 = vlaneseq
      %v737 = vshrl.u32 %v736, 7
      %v738 = vsub.s32 2, %v737
      %v739 = vrot.slane %v625, %v738
      %v740 = vlaneseq
      %v741 = vshrl.u32 %v740, 7
      %v742 = vsub.s32 6, %v741
      %v743 = vrot.slane %v625, %v742
      %v748 = vlaneseq
      %v749 = vshrl.u32 %v748, 7
      %v750 = vsub.s32 2, %v749
      %v751 = vrot.slane %v731, %v750
      %v752 = vlaneseq
      %v753 = vshrl.u32 %v752, 7
      %v754 = vsub.s32 2, %v753
      %v755 = vrot.slane %v735, %v754
      %v756 = vlaneseq
      %v757 = vshrl.u32 %v756, 7
      %v758 = vsub.s32 2, %v757
      %v759 = vrot.slane %v739, %v758
      %v760 = vlaneseq
      %v761 = vshrl.u32 %v760, 7
      %v762 = vsub.s32 2, %v761
      %v763 = vrot.slane %v743, %v762
      %v764 = vmul.f32 %v726, %v751
      %v765 = vmul.f32 %v726, %v755
      %v766 = vmul.f32 %v726, %v759
      %v767 = vmul.f32 %v726, %v763
      %v768 = vadd.f32 %v720, %v764
      %v769 = vadd.f32 %v721, %v765
      %v770 = vadd.f32 %v722, %v766
      %v771 = vadd.f32 %v723, %v767
      %772 = vset.pattern.permute.xlu0 3
      %773 = vperm.xlu0 %772, %v618
      %v774 = vpop.permute.xlu0 %773
      %v776 = vlaneseq
      %v777 = vshrl.u32 %v776, 7
      %v778 = vsub.s32 3, %v777
      %v779 = vrot.slane %v624, %v778
      %v780 = vlaneseq
      %v781 = vshrl.u32 %v780, 7
      %v782 = vsub.s32 7, %v781
      %v783 = vrot.slane %v624, %v782
      %v784 = vlaneseq
      %v785 = vshrl.u32 %v784, 7
      %v786 = vsub.s32 3, %v785
      %v787 = vrot.slane %v625, %v786
      %v788 = vlaneseq
      %v789 = vshrl.u32 %v788, 7
      %v790 = vsub.s32 7, %v789
      %v791 = vrot.slane %v625, %v790
      %v796 = vlaneseq
      %v797 = vshrl.u32 %v796, 7
      %v798 = vsub.s32 3, %v797
      %v799 = vrot.slane %v779, %v798
      %v800 = vlaneseq
      %v801 = vshrl.u32 %v800, 7
      %v802 = vsub.s32 3, %v801
      %v803 = vrot.slane %v783, %v802
      %v804 = vlaneseq
      %v805 = vshrl.u32 %v804, 7
      %v806 = vsub.s32 3, %v805
      %v807 = vrot.slane %v787, %v806
      %v808 = vlaneseq
      %v809 = vshrl.u32 %v808, 7
      %v810 = vsub.s32 3, %v809
      %v811 = vrot.slane %v791, %v810
      %v812 = vmul.f32 %v774, %v799
      %v813 = vmul.f32 %v774, %v803
      %v814 = vmul.f32 %v774, %v807
      %v815 = vmul.f32 %v774, %v811
      %v816 = vadd.f32 %v768, %v812
      %v817 = vadd.f32 %v769, %v813
      %v818 = vadd.f32 %v770, %v814
      %v819 = vadd.f32 %v771, %v815
      %820 = vset.pattern.permute.xlu0 4
      %821 = vperm.xlu0 %820, %v618
      %v822 = vpop.permute.xlu0 %821
      %v824 = vmul.f32 %v822, %v655
      %v825 = vmul.f32 %v822, %v659
      %v826 = vmul.f32 %v822, %v663
      %v827 = vmul.f32 %v822, %v667
      %832 = vrot.lane.b32.xlu0 %v824, 127
      %v833 = vpop.permute.xlu0 %832
      %834 = vrot.lane.b32.xlu0 %v825, 127
      %v835 = vpop.permute.xlu0 %834
      %836 = vrot.lane.b32.xlu0 %v826, 127
      %v837 = vpop.permute.xlu0 %836
      %838 = vrot.lane.b32.xlu0 %v827, 127
      %v839 = vpop.permute.xlu0 %838
      %v840 = vsel %vm293, %v833, %v835
      %v841 = vsel %vm293, %v835, %v837
      %v842 = vsel %vm293, %v837, %v839
      %v847 = vadd.f32 %v816, %v840
      %v848 = vadd.f32 %v817, %v841
      %v849 = vadd.f32 %v818, %v842
      %v850 = vadd.f32 %v819, %v839
      %851 = vset.pattern.permute.xlu0 5
      %852 = vperm.xlu0 %851, %v618
      %v853 = vpop.permute.xlu0 %852
      %v855 = vmul.f32 %v853, %v703
      %v856 = vmul.f32 %v853, %v707
      %v857 = vmul.f32 %v853, %v711
      %v858 = vmul.f32 %v853, %v715
      %863 = vrot.lane.b32.xlu0 %v855, 127
      %v864 = vpop.permute.xlu0 %863
      %865 = vrot.lane.b32.xlu0 %v856, 127
      %v866 = vpop.permute.xlu0 %865
      %867 = vrot.lane.b32.xlu0 %v857, 127
      %v868 = vpop.permute.xlu0 %867
      %869 = vrot.lane.b32.xlu0 %v858, 127
      %v870 = vpop.permute.xlu0 %869
      %v871 = vsel %vm293, %v864, %v866
      %v872 = vsel %vm293, %v866, %v868
      %v873 = vsel %vm293, %v868, %v870
      %v878 = vadd.f32 %v847, %v871
      %v879 = vadd.f32 %v848, %v872
      %v880 = vadd.f32 %v849, %v873
      %v881 = vadd.f32 %v850, %v870
      %882 = vset.pattern.permute.xlu0 6
      %883 = vperm.xlu0 %882, %v618
      %v884 = vpop.permute.xlu0 %883
      %v886 = vmul.f32 %v884, %v751
      %v887 = vmul.f32 %v884, %v755
      %v888 = vmul.f32 %v884, %v759
      %v889 = vmul.f32 %v884, %v763
      %894 = vrot.lane.b32.xlu0 %v886, 127
      %v895 = vpop.permute.xlu0 %894
      %896 = vrot.lane.b32.xlu0 %v887, 127
      %v897 = vpop.permute.xlu0 %896
      %898 = vrot.lane.b32.xlu0 %v888, 127
      %v899 = vpop.permute.xlu0 %898
      %900 = vrot.lane.b32.xlu0 %v889, 127
      %v901 = vpop.permute.xlu0 %900
      %v902 = vsel %vm293, %v895, %v897
      %v903 = vsel %vm293, %v897, %v899
      %v904 = vsel %vm293, %v899, %v901
      %v909 = vadd.f32 %v878, %v902
      %v910 = vadd.f32 %v879, %v903
      %v911 = vadd.f32 %v880, %v904
      %v912 = vadd.f32 %v881, %v901
      %913 = vset.pattern.permute.xlu0 7
      %914 = vperm.xlu0 %913, %v618
      %v915 = vpop.permute.xlu0 %914
      %v917 = vmul.f32 %v915, %v799
      %v918 = vmul.f32 %v915, %v803
      %v919 = vmul.f32 %v915, %v807
      %v920 = vmul.f32 %v915, %v811
      %925 = vrot.lane.b32.xlu0 %v917, 127
      %v926 = vpop.permute.xlu0 %925
      %927 = vrot.lane.b32.xlu0 %v918, 127
      %v928 = vpop.permute.xlu0 %927
      %929 = vrot.lane.b32.xlu0 %v919, 127
      %v930 = vpop.permute.xlu0 %929
      %931 = vrot.lane.b32.xlu0 %v920, 127
      %v932 = vpop.permute.xlu0 %931
      %v933 = vsel %vm293, %v926, %v928
      %v934 = vsel %vm293, %v928, %v930
      %v935 = vsel %vm293, %v930, %v932
      %v940 = vadd.f32 %v909, %v933
      %v941 = vadd.f32 %v910, %v934
      %v942 = vadd.f32 %v911, %v935
      %v943 = vadd.f32 %v912, %v932
      %944 = vset.pattern.permute.xlu0 8
      %945 = vperm.xlu0 %944, %v618
      %v946 = vpop.permute.xlu0 %945
      %v948 = vmul.f32 %v946, %v655
      %v949 = vmul.f32 %v946, %v659
      %v950 = vmul.f32 %v946, %v663
      %v951 = vmul.f32 %v946, %v667
      %956 = vrot.lane.b32.xlu0 %v948, 126
      %v957 = vpop.permute.xlu0 %956
      %958 = vrot.lane.b32.xlu0 %v949, 126
      %v959 = vpop.permute.xlu0 %958
      %960 = vrot.lane.b32.xlu0 %v950, 126
      %v961 = vpop.permute.xlu0 %960
      %962 = vrot.lane.b32.xlu0 %v951, 126
      %v963 = vpop.permute.xlu0 %962
      %v964 = vsel %vm325, %v957, %v959
      %v965 = vsel %vm325, %v959, %v961
      %v966 = vsel %vm325, %v961, %v963
      %v971 = vadd.f32 %v940, %v964
      %v972 = vadd.f32 %v941, %v965
      %v973 = vadd.f32 %v942, %v966
      %v974 = vadd.f32 %v943, %v963
      %975 = vset.pattern.permute.xlu0 9
      %976 = vperm.xlu0 %975, %v618
      %v977 = vpop.permute.xlu0 %976
      %v979 = vmul.f32 %v977, %v703
      %v980 = vmul.f32 %v977, %v707
      %v981 = vmul.f32 %v977, %v711
      %v982 = vmul.f32 %v977, %v715
      %987 = vrot.lane.b32.xlu0 %v979, 126
      %v988 = vpop.permute.xlu0 %987
      %989 = vrot.lane.b32.xlu0 %v980, 126
      %v990 = vpop.permute.xlu0 %989
      %991 = vrot.lane.b32.xlu0 %v981, 126
      %v992 = vpop.permute.xlu0 %991
      %993 = vrot.lane.b32.xlu0 %v982, 126
      %v994 = vpop.permute.xlu0 %993
      %v995 = vsel %vm325, %v988, %v990
      %v996 = vsel %vm325, %v990, %v992
      %v997 = vsel %vm325, %v992, %v994
      %v1002 = vadd.f32 %v971, %v995
      %v1003 = vadd.f32 %v972, %v996
      %v1004 = vadd.f32 %v973, %v997
      %v1005 = vadd.f32 %v974, %v994
      %1006 = vset.pattern.permute.xlu0 10
      %1007 = vperm.xlu0 %1006, %v618
      %v1008 = vpop.permute.xlu0 %1007
      %v1010 = vmul.f32 %v1008, %v751
      %v1011 = vmul.f32 %v1008, %v755
      %v1012 = vmul.f32 %v1008, %v759
      %v1013 = vmul.f32 %v1008, %v763
      %1018 = vrot.lane.b32.xlu0 %v1010, 126
      %v1019 = vpop.permute.xlu0 %1018
      %1020 = vrot.lane.b32.xlu0 %v1011, 126
      %v1021 = vpop.permute.xlu0 %1020
      %1022 = vrot.lane.b32.xlu0 %v1012, 126
      %v1023 = vpop.permute.xlu0 %1022
      %1024 = vrot.lane.b32.xlu0 %v1013, 126
      %v1025 = vpop.permute.xlu0 %1024
      %v1026 = vsel %vm325, %v1019, %v1021
      %v1027 = vsel %vm325, %v1021, %v1023
      %v1028 = vsel %vm325, %v1023, %v1025
      %v1033 = vadd.f32 %v1002, %v1026
      %v1034 = vadd.f32 %v1003, %v1027
      %v1035 = vadd.f32 %v1004, %v1028
      %v1036 = vadd.f32 %v1005, %v1025
      %1037 = vset.pattern.permute.xlu0 11
      %1038 = vperm.xlu0 %1037, %v618
      %v1039 = vpop.permute.xlu0 %1038
      %v1041 = vmul.f32 %v1039, %v799
      %v1042 = vmul.f32 %v1039, %v803
      %v1043 = vmul.f32 %v1039, %v807
      %v1044 = vmul.f32 %v1039, %v811
      %1049 = vrot.lane.b32.xlu0 %v1041, 126
      %v1050 = vpop.permute.xlu0 %1049
      %1051 = vrot.lane.b32.xlu0 %v1042, 126
      %v1052 = vpop.permute.xlu0 %1051
      %1053 = vrot.lane.b32.xlu0 %v1043, 126
      %v1054 = vpop.permute.xlu0 %1053
      %1055 = vrot.lane.b32.xlu0 %v1044, 126
      %v1056 = vpop.permute.xlu0 %1055
      %v1057 = vsel %vm325, %v1050, %v1052
      %v1058 = vsel %vm325, %v1052, %v1054
      %v1059 = vsel %vm325, %v1054, %v1056
      %v1064 = vadd.f32 %v1033, %v1057
      %v1065 = vadd.f32 %v1034, %v1058
      %v1066 = vadd.f32 %v1035, %v1059
      %v1067 = vadd.f32 %v1036, %v1056
      %1068 = vset.pattern.permute.xlu0 12
      %1069 = vperm.xlu0 %1068, %v618
      %v1070 = vpop.permute.xlu0 %1069
      %v1072 = vmul.f32 %v1070, %v655
      %v1073 = vmul.f32 %v1070, %v659
      %v1074 = vmul.f32 %v1070, %v663
      %v1075 = vmul.f32 %v1070, %v667
      %1080 = vrot.lane.b32.xlu0 %v1072, 110
      %v1081 = vpop.permute.xlu0 %1080
      %1082 = vrot.lane.b32.xlu0 %v1073, 110
      %v1083 = vpop.permute.xlu0 %1082
      %1084 = vrot.lane.b32.xlu0 %v1074, 110
      %v1085 = vpop.permute.xlu0 %1084
      %1086 = vrot.lane.b32.xlu0 %v1075, 110
      %v1087 = vpop.permute.xlu0 %1086
      %v1088 = vsel %vm357, %v1081, %v1083
      %v1089 = vsel %vm357, %v1083, %v1085
      %v1090 = vsel %vm357, %v1085, %v1087
      %v1095 = vadd.f32 %v1064, %v1088
      %v1096 = vadd.f32 %v1065, %v1089
      %v1097 = vadd.f32 %v1066, %v1090
      %v1098 = vadd.f32 %v1067, %v1087
      %1099 = vset.pattern.permute.xlu0 13
      %1100 = vperm.xlu0 %1099, %v618
      %v1101 = vpop.permute.xlu0 %1100
      %v1103 = vmul.f32 %v1101, %v703
      %v1104 = vmul.f32 %v1101, %v707
      %v1105 = vmul.f32 %v1101, %v711
      %v1106 = vmul.f32 %v1101, %v715
      %1111 = vrot.lane.b32.xlu0 %v1103, 110
      %v1112 = vpop.permute.xlu0 %1111
      %1113 = vrot.lane.b32.xlu0 %v1104, 110
      %v1114 = vpop.permute.xlu0 %1113
      %1115 = vrot.lane.b32.xlu0 %v1105, 110
      %v1116 = vpop.permute.xlu0 %1115
      %1117 = vrot.lane.b32.xlu0 %v1106, 110
      %v1118 = vpop.permute.xlu0 %1117
      %v1119 = vsel %vm357, %v1112, %v1114
      %v1120 = vsel %vm357, %v1114, %v1116
      %v1121 = vsel %vm357, %v1116, %v1118
      %v1126 = vadd.f32 %v1095, %v1119
      %v1127 = vadd.f32 %v1096, %v1120
      %v1128 = vadd.f32 %v1097, %v1121
      %v1129 = vadd.f32 %v1098, %v1118
      %1130 = vset.pattern.permute.xlu0 14
      %1131 = vperm.xlu0 %1130, %v618
      %v1132 = vpop.permute.xlu0 %1131
      %v1134 = vmul.f32 %v1132, %v751
      %v1135 = vmul.f32 %v1132, %v755
      %v1136 = vmul.f32 %v1132, %v759
      %v1137 = vmul.f32 %v1132, %v763
      %1142 = vrot.lane.b32.xlu0 %v1134, 110
      %v1143 = vpop.permute.xlu0 %1142
      %1144 = vrot.lane.b32.xlu0 %v1135, 110
      %v1145 = vpop.permute.xlu0 %1144
      %1146 = vrot.lane.b32.xlu0 %v1136, 110
      %v1147 = vpop.permute.xlu0 %1146
      %1148 = vrot.lane.b32.xlu0 %v1137, 110
      %v1149 = vpop.permute.xlu0 %1148
      %v1150 = vsel %vm357, %v1143, %v1145
      %v1151 = vsel %vm357, %v1145, %v1147
      %v1152 = vsel %vm357, %v1147, %v1149
      %v1157 = vadd.f32 %v1126, %v1150
      %v1158 = vadd.f32 %v1127, %v1151
      %v1159 = vadd.f32 %v1128, %v1152
      %v1160 = vadd.f32 %v1129, %v1149
      %1161 = vset.pattern.permute.xlu0 15
      %1162 = vperm.xlu0 %1161, %v618
      %v1163 = vpop.permute.xlu0 %1162
      %v1165 = vmul.f32 %v1163, %v799
      %v1166 = vmul.f32 %v1163, %v803
      %v1167 = vmul.f32 %v1163, %v807
      %v1168 = vmul.f32 %v1163, %v811
      %1173 = vrot.lane.b32.xlu0 %v1165, 110
      %v1174 = vpop.permute.xlu0 %1173
      %1175 = vrot.lane.b32.xlu0 %v1166, 110
      %v1176 = vpop.permute.xlu0 %1175
      %1177 = vrot.lane.b32.xlu0 %v1167, 110
      %v1178 = vpop.permute.xlu0 %1177
      %1179 = vrot.lane.b32.xlu0 %v1168, 110
      %v1180 = vpop.permute.xlu0 %1179
      %v1181 = vsel %vm357, %v1174, %v1176
      %v1182 = vsel %vm357, %v1176, %v1178
      %v1183 = vsel %vm357, %v1178, %v1180
      %v1188 = vadd.f32 %v1157, %v1181
      %v1189 = vadd.f32 %v1158, %v1182
      %v1190 = vadd.f32 %v1159, %v1183
      %v1191 = vadd.f32 %v1160, %v1180
      %v1192 = vld [vmem:[#allocation2 + $0x4] sm:$0xff]
      %v1193 = vld [vmem:[#allocation2 + $0xc] sm:$0xf]
      %1194 = vset.pattern.permute.xlu0 16
      %1195 = vperm.xlu0 %1194, %v618
      %v1196 = vpop.permute.xlu0 %1195
      %v1200 = vlaneseq
      %v1201 = vshrl.u32 %v1200, 7
      %v1202 = vsub.s32 0, %v1201
      %v1203 = vrot.slane %v1192, %v1202
      %v1204 = vlaneseq
      %v1205 = vshrl.u32 %v1204, 7
      %v1206 = vsub.s32 4, %v1205
      %v1207 = vrot.slane %v1192, %v1206
      %v1208 = vlaneseq
      %v1209 = vshrl.u32 %v1208, 7
      %v1210 = vsub.s32 0, %v1209
      %v1211 = vrot.slane %v1193, %v1210
      %v1215 = vlaneseq
      %v1216 = vshrl.u32 %v1215, 7
      %v1217 = vsub.s32 0, %v1216
      %v1218 = vrot.slane %v1203, %v1217
      %v1219 = vlaneseq
      %v1220 = vshrl.u32 %v1219, 7
      %v1221 = vsub.s32 0, %v1220
      %v1222 = vrot.slane %v1207, %v1221
      %v1223 = vlaneseq
      %v1224 = vshrl.u32 %v1223, 7
      %v1225 = vsub.s32 0, %v1224
      %v1226 = vrot.slane %v1211, %v1225
      %v1227 = vmul.f32 %v1196, %v1218
      %v1228 = vmul.f32 %v1196, %v1222
      %v1229 = vmul.f32 %v1196, %v1226
      %1233 = vrot.lane.b32.xlu0 %v1227, 109
      %v1234 = vpop.permute.xlu0 %1233
      %1235 = vrot.lane.b32.xlu0 %v1228, 109
      %v1236 = vpop.permute.xlu0 %1235
      %1237 = vrot.lane.b32.xlu0 %v1229, 109
      %v1238 = vpop.permute.xlu0 %1237
      %v1239 = vsel %vm402, %v1234, %v1236
      %v1240 = vsel %vm402, %v1236, %v1238
      %v1245 = vadd.f32 %v1188, %v1234
      %v1246 = vadd.f32 %v1189, %v1239
      %v1247 = vadd.f32 %v1190, %v1240
      %v1248 = vadd.f32 %v1191, %v1238
      %1249 = vset.pattern.permute.xlu0 17
      %1250 = vperm.xlu0 %1249, %v618
      %v1251 = vpop.permute.xlu0 %1250
      %v1253 = vlaneseq
      %v1254 = vshrl.u32 %v1253, 7
      %v1255 = vsub.s32 1, %v1254
      %v1256 = vrot.slane %v1192, %v1255
      %v1257 = vlaneseq
      %v1258 = vshrl.u32 %v1257, 7
      %v1259 = vsub.s32 5, %v1258
      %v1260 = vrot.slane %v1192, %v1259
      %v1261 = vlaneseq
      %v1262 = vshrl.u32 %v1261, 7
      %v1263 = vsub.s32 1, %v1262
      %v1264 = vrot.slane %v1193, %v1263
      %v1268 = vlaneseq
      %v1269 = vshrl.u32 %v1268, 7
      %v1270 = vsub.s32 1, %v1269
      %v1271 = vrot.slane %v1256, %v1270
      %v1272 = vlaneseq
      %v1273 = vshrl.u32 %v1272, 7
      %v1274 = vsub.s32 1, %v1273
      %v1275 = vrot.slane %v1260, %v1274
      %v1276 = vlaneseq
      %v1277 = vshrl.u32 %v1276, 7
      %v1278 = vsub.s32 1, %v1277
      %v1279 = vrot.slane %v1264, %v1278
      %v1280 = vmul.f32 %v1251, %v1271
      %v1281 = vmul.f32 %v1251, %v1275
      %v1282 = vmul.f32 %v1251, %v1279
      %1286 = vrot.lane.b32.xlu0 %v1280, 109
      %v1287 = vpop.permute.xlu0 %1286
      %1288 = vrot.lane.b32.xlu0 %v1281, 109
      %v1289 = vpop.permute.xlu0 %1288
      %1290 = vrot.lane.b32.xlu0 %v1282, 109
      %v1291 = vpop.permute.xlu0 %1290
      %v1292 = vsel %vm402, %v1287, %v1289
      %v1293 = vsel %vm402, %v1289, %v1291
      %v1298 = vadd.f32 %v1245, %v1287
      %v1299 = vadd.f32 %v1246, %v1292
      %v1300 = vadd.f32 %v1247, %v1293
      %v1301 = vadd.f32 %v1248, %v1291
      %1302 = vset.pattern.permute.xlu0 18
      %1303 = vperm.xlu0 %1302, %v618
      %v1304 = vpop.permute.xlu0 %1303
      %v1306 = vlaneseq
      %v1307 = vshrl.u32 %v1306, 7
      %v1308 = vsub.s32 2, %v1307
      %v1309 = vrot.slane %v1192, %v1308
      %v1310 = vlaneseq
      %v1311 = vshrl.u32 %v1310, 7
      %v1312 = vsub.s32 6, %v1311
      %v1313 = vrot.slane %v1192, %v1312
      %v1314 = vlaneseq
      %v1315 = vshrl.u32 %v1314, 7
      %v1316 = vsub.s32 2, %v1315
      %v1317 = vrot.slane %v1193, %v1316
      %v1321 = vlaneseq
      %v1322 = vshrl.u32 %v1321, 7
      %v1323 = vsub.s32 2, %v1322
      %v1324 = vrot.slane %v1309, %v1323
      %v1325 = vlaneseq
      %v1326 = vshrl.u32 %v1325, 7
      %v1327 = vsub.s32 2, %v1326
      %v1328 = vrot.slane %v1313, %v1327
      %v1329 = vlaneseq
      %v1330 = vshrl.u32 %v1329, 7
      %v1331 = vsub.s32 2, %v1330
      %v1332 = vrot.slane %v1317, %v1331
      %v1333 = vmul.f32 %v1304, %v1324
      %v1334 = vmul.f32 %v1304, %v1328
      %v1335 = vmul.f32 %v1304, %v1332
      %1339 = vrot.lane.b32.xlu0 %v1333, 109
      %v1340 = vpop.permute.xlu0 %1339
      %1341 = vrot.lane.b32.xlu0 %v1334, 109
      %v1342 = vpop.permute.xlu0 %1341
      %1343 = vrot.lane.b32.xlu0 %v1335, 109
      %v1344 = vpop.permute.xlu0 %1343
      %v1345 = vsel %vm402, %v1340, %v1342
      %v1346 = vsel %vm402, %v1342, %v1344
      %v1351 = vadd.f32 %v1298, %v1340
      %v1352 = vadd.f32 %v1299, %v1345
      %v1353 = vadd.f32 %v1300, %v1346
      %v1354 = vadd.f32 %v1301, %v1344
      %1355 = vset.pattern.permute.xlu0 19
      %1356 = vperm.xlu0 %1355, %v618
      %v1357 = vpop.permute.xlu0 %1356
      %v1359 = vlaneseq
      %v1360 = vshrl.u32 %v1359, 7
      %v1361 = vsub.s32 3, %v1360
      %v1362 = vrot.slane %v1192, %v1361
      %v1363 = vlaneseq
      %v1364 = vshrl.u32 %v1363, 7
      %v1365 = vsub.s32 7, %v1364
      %v1366 = vrot.slane %v1192, %v1365
      %v1367 = vlaneseq
      %v1368 = vshrl.u32 %v1367, 7
      %v1369 = vsub.s32 3, %v1368
      %v1370 = vrot.slane %v1193, %v1369
      %v1374 = vlaneseq
      %v1375 = vshrl.u32 %v1374, 7
      %v1376 = vsub.s32 3, %v1375
      %v1377 = vrot.slane %v1362, %v1376
      %v1378 = vlaneseq
      %v1379 = vshrl.u32 %v1378, 7
      %v1380 = vsub.s32 3, %v1379
      %v1381 = vrot.slane %v1366, %v1380
      %v1382 = vlaneseq
      %v1383 = vshrl.u32 %v1382, 7
      %v1384 = vsub.s32 3, %v1383
      %v1385 = vrot.slane %v1370, %v1384
      %v1386 = vmul.f32 %v1357, %v1377
      %v1387 = vmul.f32 %v1357, %v1381
      %v1388 = vmul.f32 %v1357, %v1385
      %1392 = vrot.lane.b32.xlu0 %v1386, 109
      %v1393 = vpop.permute.xlu0 %1392
      %1394 = vrot.lane.b32.xlu0 %v1387, 109
      %v1395 = vpop.permute.xlu0 %1394
      %1396 = vrot.lane.b32.xlu0 %v1388, 109
      %v1397 = vpop.permute.xlu0 %1396
      %v1398 = vsel %vm402, %v1393, %v1395
      %v1399 = vsel %vm402, %v1395, %v1397
      %v1404 = vadd.f32 %v1351, %v1393
      %v1405 = vadd.f32 %v1352, %v1398
      %v1406 = vadd.f32 %v1353, %v1399
      %v1407 = vadd.f32 %v1354, %v1397
      %v1408 = vld [vmem:[#allocation2 + $0x4] sm:$0xff]
      %v1409 = vld [vmem:[#allocation2 + $0xc] sm:$0xff]
      %1410 = vset.pattern.permute.xlu0 20
      %1411 = vperm.xlu0 %1410, %v618
      %v1412 = vpop.permute.xlu0 %1411
      %v1416 = vlaneseq
      %v1417 = vshrl.u32 %v1416, 7
      %v1418 = vsub.s32 0, %v1417
      %v1419 = vrot.slane %v1408, %v1418
      %v1420 = vlaneseq
      %v1421 = vshrl.u32 %v1420, 7
      %v1422 = vsub.s32 4, %v1421
      %v1423 = vrot.slane %v1408, %v1422
      %v1424 = vlaneseq
      %v1425 = vshrl.u32 %v1424, 7
      %v1426 = vsub.s32 0, %v1425
      %v1427 = vrot.slane %v1409, %v1426
      %v1428 = vlaneseq
      %v1429 = vshrl.u32 %v1428, 7
      %v1430 = vsub.s32 4, %v1429
      %v1431 = vrot.slane %v1409, %v1430
      %v1436 = vlaneseq
      %v1437 = vshrl.u32 %v1436, 7
      %v1438 = vsub.s32 0, %v1437
      %v1439 = vrot.slane %v1419, %v1438
      %v1440 = vlaneseq
      %v1441 = vshrl.u32 %v1440, 7
      %v1442 = vsub.s32 0, %v1441
      %v1443 = vrot.slane %v1423, %v1442
      %v1444 = vlaneseq
      %v1445 = vshrl.u32 %v1444, 7
      %v1446 = vsub.s32 0, %v1445
      %v1447 = vrot.slane %v1427, %v1446
      %v1448 = vlaneseq
      %v1449 = vshrl.u32 %v1448, 7
      %v1450 = vsub.s32 0, %v1449
      %v1451 = vrot.slane %v1431, %v1450
      %v1452 = vmul.f32 %v1412, %v1439
      %v1453 = vmul.f32 %v1412, %v1443
      %v1454 = vmul.f32 %v1412, %v1447
      %v1455 = vmul.f32 %v1412, %v1451
      %1460 = vrot.lane.b32.xlu0 %v1452, 108
      %v1461 = vpop.permute.xlu0 %1460
      %1462 = vrot.lane.b32.xlu0 %v1453, 108
      %v1463 = vpop.permute.xlu0 %1462
      %1464 = vrot.lane.b32.xlu0 %v1454, 108
      %v1465 = vpop.permute.xlu0 %1464
      %1466 = vrot.lane.b32.xlu0 %v1455, 108
      %v1467 = vpop.permute.xlu0 %1466
      %v1468 = vsel %vm456, %v1461, %v1463
      %v1469 = vsel %vm456, %v1463, %v1465
      %v1470 = vsel %vm456, %v1465, %v1467
      %v1475 = vadd.f32 %v1404, %v1461
      %v1476 = vadd.f32 %v1405, %v1468
      %v1477 = vadd.f32 %v1406, %v1469
      %v1478 = vadd.f32 %v1407, %v1470
      %1479 = vset.pattern.permute.xlu0 21
      %1480 = vperm.xlu0 %1479, %v618
      %v1481 = vpop.permute.xlu0 %1480
      %v1483 = vlaneseq
      %v1484 = vshrl.u32 %v1483, 7
      %v1485 = vsub.s32 1, %v1484
      %v1486 = vrot.slane %v1408, %v1485
      %v1487 = vlaneseq
      %v1488 = vshrl.u32 %v1487, 7
      %v1489 = vsub.s32 5, %v1488
      %v1490 = vrot.slane %v1408, %v1489
      %v1491 = vlaneseq
      %v1492 = vshrl.u32 %v1491, 7
      %v1493 = vsub.s32 1, %v1492
      %v1494 = vrot.slane %v1409, %v1493
      %v1495 = vlaneseq
      %v1496 = vshrl.u32 %v1495, 7
      %v1497 = vsub.s32 5, %v1496
      %v1498 = vrot.slane %v1409, %v1497
      %v1503 = vlaneseq
      %v1504 = vshrl.u32 %v1503, 7
      %v1505 = vsub.s32 1, %v1504
      %v1506 = vrot.slane %v1486, %v1505
      %v1507 = vlaneseq
      %v1508 = vshrl.u32 %v1507, 7
      %v1509 = vsub.s32 1, %v1508
      %v1510 = vrot.slane %v1490, %v1509
      %v1511 = vlaneseq
      %v1512 = vshrl.u32 %v1511, 7
      %v1513 = vsub.s32 1, %v1512
      %v1514 = vrot.slane %v1494, %v1513
      %v1515 = vlaneseq
      %v1516 = vshrl.u32 %v1515, 7
      %v1517 = vsub.s32 1, %v1516
      %v1518 = vrot.slane %v1498, %v1517
      %v1519 = vmul.f32 %v1481, %v1506
      %v1520 = vmul.f32 %v1481, %v1510
      %v1521 = vmul.f32 %v1481, %v1514
      %v1522 = vmul.f32 %v1481, %v1518
      %1527 = vrot.lane.b32.xlu0 %v1519, 108
      %v1528 = vpop.permute.xlu0 %1527
      %1529 = vrot.lane.b32.xlu0 %v1520, 108
      %v1530 = vpop.permute.xlu0 %1529
      %1531 = vrot.lane.b32.xlu0 %v1521, 108
      %v1532 = vpop.permute.xlu0 %1531
      %1533 = vrot.lane.b32.xlu0 %v1522, 108
      %v1534 = vpop.permute.xlu0 %1533
      %v1535 = vsel %vm456, %v1528, %v1530
      %v1536 = vsel %vm456, %v1530, %v1532
      %v1537 = vsel %vm456, %v1532, %v1534
      %v1542 = vadd.f32 %v1475, %v1528
      %v1543 = vadd.f32 %v1476, %v1535
      %v1544 = vadd.f32 %v1477, %v1536
      %v1545 = vadd.f32 %v1478, %v1537
      %1546 = vset.pattern.permute.xlu0 22
      %1547 = vperm.xlu0 %1546, %v618
      %v1548 = vpop.permute.xlu0 %1547
      %v1550 = vlaneseq
      %v1551 = vshrl.u32 %v1550, 7
      %v1552 = vsub.s32 2, %v1551
      %v1553 = vrot.slane %v1408, %v1552
      %v1554 = vlaneseq
      %v1555 = vshrl.u32 %v1554, 7
      %v1556 = vsub.s32 6, %v1555
      %v1557 = vrot.slane %v1408, %v1556
      %v1558 = vlaneseq
      %v1559 = vshrl.u32 %v1558, 7
      %v1560 = vsub.s32 2, %v1559
      %v1561 = vrot.slane %v1409, %v1560
      %v1562 = vlaneseq
      %v1563 = vshrl.u32 %v1562, 7
      %v1564 = vsub.s32 6, %v1563
      %v1565 = vrot.slane %v1409, %v1564
      %v1570 = vlaneseq
      %v1571 = vshrl.u32 %v1570, 7
      %v1572 = vsub.s32 2, %v1571
      %v1573 = vrot.slane %v1553, %v1572
      %v1574 = vlaneseq
      %v1575 = vshrl.u32 %v1574, 7
      %v1576 = vsub.s32 2, %v1575
      %v1577 = vrot.slane %v1557, %v1576
      %v1578 = vlaneseq
      %v1579 = vshrl.u32 %v1578, 7
      %v1580 = vsub.s32 2, %v1579
      %v1581 = vrot.slane %v1561, %v1580
      %v1582 = vlaneseq
      %v1583 = vshrl.u32 %v1582, 7
      %v1584 = vsub.s32 2, %v1583
      %v1585 = vrot.slane %v1565, %v1584
      %v1586 = vmul.f32 %v1548, %v1573
      %v1587 = vmul.f32 %v1548, %v1577
      %v1588 = vmul.f32 %v1548, %v1581
      %v1589 = vmul.f32 %v1548, %v1585
      %1594 = vrot.lane.b32.xlu0 %v1586, 108
      %v1595 = vpop.permute.xlu0 %1594
      %1596 = vrot.lane.b32.xlu0 %v1587, 108
      %v1597 = vpop.permute.xlu0 %1596
      %1598 = vrot.lane.b32.xlu0 %v1588, 108
      %v1599 = vpop.permute.xlu0 %1598
      %1600 = vrot.lane.b32.xlu0 %v1589, 108
      %v1601 = vpop.permute.xlu0 %1600
      %v1602 = vsel %vm456, %v1595, %v1597
      %v1603 = vsel %vm456, %v1597, %v1599
      %v1604 = vsel %vm456, %v1599, %v1601
      %v1609 = vadd.f32 %v1542, %v1595
      %v1610 = vadd.f32 %v1543, %v1602
      %v1611 = vadd.f32 %v1544, %v1603
      %v1612 = vadd.f32 %v1545, %v1604
      %1613 = vset.pattern.permute.xlu0 23
      %1614 = vperm.xlu0 %1613, %v618
      %v1615 = vpop.permute.xlu0 %1614
      %v1617 = vlaneseq
      %v1618 = vshrl.u32 %v1617, 7
      %v1619 = vsub.s32 3, %v1618
      %v1620 = vrot.slane %v1408, %v1619
      %v1621 = vlaneseq
      %v1622 = vshrl.u32 %v1621, 7
      %v1623 = vsub.s32 7, %v1622
      %v1624 = vrot.slane %v1408, %v1623
      %v1625 = vlaneseq
      %v1626 = vshrl.u32 %v1625, 7
      %v1627 = vsub.s32 3, %v1626
      %v1628 = vrot.slane %v1409, %v1627
      %v1629 = vlaneseq
      %v1630 = vshrl.u32 %v1629, 7
      %v1631 = vsub.s32 7, %v1630
      %v1632 = vrot.slane %v1409, %v1631
      %v1637 = vlaneseq
      %v1638 = vshrl.u32 %v1637, 7
      %v1639 = vsub.s32 3, %v1638
      %v1640 = vrot.slane %v1620, %v1639
      %v1641 = vlaneseq
      %v1642 = vshrl.u32 %v1641, 7
      %v1643 = vsub.s32 3, %v1642
      %v1644 = vrot.slane %v1624, %v1643
      %v1645 = vlaneseq
      %v1646 = vshrl.u32 %v1645, 7
      %v1647 = vsub.s32 3, %v1646
      %v1648 = vrot.slane %v1628, %v1647
      %v1649 = vlaneseq
      %v1650 = vshrl.u32 %v1649, 7
      %v1651 = vsub.s32 3, %v1650
      %v1652 = vrot.slane %v1632, %v1651
      %v1653 = vmul.f32 %v1615, %v1640
      %v1654 = vmul.f32 %v1615, %v1644
      %v1655 = vmul.f32 %v1615, %v1648
      %v1656 = vmul.f32 %v1615, %v1652
      %1661 = vrot.lane.b32.xlu0 %v1653, 108
      %v1662 = vpop.permute.xlu0 %1661
      %1663 = vrot.lane.b32.xlu0 %v1654, 108
      %v1664 = vpop.permute.xlu0 %1663
      %1665 = vrot.lane.b32.xlu0 %v1655, 108
      %v1666 = vpop.permute.xlu0 %1665
      %1667 = vrot.lane.b32.xlu0 %v1656, 108
      %v1668 = vpop.permute.xlu0 %1667
      %v1669 = vsel %vm456, %v1662, %v1664
      %v1670 = vsel %vm456, %v1664, %v1666
      %v1671 = vsel %vm456, %v1666, %v1668
      %v1676 = vadd.f32 %v1609, %v1662
      %v1677 = vadd.f32 %v1610, %v1669
      %v1678 = vadd.f32 %v1611, %v1670
      %v1679 = vadd.f32 %v1612, %v1671
      %1680 = vset.pattern.permute.xlu0 24
      %1681 = vperm.xlu0 %1680, %v618
      %v1682 = vpop.permute.xlu0 %1681
      %v1684 = vmul.f32 %v1682, %v1439
      %v1685 = vmul.f32 %v1682, %v1443
      %v1686 = vmul.f32 %v1682, %v1447
      %v1687 = vmul.f32 %v1682, %v1451
      %1692 = vrot.lane.b32.xlu0 %v1684, 92
      %v1693 = vpop.permute.xlu0 %1692
      %1694 = vrot.lane.b32.xlu0 %v1685, 92
      %v1695 = vpop.permute.xlu0 %1694
      %1696 = vrot.lane.b32.xlu0 %v1686, 92
      %v1697 = vpop.permute.xlu0 %1696
      %1698 = vrot.lane.b32.xlu0 %v1687, 92
      %v1699 = vpop.permute.xlu0 %1698
      %v1700 = vsel %vm488, %v1693, %v1695
      %v1701 = vsel %vm488, %v1695, %v1697
      %v1702 = vsel %vm488, %v1697, %v1699
      %v1707 = vadd.f32 %v1676, %v1693
      %v1708 = vadd.f32 %v1677, %v1700
      %v1709 = vadd.f32 %v1678, %v1701
      %v1710 = vadd.f32 %v1679, %v1702
      %1711 = vset.pattern.permute.xlu0 25
      %1712 = vperm.xlu0 %1711, %v618
      %v1713 = vpop.permute.xlu0 %1712
      %v1715 = vmul.f32 %v1713, %v1506
      %v1716 = vmul.f32 %v1713, %v1510
      %v1717 = vmul.f32 %v1713, %v1514
      %v1718 = vmul.f32 %v1713, %v1518
      %1723 = vrot.lane.b32.xlu0 %v1715, 92
      %v1724 = vpop.permute.xlu0 %1723
      %1725 = vrot.lane.b32.xlu0 %v1716, 92
      %v1726 = vpop.permute.xlu0 %1725
      %1727 = vrot.lane.b32.xlu0 %v1717, 92
      %v1728 = vpop.permute.xlu0 %1727
      %1729 = vrot.lane.b32.xlu0 %v1718, 92
      %v1730 = vpop.permute.xlu0 %1729
      %v1731 = vsel %vm488, %v1724, %v1726
      %v1732 = vsel %vm488, %v1726, %v1728
      %v1733 = vsel %vm488, %v1728, %v1730
      %v1738 = vadd.f32 %v1707, %v1724
      %v1739 = vadd.f32 %v1708, %v1731
      %v1740 = vadd.f32 %v1709, %v1732
      %v1741 = vadd.f32 %v1710, %v1733
      %1742 = vset.pattern.permute.xlu0 26
      %1743 = vperm.xlu0 %1742, %v618
      %v1744 = vpop.permute.xlu0 %1743
      %v1746 = vmul.f32 %v1744, %v1573
      %v1747 = vmul.f32 %v1744, %v1577
      %v1748 = vmul.f32 %v1744, %v1581
      %v1749 = vmul.f32 %v1744, %v1585
      %1754 = vrot.lane.b32.xlu0 %v1746, 92
      %v1755 = vpop.permute.xlu0 %1754
      %1756 = vrot.lane.b32.xlu0 %v1747, 92
      %v1757 = vpop.permute.xlu0 %1756
      %1758 = vrot.lane.b32.xlu0 %v1748, 92
      %v1759 = vpop.permute.xlu0 %1758
      %1760 = vrot.lane.b32.xlu0 %v1749, 92
      %v1761 = vpop.permute.xlu0 %1760
      %v1762 = vsel %vm488, %v1755, %v1757
      %v1763 = vsel %vm488, %v1757, %v1759
      %v1764 = vsel %vm488, %v1759, %v1761
      %v1769 = vadd.f32 %v1738, %v1755
      %v1770 = vadd.f32 %v1739, %v1762
      %v1771 = vadd.f32 %v1740, %v1763
      %v1772 = vadd.f32 %v1741, %v1764
      %1773 = vset.pattern.permute.xlu0 27
      %1774 = vperm.xlu0 %1773, %v618
      %v1775 = vpop.permute.xlu0 %1774
      %v1777 = vmul.f32 %v1775, %v1640
      %v1778 = vmul.f32 %v1775, %v1644
      %v1779 = vmul.f32 %v1775, %v1648
      %v1780 = vmul.f32 %v1775, %v1652
      %1785 = vrot.lane.b32.xlu0 %v1777, 92
      %v1786 = vpop.permute.xlu0 %1785
      %1787 = vrot.lane.b32.xlu0 %v1778, 92
      %v1788 = vpop.permute.xlu0 %1787
      %1789 = vrot.lane.b32.xlu0 %v1779, 92
      %v1790 = vpop.permute.xlu0 %1789
      %1791 = vrot.lane.b32.xlu0 %v1780, 92
      %v1792 = vpop.permute.xlu0 %1791
      %v1793 = vsel %vm488, %v1786, %v1788
      %v1794 = vsel %vm488, %v1788, %v1790
      %v1795 = vsel %vm488, %v1790, %v1792
      %v1800 = vadd.f32 %v1769, %v1786
      %v1801 = vadd.f32 %v1770, %v1793
      %v1802 = vadd.f32 %v1771, %v1794
      %v1803 = vadd.f32 %v1772, %v1795
      %1804 = vset.pattern.permute.xlu0 28
      %1805 = vperm.xlu0 %1804, %v618
      %v1806 = vpop.permute.xlu0 %1805
      %v1808 = vmul.f32 %v1806, %v1439
      %v1809 = vmul.f32 %v1806, %v1443
      %v1810 = vmul.f32 %v1806, %v1447
      %v1811 = vmul.f32 %v1806, %v1451
      %1816 = vrot.lane.b32.xlu0 %v1808, 91
      %v1817 = vpop.permute.xlu0 %1816
      %1818 = vrot.lane.b32.xlu0 %v1809, 91
      %v1819 = vpop.permute.xlu0 %1818
      %1820 = vrot.lane.b32.xlu0 %v1810, 91
      %v1821 = vpop.permute.xlu0 %1820
      %1822 = vrot.lane.b32.xlu0 %v1811, 91
      %v1823 = vpop.permute.xlu0 %1822
      %v1824 = vsel %vm520, %v1817, %v1819
      %v1825 = vsel %vm520, %v1819, %v1821
      %v1826 = vsel %vm520, %v1821, %v1823
      %v1831 = vadd.f32 %v1800, %v1817
      %v1832 = vadd.f32 %v1801, %v1824
      %v1833 = vadd.f32 %v1802, %v1825
      %v1834 = vadd.f32 %v1803, %v1826
      %1835 = vset.pattern.permute.xlu0 29
      %1836 = vperm.xlu0 %1835, %v618
      %v1837 = vpop.permute.xlu0 %1836
      %v1839 = vmul.f32 %v1837, %v1506
      %v1840 = vmul.f32 %v1837, %v1510
      %v1841 = vmul.f32 %v1837, %v1514
      %v1842 = vmul.f32 %v1837, %v1518
      %1847 = vrot.lane.b32.xlu0 %v1839, 91
      %v1848 = vpop.permute.xlu0 %1847
      %1849 = vrot.lane.b32.xlu0 %v1840, 91
      %v1850 = vpop.permute.xlu0 %1849
      %1851 = vrot.lane.b32.xlu0 %v1841, 91
      %v1852 = vpop.permute.xlu0 %1851
      %1853 = vrot.lane.b32.xlu0 %v1842, 91
      %v1854 = vpop.permute.xlu0 %1853
      %v1855 = vsel %vm520, %v1848, %v1850
      %v1856 = vsel %vm520, %v1850, %v1852
      %v1857 = vsel %vm520, %v1852, %v1854
      %v1862 = vadd.f32 %v1831, %v1848
      %v1863 = vadd.f32 %v1832, %v1855
      %v1864 = vadd.f32 %v1833, %v1856
      %v1865 = vadd.f32 %v1834, %v1857
      %1866 = vset.pattern.permute.xlu0 30
      %1867 = vperm.xlu0 %1866, %v618
      %v1868 = vpop.permute.xlu0 %1867
      %v1870 = vmul.f32 %v1868, %v1573
      %v1871 = vmul.f32 %v1868, %v1577
      %v1872 = vmul.f32 %v1868, %v1581
      %v1873 = vmul.f32 %v1868, %v1585
      %1878 = vrot.lane.b32.xlu0 %v1870, 91
      %v1879 = vpop.permute.xlu0 %1878
      %1880 = vrot.lane.b32.xlu0 %v1871, 91
      %v1881 = vpop.permute.xlu0 %1880
      %1882 = vrot.lane.b32.xlu0 %v1872, 91
      %v1883 = vpop.permute.xlu0 %1882
      %1884 = vrot.lane.b32.xlu0 %v1873, 91
      %v1885 = vpop.permute.xlu0 %1884
      %v1886 = vsel %vm520, %v1879, %v1881
      %v1887 = vsel %vm520, %v1881, %v1883
      %v1888 = vsel %vm520, %v1883, %v1885
      %v1893 = vadd.f32 %v1862, %v1879
      %v1894 = vadd.f32 %v1863, %v1886
      %v1895 = vadd.f32 %v1864, %v1887
      %v1896 = vadd.f32 %v1865, %v1888
      %1897 = vset.pattern.permute.xlu0 31
      %1898 = vperm.xlu0 %1897, %v618
      %v1899 = vpop.permute.xlu0 %1898
      %v1901 = vmul.f32 %v1899, %v1640
      %v1902 = vmul.f32 %v1899, %v1644
      %v1903 = vmul.f32 %v1899, %v1648
      %v1904 = vmul.f32 %v1899, %v1652
      %1909 = vrot.lane.b32.xlu0 %v1901, 91
      %v1910 = vpop.permute.xlu0 %1909
      %1911 = vrot.lane.b32.xlu0 %v1902, 91
      %v1912 = vpop.permute.xlu0 %1911
      %1913 = vrot.lane.b32.xlu0 %v1903, 91
      %v1914 = vpop.permute.xlu0 %1913
      %1915 = vrot.lane.b32.xlu0 %v1904, 91
      %v1916 = vpop.permute.xlu0 %1915
      %v1917 = vsel %vm520, %v1910, %v1912
      %v1918 = vsel %vm520, %v1912, %v1914
      %v1919 = vsel %vm520, %v1914, %v1916
      %v1924 = vadd.f32 %v1893, %v1910
      %v1925 = vadd.f32 %v1894, %v1917
      %v1926 = vadd.f32 %v1895, %v1918
      %v1927 = vadd.f32 %v1896, %v1919
      %1928 = vset.pattern.permute.xlu0 32
      %1929 = vperm.xlu0 %1928, %v618
      %v1930 = vpop.permute.xlu0 %1929
      %v1932 = vmul.f32 %v1930, %v1439
      %v1933 = vmul.f32 %v1930, %v1443
      %v1934 = vmul.f32 %v1930, %v1447
      %v1935 = vmul.f32 %v1930, %v1451
      %1940 = vrot.lane.b32.xlu0 %v1932, 90
      %v1941 = vpop.permute.xlu0 %1940
      %1942 = vrot.lane.b32.xlu0 %v1933, 90
      %v1943 = vpop.permute.xlu0 %1942
      %1944 = vrot.lane.b32.xlu0 %v1934, 90
      %v1945 = vpop.permute.xlu0 %1944
      %1946 = vrot.lane.b32.xlu0 %v1935, 90
      %v1947 = vpop.permute.xlu0 %1946
      %v1948 = vsel %vm552, %v1941, %v1943
      %v1949 = vsel %vm552, %v1943, %v1945
      %v1950 = vsel %vm552, %v1945, %v1947
      %v1955 = vadd.f32 %v1924, %v1941
      %v1956 = vadd.f32 %v1925, %v1948
      %v1957 = vadd.f32 %v1926, %v1949
      %v1958 = vadd.f32 %v1927, %v1950
      %1959 = vset.pattern.permute.xlu0 33
      %1960 = vperm.xlu0 %1959, %v618
      %v1961 = vpop.permute.xlu0 %1960
      %v1963 = vmul.f32 %v1961, %v1506
      %v1964 = vmul.f32 %v1961, %v1510
      %v1965 = vmul.f32 %v1961, %v1514
      %v1966 = vmul.f32 %v1961, %v1518
      %1971 = vrot.lane.b32.xlu0 %v1963, 90
      %v1972 = vpop.permute.xlu0 %1971
      %1973 = vrot.lane.b32.xlu0 %v1964, 90
      %v1974 = vpop.permute.xlu0 %1973
      %1975 = vrot.lane.b32.xlu0 %v1965, 90
      %v1976 = vpop.permute.xlu0 %1975
      %1977 = vrot.lane.b32.xlu0 %v1966, 90
      %v1978 = vpop.permute.xlu0 %1977
      %v1979 = vsel %vm552, %v1972, %v1974
      %v1980 = vsel %vm552, %v1974, %v1976
      %v1981 = vsel %vm552, %v1976, %v1978
      %v1986 = vadd.f32 %v1955, %v1972
      %v1987 = vadd.f32 %v1956, %v1979
      %v1988 = vadd.f32 %v1957, %v1980
      %v1989 = vadd.f32 %v1958, %v1981
      %1990 = vset.pattern.permute.xlu0 34
      %1991 = vperm.xlu0 %1990, %v618
      %v1992 = vpop.permute.xlu0 %1991
      %v1994 = vmul.f32 %v1992, %v1573
      %v1995 = vmul.f32 %v1992, %v1577
      %v1996 = vmul.f32 %v1992, %v1581
      %v1997 = vmul.f32 %v1992, %v1585
      %2002 = vrot.lane.b32.xlu0 %v1994, 90
      %v2003 = vpop.permute.xlu0 %2002
      %2004 = vrot.lane.b32.xlu0 %v1995, 90
      %v2005 = vpop.permute.xlu0 %2004
      %2006 = vrot.lane.b32.xlu0 %v1996, 90
      %v2007 = vpop.permute.xlu0 %2006
      %2008 = vrot.lane.b32.xlu0 %v1997, 90
      %v2009 = vpop.permute.xlu0 %2008
      %v2010 = vsel %vm552, %v2003, %v2005
      %v2011 = vsel %vm552, %v2005, %v2007
      %v2012 = vsel %vm552, %v2007, %v2009
      %v2017 = vadd.f32 %v1986, %v2003
      %v2018 = vadd.f32 %v1987, %v2010
      %v2019 = vadd.f32 %v1988, %v2011
      %v2020 = vadd.f32 %v1989, %v2012
      %2021 = vset.pattern.permute.xlu0 35
      %2022 = vperm.xlu0 %2021, %v618
      %v2023 = vpop.permute.xlu0 %2022
      %v2025 = vmul.f32 %v2023, %v1640
      %v2026 = vmul.f32 %v2023, %v1644
      %v2027 = vmul.f32 %v2023, %v1648
      %v2028 = vmul.f32 %v2023, %v1652
      %2033 = vrot.lane.b32.xlu0 %v2025, 90
      %v2034 = vpop.permute.xlu0 %2033
      %2035 = vrot.lane.b32.xlu0 %v2026, 90
      %v2036 = vpop.permute.xlu0 %2035
      %2037 = vrot.lane.b32.xlu0 %v2027, 90
      %v2038 = vpop.permute.xlu0 %2037
      %2039 = vrot.lane.b32.xlu0 %v2028, 90
      %v2040 = vpop.permute.xlu0 %2039
      %v2041 = vsel %vm552, %v2034, %v2036
      %v2042 = vsel %vm552, %v2036, %v2038
      %v2043 = vsel %vm552, %v2038, %v2040
      %v2048 = vadd.f32 %v2017, %v2034
      %v2049 = vadd.f32 %v2018, %v2041
      %v2050 = vadd.f32 %v2019, %v2042
      %v2051 = vadd.f32 %v2020, %v2043
      %v2052 = vmax.f32 %v2048, 0.0
      %v2053 = vmax.f32 %v2049, 0.0
      %v2054 = vmax.f32 %v2050, 0.0
      %v2055 = vmax.f32 %v2051, 0.0
      %v2056 = vmul.f32 %v2052, %v582
      %v2057 = vmul.f32 %v2053, %v587
      %v2058 = vmul.f32 %v2054, %v588
      %v2059 = vmul.f32 %v2055, %v586
      %v2064 = vcombine.low %v2056, %v2057
      %v2065 = vcombine.low %v2058, %v2059
      %2066 = vrot.lane.b32.xlu0 %v2064, 19
      %v2067 = vpop.permute.xlu0 %2066
      %2068 = vrot.lane.b32.xlu0 %v2065, 19
      %v2069 = vpop.permute.xlu0 %2068
      %v2070 = vrot.slane %v2067, 4
      %v2071 = vrot.slane %v2069, 4
      %v2072 = vsel %vm609, %v2070, %v2071
      %v2073 = vsel %vm611, %v2067, %v2072
      %v2074 = vsel %vm611, %v2069, %v2071
      %2077 = vst [vmem:[#allocation2 + $0x4] sm:$0xff] %v2073
      %2078 = vst [vmem:[#allocation2 + $0xc] sm:$0xf] %v2074
      %v2079 = vld [vmem:[%s3] sm:$0x7]
      %2081 = vset.pattern.permute.xlu0 36
      %2082 = vperm.xlu0 %2081, %v2079
      %v2083 = vpop.permute.xlu0 %2082
      %v2085 = vld [vmem:[#allocation2] sm:$0xff]
      %v2086 = vld [vmem:[#allocation2 + $0x8] sm:$0xff]
      %2087 = vset.pattern.permute.xlu0 0
      %2088 = vperm.xlu0 %2087, %v2079
      %v2089 = vpop.permute.xlu0 %2088
      %v2093 = vlaneseq
      %v2094 = vshrl.u32 %v2093, 7
      %v2095 = vsub.s32 0, %v2094
      %v2096 = vrot.slane %v2085, %v2095
      %v2097 = vlaneseq
      %v2098 = vshrl.u32 %v2097, 7
      %v2099 = vsub.s32 4, %v2098
      %v2100 = vrot.slane %v2085, %v2099
      %v2101 = vlaneseq
      %v2102 = vshrl.u32 %v2101, 7
      %v2103 = vsub.s32 0, %v2102
      %v2104 = vrot.slane %v2086, %v2103
      %v2105 = vlaneseq
      %v2106 = vshrl.u32 %v2105, 7
      %v2107 = vsub.s32 4, %v2106
      %v2108 = vrot.slane %v2086, %v2107
      %v2113 = vlaneseq
      %v2114 = vshrl.u32 %v2113, 7
      %v2115 = vsub.s32 0, %v2114
      %v2116 = vrot.slane %v2096, %v2115
      %v2117 = vlaneseq
      %v2118 = vshrl.u32 %v2117, 7
      %v2119 = vsub.s32 0, %v2118
      %v2120 = vrot.slane %v2100, %v2119
      %v2121 = vlaneseq
      %v2122 = vshrl.u32 %v2121, 7
      %v2123 = vsub.s32 0, %v2122
      %v2124 = vrot.slane %v2104, %v2123
      %v2125 = vlaneseq
      %v2126 = vshrl.u32 %v2125, 7
      %v2127 = vsub.s32 0, %v2126
      %v2128 = vrot.slane %v2108, %v2127
      %v2129 = vmul.f32 %v2089, %v2116
      %v2130 = vmul.f32 %v2089, %v2120
      %v2131 = vmul.f32 %v2089, %v2124
      %v2132 = vmul.f32 %v2089, %v2128
      %v2133 = vadd.f32 %v2083, %v2129
      %v2134 = vadd.f32 %v2083, %v2130
      %v2135 = vadd.f32 %v2083, %v2131
      %v2136 = vadd.f32 %v2083, %v2132
      %2137 = vset.pattern.permute.xlu0 1
      %2138 = vperm.xlu0 %2137, %v2079
      %v2139 = vpop.permute.xlu0 %2138
      %v2141 = vlaneseq
      %v2142 = vshrl.u32 %v2141, 7
      %v2143 = vsub.s32 1, %v2142
      %v2144 = vrot.slane %v2085, %v2143
      %v2145 = vlaneseq
      %v2146 = vshrl.u32 %v2145, 7
      %v2147 = vsub.s32 5, %v2146
      %v2148 = vrot.slane %v2085, %v2147
      %v2149 = vlaneseq
      %v2150 = vshrl.u32 %v2149, 7
      %v2151 = vsub.s32 1, %v2150
      %v2152 = vrot.slane %v2086, %v2151
      %v2153 = vlaneseq
      %v2154 = vshrl.u32 %v2153, 7
      %v2155 = vsub.s32 5, %v2154
      %v2156 = vrot.slane %v2086, %v2155
      %v2161 = vlaneseq
      %v2162 = vshrl.u32 %v2161, 7
      %v2163 = vsub.s32 1, %v2162
      %v2164 = vrot.slane %v2144, %v2163
      %v2165 = vlaneseq
      %v2166 = vshrl.u32 %v2165, 7
      %v2167 = vsub.s32 1, %v2166
      %v2168 = vrot.slane %v2148, %v2167
      %v2169 = vlaneseq
      %v2170 = vshrl.u32 %v2169, 7
      %v2171 = vsub.s32 1, %v2170
      %v2172 = vrot.slane %v2152, %v2171
      %v2173 = vlaneseq
      %v2174 = vshrl.u32 %v2173, 7
      %v2175 = vsub.s32 1, %v2174
      %v2176 = vrot.slane %v2156, %v2175
      %v2177 = vmul.f32 %v2139, %v2164
      %v2178 = vmul.f32 %v2139, %v2168
      %v2179 = vmul.f32 %v2139, %v2172
      %v2180 = vmul.f32 %v2139, %v2176
      %v2181 = vadd.f32 %v2133, %v2177
      %v2182 = vadd.f32 %v2134, %v2178
      %v2183 = vadd.f32 %v2135, %v2179
      %v2184 = vadd.f32 %v2136, %v2180
      %2185 = vset.pattern.permute.xlu0 2
      %2186 = vperm.xlu0 %2185, %v2079
      %v2187 = vpop.permute.xlu0 %2186
      %v2189 = vlaneseq
      %v2190 = vshrl.u32 %v2189, 7
      %v2191 = vsub.s32 2, %v2190
      %v2192 = vrot.slane %v2085, %v2191
      %v2193 = vlaneseq
      %v2194 = vshrl.u32 %v2193, 7
      %v2195 = vsub.s32 6, %v2194
      %v2196 = vrot.slane %v2085, %v2195
      %v2197 = vlaneseq
      %v2198 = vshrl.u32 %v2197, 7
      %v2199 = vsub.s32 2, %v2198
      %v2200 = vrot.slane %v2086, %v2199
      %v2201 = vlaneseq
      %v2202 = vshrl.u32 %v2201, 7
      %v2203 = vsub.s32 6, %v2202
      %v2204 = vrot.slane %v2086, %v2203
      %v2209 = vlaneseq
      %v2210 = vshrl.u32 %v2209, 7
      %v2211 = vsub.s32 2, %v2210
      %v2212 = vrot.slane %v2192, %v2211
      %v2213 = vlaneseq
      %v2214 = vshrl.u32 %v2213, 7
      %v2215 = vsub.s32 2, %v2214
      %v2216 = vrot.slane %v2196, %v2215
      %v2217 = vlaneseq
      %v2218 = vshrl.u32 %v2217, 7
      %v2219 = vsub.s32 2, %v2218
      %v2220 = vrot.slane %v2200, %v2219
      %v2221 = vlaneseq
      %v2222 = vshrl.u32 %v2221, 7
      %v2223 = vsub.s32 2, %v2222
      %v2224 = vrot.slane %v2204, %v2223
      %v2225 = vmul.f32 %v2187, %v2212
      %v2226 = vmul.f32 %v2187, %v2216
      %v2227 = vmul.f32 %v2187, %v2220
      %v2228 = vmul.f32 %v2187, %v2224
      %v2229 = vadd.f32 %v2181, %v2225
      %v2230 = vadd.f32 %v2182, %v2226
      %v2231 = vadd.f32 %v2183, %v2227
      %v2232 = vadd.f32 %v2184, %v2228
      %2233 = vset.pattern.permute.xlu0 3
      %2234 = vperm.xlu0 %2233, %v2079
      %v2235 = vpop.permute.xlu0 %2234
      %v2237 = vlaneseq
      %v2238 = vshrl.u32 %v2237, 7
      %v2239 = vsub.s32 3, %v2238
      %v2240 = vrot.slane %v2085, %v2239
      %v2241 = vlaneseq
      %v2242 = vshrl.u32 %v2241, 7
      %v2243 = vsub.s32 7, %v2242
      %v2244 = vrot.slane %v2085, %v2243
      %v2245 = vlaneseq
      %v2246 = vshrl.u32 %v2245, 7
      %v2247 = vsub.s32 3, %v2246
      %v2248 = vrot.slane %v2086, %v2247
      %v2249 = vlaneseq
      %v2250 = vshrl.u32 %v2249, 7
      %v2251 = vsub.s32 7, %v2250
      %v2252 = vrot.slane %v2086, %v2251
      %v2257 = vlaneseq
      %v2258 = vshrl.u32 %v2257, 7
      %v2259 = vsub.s32 3, %v2258
      %v2260 = vrot.slane %v2240, %v2259
      %v2261 = vlaneseq
      %v2262 = vshrl.u32 %v2261, 7
      %v2263 = vsub.s32 3, %v2262
      %v2264 = vrot.slane %v2244, %v2263
      %v2265 = vlaneseq
      %v2266 = vshrl.u32 %v2265, 7
      %v2267 = vsub.s32 3, %v2266
      %v2268 = vrot.slane %v2248, %v2267
      %v2269 = vlaneseq
      %v2270 = vshrl.u32 %v2269, 7
      %v2271 = vsub.s32 3, %v2270
      %v2272 = vrot.slane %v2252, %v2271
      %v2273 = vmul.f32 %v2235, %v2260
      %v2274 = vmul.f32 %v2235, %v2264
      %v2275 = vmul.f32 %v2235, %v2268
      %v2276 = vmul.f32 %v2235, %v2272
      %v2277 = vadd.f32 %v2229, %v2273
      %v2278 = vadd.f32 %v2230, %v2274
      %v2279 = vadd.f32 %v2231, %v2275
      %v2280 = vadd.f32 %v2232, %v2276
      %2281 = vset.pattern.permute.xlu0 4
      %2282 = vperm.xlu0 %2281, %v2079
      %v2283 = vpop.permute.xlu0 %2282
      %v2285 = vmul.f32 %v2283, %v2116
      %v2286 = vmul.f32 %v2283, %v2120
      %v2287 = vmul.f32 %v2283, %v2124
      %v2288 = vmul.f32 %v2283, %v2128
      %2293 = vrot.lane.b32.xlu0 %v2285, 127
      %v2294 = vpop.permute.xlu0 %2293
      %2295 = vrot.lane.b32.xlu0 %v2286, 127
      %v2296 = vpop.permute.xlu0 %2295
      %2297 = vrot.lane.b32.xlu0 %v2287, 127
      %v2298 = vpop.permute.xlu0 %2297
      %2299 = vrot.lane.b32.xlu0 %v2288, 127
      %v2300 = vpop.permute.xlu0 %2299
      %v2301 = vsel %vm293, %v2294, %v2296
      %v2302 = vsel %vm293, %v2296, %v2298
      %v2303 = vsel %vm293, %v2298, %v2300
      %v2308 = vadd.f32 %v2277, %v2301
      %v2309 = vadd.f32 %v2278, %v2302
      %v2310 = vadd.f32 %v2279, %v2303
      %v2311 = vadd.f32 %v2280, %v2300
      %2312 = vset.pattern.permute.xlu0 5
      %2313 = vperm.xlu0 %2312, %v2079
      %v2314 = vpop.permute.xlu0 %2313
      %v2316 = vmul.f32 %v2314, %v2164
      %v2317 = vmul.f32 %v2314, %v2168
      %v2318 = vmul.f32 %v2314, %v2172
      %v2319 = vmul.f32 %v2314, %v2176
      %2324 = vrot.lane.b32.xlu0 %v2316, 127
      %v2325 = vpop.permute.xlu0 %2324
      %2326 = vrot.lane.b32.xlu0 %v2317, 127
      %v2327 = vpop.permute.xlu0 %2326
      %2328 = vrot.lane.b32.xlu0 %v2318, 127
      %v2329 = vpop.permute.xlu0 %2328
      %2330 = vrot.lane.b32.xlu0 %v2319, 127
      %v2331 = vpop.permute.xlu0 %2330
      %v2332 = vsel %vm293, %v2325, %v2327
      %v2333 = vsel %vm293, %v2327, %v2329
      %v2334 = vsel %vm293, %v2329, %v2331
      %v2339 = vadd.f32 %v2308, %v2332
      %v2340 = vadd.f32 %v2309, %v2333
      %v2341 = vadd.f32 %v2310, %v2334
      %v2342 = vadd.f32 %v2311, %v2331
      %2343 = vset.pattern.permute.xlu0 6
      %2344 = vperm.xlu0 %2343, %v2079
      %v2345 = vpop.permute.xlu0 %2344
      %v2347 = vmul.f32 %v2345, %v2212
      %v2348 = vmul.f32 %v2345, %v2216
      %v2349 = vmul.f32 %v2345, %v2220
      %v2350 = vmul.f32 %v2345, %v2224
      %2355 = vrot.lane.b32.xlu0 %v2347, 127
      %v2356 = vpop.permute.xlu0 %2355
      %2357 = vrot.lane.b32.xlu0 %v2348, 127
      %v2358 = vpop.permute.xlu0 %2357
      %2359 = vrot.lane.b32.xlu0 %v2349, 127
      %v2360 = vpop.permute.xlu0 %2359
      %2361 = vrot.lane.b32.xlu0 %v2350, 127
      %v2362 = vpop.permute.xlu0 %2361
      %v2363 = vsel %vm293, %v2356, %v2358
      %v2364 = vsel %vm293, %v2358, %v2360
      %v2365 = vsel %vm293, %v2360, %v2362
      %v2370 = vadd.f32 %v2339, %v2363
      %v2371 = vadd.f32 %v2340, %v2364
      %v2372 = vadd.f32 %v2341, %v2365
      %v2373 = vadd.f32 %v2342, %v2362
      %2374 = vset.pattern.permute.xlu0 7
      %2375 = vperm.xlu0 %2374, %v2079
      %v2376 = vpop.permute.xlu0 %2375
      %v2378 = vmul.f32 %v2376, %v2260
      %v2379 = vmul.f32 %v2376, %v2264
      %v2380 = vmul.f32 %v2376, %v2268
      %v2381 = vmul.f32 %v2376, %v2272
      %2386 = vrot.lane.b32.xlu0 %v2378, 127
      %v2387 = vpop.permute.xlu0 %2386
      %2388 = vrot.lane.b32.xlu0 %v2379, 127
      %v2389 = vpop.permute.xlu0 %2388
      %2390 = vrot.lane.b32.xlu0 %v2380, 127
      %v2391 = vpop.permute.xlu0 %2390
      %2392 = vrot.lane.b32.xlu0 %v2381, 127
      %v2393 = vpop.permute.xlu0 %2392
      %v2394 = vsel %vm293, %v2387, %v2389
      %v2395 = vsel %vm293, %v2389, %v2391
      %v2396 = vsel %vm293, %v2391, %v2393
      %v2401 = vadd.f32 %v2370, %v2394
      %v2402 = vadd.f32 %v2371, %v2395
      %v2403 = vadd.f32 %v2372, %v2396
      %v2404 = vadd.f32 %v2373, %v2393
      %2405 = vset.pattern.permute.xlu0 8
      %2406 = vperm.xlu0 %2405, %v2079
      %v2407 = vpop.permute.xlu0 %2406
      %v2409 = vmul.f32 %v2407, %v2116
      %v2410 = vmul.f32 %v2407, %v2120
      %v2411 = vmul.f32 %v2407, %v2124
      %v2412 = vmul.f32 %v2407, %v2128
      %2417 = vrot.lane.b32.xlu0 %v2409, 126
      %v2418 = vpop.permute.xlu0 %2417
      %2419 = vrot.lane.b32.xlu0 %v2410, 126
      %v2420 = vpop.permute.xlu0 %2419
      %2421 = vrot.lane.b32.xlu0 %v2411, 126
      %v2422 = vpop.permute.xlu0 %2421
      %2423 = vrot.lane.b32.xlu0 %v2412, 126
      %v2424 = vpop.permute.xlu0 %2423
      %v2425 = vsel %vm325, %v2418, %v2420
      %v2426 = vsel %vm325, %v2420, %v2422
      %v2427 = vsel %vm325, %v2422, %v2424
      %v2432 = vadd.f32 %v2401, %v2425
      %v2433 = vadd.f32 %v2402, %v2426
      %v2434 = vadd.f32 %v2403, %v2427
      %v2435 = vadd.f32 %v2404, %v2424
      %2436 = vset.pattern.permute.xlu0 9
      %2437 = vperm.xlu0 %2436, %v2079
      %v2438 = vpop.permute.xlu0 %2437
      %v2440 = vmul.f32 %v2438, %v2164
      %v2441 = vmul.f32 %v2438, %v2168
      %v2442 = vmul.f32 %v2438, %v2172
      %v2443 = vmul.f32 %v2438, %v2176
      %2448 = vrot.lane.b32.xlu0 %v2440, 126
      %v2449 = vpop.permute.xlu0 %2448
      %2450 = vrot.lane.b32.xlu0 %v2441, 126
      %v2451 = vpop.permute.xlu0 %2450
      %2452 = vrot.lane.b32.xlu0 %v2442, 126
      %v2453 = vpop.permute.xlu0 %2452
      %2454 = vrot.lane.b32.xlu0 %v2443, 126
      %v2455 = vpop.permute.xlu0 %2454
      %v2456 = vsel %vm325, %v2449, %v2451
      %v2457 = vsel %vm325, %v2451, %v2453
      %v2458 = vsel %vm325, %v2453, %v2455
      %v2463 = vadd.f32 %v2432, %v2456
      %v2464 = vadd.f32 %v2433, %v2457
      %v2465 = vadd.f32 %v2434, %v2458
      %v2466 = vadd.f32 %v2435, %v2455
      %2467 = vset.pattern.permute.xlu0 10
      %2468 = vperm.xlu0 %2467, %v2079
      %v2469 = vpop.permute.xlu0 %2468
      %v2471 = vmul.f32 %v2469, %v2212
      %v2472 = vmul.f32 %v2469, %v2216
      %v2473 = vmul.f32 %v2469, %v2220
      %v2474 = vmul.f32 %v2469, %v2224
      %2479 = vrot.lane.b32.xlu0 %v2471, 126
      %v2480 = vpop.permute.xlu0 %2479
      %2481 = vrot.lane.b32.xlu0 %v2472, 126
      %v2482 = vpop.permute.xlu0 %2481
      %2483 = vrot.lane.b32.xlu0 %v2473, 126
      %v2484 = vpop.permute.xlu0 %2483
      %2485 = vrot.lane.b32.xlu0 %v2474, 126
      %v2486 = vpop.permute.xlu0 %2485
      %v2487 = vsel %vm325, %v2480, %v2482
      %v2488 = vsel %vm325, %v2482, %v2484
      %v2489 = vsel %vm325, %v2484, %v2486
      %v2494 = vadd.f32 %v2463, %v2487
      %v2495 = vadd.f32 %v2464, %v2488
      %v2496 = vadd.f32 %v2465, %v2489
      %v2497 = vadd.f32 %v2466, %v2486
      %2498 = vset.pattern.permute.xlu0 11
      %2499 = vperm.xlu0 %2498, %v2079
      %v2500 = vpop.permute.xlu0 %2499
      %v2502 = vmul.f32 %v2500, %v2260
      %v2503 = vmul.f32 %v2500, %v2264
      %v2504 = vmul.f32 %v2500, %v2268
      %v2505 = vmul.f32 %v2500, %v2272
      %2510 = vrot.lane.b32.xlu0 %v2502, 126
      %v2511 = vpop.permute.xlu0 %2510
      %2512 = vrot.lane.b32.xlu0 %v2503, 126
      %v2513 = vpop.permute.xlu0 %2512
      %2514 = vrot.lane.b32.xlu0 %v2504, 126
      %v2515 = vpop.permute.xlu0 %2514
      %2516 = vrot.lane.b32.xlu0 %v2505, 126
      %v2517 = vpop.permute.xlu0 %2516
      %v2518 = vsel %vm325, %v2511, %v2513
      %v2519 = vsel %vm325, %v2513, %v2515
      %v2520 = vsel %vm325, %v2515, %v2517
      %v2525 = vadd.f32 %v2494, %v2518
      %v2526 = vadd.f32 %v2495, %v2519
      %v2527 = vadd.f32 %v2496, %v2520
      %v2528 = vadd.f32 %v2497, %v2517
      %2529 = vset.pattern.permute.xlu0 12
      %2530 = vperm.xlu0 %2529, %v2079
      %v2531 = vpop.permute.xlu0 %2530
      %v2533 = vmul.f32 %v2531, %v2116
      %v2534 = vmul.f32 %v2531, %v2120
      %v2535 = vmul.f32 %v2531, %v2124
      %v2536 = vmul.f32 %v2531, %v2128
      %2541 = vrot.lane.b32.xlu0 %v2533, 110
      %v2542 = vpop.permute.xlu0 %2541
      %2543 = vrot.lane.b32.xlu0 %v2534, 110
      %v2544 = vpop.permute.xlu0 %2543
      %2545 = vrot.lane.b32.xlu0 %v2535, 110
      %v2546 = vpop.permute.xlu0 %2545
      %2547 = vrot.lane.b32.xlu0 %v2536, 110
      %v2548 = vpop.permute.xlu0 %2547
      %v2549 = vsel %vm357, %v2542, %v2544
      %v2550 = vsel %vm357, %v2544, %v2546
      %v2551 = vsel %vm357, %v2546, %v2548
      %v2556 = vadd.f32 %v2525, %v2549
      %v2557 = vadd.f32 %v2526, %v2550
      %v2558 = vadd.f32 %v2527, %v2551
      %v2559 = vadd.f32 %v2528, %v2548
      %2560 = vset.pattern.permute.xlu0 13
      %2561 = vperm.xlu0 %2560, %v2079
      %v2562 = vpop.permute.xlu0 %2561
      %v2564 = vmul.f32 %v2562, %v2164
      %v2565 = vmul.f32 %v2562, %v2168
      %v2566 = vmul.f32 %v2562, %v2172
      %v2567 = vmul.f32 %v2562, %v2176
      %2572 = vrot.lane.b32.xlu0 %v2564, 110
      %v2573 = vpop.permute.xlu0 %2572
      %2574 = vrot.lane.b32.xlu0 %v2565, 110
      %v2575 = vpop.permute.xlu0 %2574
      %2576 = vrot.lane.b32.xlu0 %v2566, 110
      %v2577 = vpop.permute.xlu0 %2576
      %2578 = vrot.lane.b32.xlu0 %v2567, 110
      %v2579 = vpop.permute.xlu0 %2578
      %v2580 = vsel %vm357, %v2573, %v2575
      %v2581 = vsel %vm357, %v2575, %v2577
      %v2582 = vsel %vm357, %v2577, %v2579
      %v2587 = vadd.f32 %v2556, %v2580
      %v2588 = vadd.f32 %v2557, %v2581
      %v2589 = vadd.f32 %v2558, %v2582
      %v2590 = vadd.f32 %v2559, %v2579
      %2591 = vset.pattern.permute.xlu0 14
      %2592 = vperm.xlu0 %2591, %v2079
      %v2593 = vpop.permute.xlu0 %2592
      %v2595 = vmul.f32 %v2593, %v2212
      %v2596 = vmul.f32 %v2593, %v2216
      %v2597 = vmul.f32 %v2593, %v2220
      %v2598 = vmul.f32 %v2593, %v2224
      %2603 = vrot.lane.b32.xlu0 %v2595, 110
      %v2604 = vpop.permute.xlu0 %2603
      %2605 = vrot.lane.b32.xlu0 %v2596, 110
      %v2606 = vpop.permute.xlu0 %2605
      %2607 = vrot.lane.b32.xlu0 %v2597, 110
      %v2608 = vpop.permute.xlu0 %2607
      %2609 = vrot.lane.b32.xlu0 %v2598, 110
      %v2610 = vpop.permute.xlu0 %2609
      %v2611 = vsel %vm357, %v2604, %v2606
      %v2612 = vsel %vm357, %v2606, %v2608
      %v2613 = vsel %vm357, %v2608, %v2610
      %v2618 = vadd.f32 %v2587, %v2611
      %v2619 = vadd.f32 %v2588, %v2612
      %v2620 = vadd.f32 %v2589, %v2613
      %v2621 = vadd.f32 %v2590, %v2610
      %2622 = vset.pattern.permute.xlu0 15
      %2623 = vperm.xlu0 %2622, %v2079
      %v2624 = vpop.permute.xlu0 %2623
      %v2626 = vmul.f32 %v2624, %v2260
      %v2627 = vmul.f32 %v2624, %v2264
      %v2628 = vmul.f32 %v2624, %v2268
      %v2629 = vmul.f32 %v2624, %v2272
      %2634 = vrot.lane.b32.xlu0 %v2626, 110
      %v2635 = vpop.permute.xlu0 %2634
      %2636 = vrot.lane.b32.xlu0 %v2627, 110
      %v2637 = vpop.permute.xlu0 %2636
      %2638 = vrot.lane.b32.xlu0 %v2628, 110
      %v2639 = vpop.permute.xlu0 %2638
      %2640 = vrot.lane.b32.xlu0 %v2629, 110
      %v2641 = vpop.permute.xlu0 %2640
      %v2642 = vsel %vm357, %v2635, %v2637
      %v2643 = vsel %vm357, %v2637, %v2639
      %v2644 = vsel %vm357, %v2639, %v2641
      %v2649 = vadd.f32 %v2618, %v2642
      %v2650 = vadd.f32 %v2619, %v2643
      %v2651 = vadd.f32 %v2620, %v2644
      %v2652 = vadd.f32 %v2621, %v2641
      %v2653 = vld [vmem:[#allocation2 + $0x4] sm:$0xff]
      %v2654 = vld [vmem:[#allocation2 + $0xc] sm:$0xf]
      %2655 = vset.pattern.permute.xlu0 16
      %2656 = vperm.xlu0 %2655, %v2079
      %v2657 = vpop.permute.xlu0 %2656
      %v2661 = vlaneseq
      %v2662 = vshrl.u32 %v2661, 7
      %v2663 = vsub.s32 0, %v2662
      %v2664 = vrot.slane %v2653, %v2663
      %v2665 = vlaneseq
      %v2666 = vshrl.u32 %v2665, 7
      %v2667 = vsub.s32 4, %v2666
      %v2668 = vrot.slane %v2653, %v2667
      %v2669 = vlaneseq
      %v2670 = vshrl.u32 %v2669, 7
      %v2671 = vsub.s32 0, %v2670
      %v2672 = vrot.slane %v2654, %v2671
      %v2676 = vlaneseq
      %v2677 = vshrl.u32 %v2676, 7
      %v2678 = vsub.s32 0, %v2677
      %v2679 = vrot.slane %v2664, %v2678
      %v2680 = vlaneseq
      %v2681 = vshrl.u32 %v2680, 7
      %v2682 = vsub.s32 0, %v2681
      %v2683 = vrot.slane %v2668, %v2682
      %v2684 = vlaneseq
      %v2685 = vshrl.u32 %v2684, 7
      %v2686 = vsub.s32 0, %v2685
      %v2687 = vrot.slane %v2672, %v2686
      %v2688 = vmul.f32 %v2657, %v2679
      %v2689 = vmul.f32 %v2657, %v2683
      %v2690 = vmul.f32 %v2657, %v2687
      %2694 = vrot.lane.b32.xlu0 %v2688, 109
      %v2695 = vpop.permute.xlu0 %2694
      %2696 = vrot.lane.b32.xlu0 %v2689, 109
      %v2697 = vpop.permute.xlu0 %2696
      %2698 = vrot.lane.b32.xlu0 %v2690, 109
      %v2699 = vpop.permute.xlu0 %2698
      %v2700 = vsel %vm402, %v2695, %v2697
      %v2701 = vsel %vm402, %v2697, %v2699
      %v2706 = vadd.f32 %v2649, %v2695
      %v2707 = vadd.f32 %v2650, %v2700
      %v2708 = vadd.f32 %v2651, %v2701
      %v2709 = vadd.f32 %v2652, %v2699
      %2710 = vset.pattern.permute.xlu0 17
      %2711 = vperm.xlu0 %2710, %v2079
      %v2712 = vpop.permute.xlu0 %2711
      %v2714 = vlaneseq
      %v2715 = vshrl.u32 %v2714, 7
      %v2716 = vsub.s32 1, %v2715
      %v2717 = vrot.slane %v2653, %v2716
      %v2718 = vlaneseq
      %v2719 = vshrl.u32 %v2718, 7
      %v2720 = vsub.s32 5, %v2719
      %v2721 = vrot.slane %v2653, %v2720
      %v2722 = vlaneseq
      %v2723 = vshrl.u32 %v2722, 7
      %v2724 = vsub.s32 1, %v2723
      %v2725 = vrot.slane %v2654, %v2724
      %v2729 = vlaneseq
      %v2730 = vshrl.u32 %v2729, 7
      %v2731 = vsub.s32 1, %v2730
      %v2732 = vrot.slane %v2717, %v2731
      %v2733 = vlaneseq
      %v2734 = vshrl.u32 %v2733, 7
      %v2735 = vsub.s32 1, %v2734
      %v2736 = vrot.slane %v2721, %v2735
      %v2737 = vlaneseq
      %v2738 = vshrl.u32 %v2737, 7
      %v2739 = vsub.s32 1, %v2738
      %v2740 = vrot.slane %v2725, %v2739
      %v2741 = vmul.f32 %v2712, %v2732
      %v2742 = vmul.f32 %v2712, %v2736
      %v2743 = vmul.f32 %v2712, %v2740
      %2747 = vrot.lane.b32.xlu0 %v2741, 109
      %v2748 = vpop.permute.xlu0 %2747
      %2749 = vrot.lane.b32.xlu0 %v2742, 109
      %v2750 = vpop.permute.xlu0 %2749
      %2751 = vrot.lane.b32.xlu0 %v2743, 109
      %v2752 = vpop.permute.xlu0 %2751
      %v2753 = vsel %vm402, %v2748, %v2750
      %v2754 = vsel %vm402, %v2750, %v2752
      %v2759 = vadd.f32 %v2706, %v2748
      %v2760 = vadd.f32 %v2707, %v2753
      %v2761 = vadd.f32 %v2708, %v2754
      %v2762 = vadd.f32 %v2709, %v2752
      %2763 = vset.pattern.permute.xlu0 18
      %2764 = vperm.xlu0 %2763, %v2079
      %v2765 = vpop.permute.xlu0 %2764
      %v2767 = vlaneseq
      %v2768 = vshrl.u32 %v2767, 7
      %v2769 = vsub.s32 2, %v2768
      %v2770 = vrot.slane %v2653, %v2769
      %v2771 = vlaneseq
      %v2772 = vshrl.u32 %v2771, 7
      %v2773 = vsub.s32 6, %v2772
      %v2774 = vrot.slane %v2653, %v2773
      %v2775 = vlaneseq
      %v2776 = vshrl.u32 %v2775, 7
      %v2777 = vsub.s32 2, %v2776
      %v2778 = vrot.slane %v2654, %v2777
      %v2782 = vlaneseq
      %v2783 = vshrl.u32 %v2782, 7
      %v2784 = vsub.s32 2, %v2783
      %v2785 = vrot.slane %v2770, %v2784
      %v2786 = vlaneseq
      %v2787 = vshrl.u32 %v2786, 7
      %v2788 = vsub.s32 2, %v2787
      %v2789 = vrot.slane %v2774, %v2788
      %v2790 = vlaneseq
      %v2791 = vshrl.u32 %v2790, 7
      %v2792 = vsub.s32 2, %v2791
      %v2793 = vrot.slane %v2778, %v2792
      %v2794 = vmul.f32 %v2765, %v2785
      %v2795 = vmul.f32 %v2765, %v2789
      %v2796 = vmul.f32 %v2765, %v2793
      %2800 = vrot.lane.b32.xlu0 %v2794, 109
      %v2801 = vpop.permute.xlu0 %2800
      %2802 = vrot.lane.b32.xlu0 %v2795, 109
      %v2803 = vpop.permute.xlu0 %2802
      %2804 = vrot.lane.b32.xlu0 %v2796, 109
      %v2805 = vpop.permute.xlu0 %2804
      %v2806 = vsel %vm402, %v2801, %v2803
      %v2807 = vsel %vm402, %v2803, %v2805
      %v2812 = vadd.f32 %v2759, %v2801
      %v2813 = vadd.f32 %v2760, %v2806
      %v2814 = vadd.f32 %v2761, %v2807
      %v2815 = vadd.f32 %v2762, %v2805
      %2816 = vset.pattern.permute.xlu0 19
      %2817 = vperm.xlu0 %2816, %v2079
      %v2818 = vpop.permute.xlu0 %2817
      %v2820 = vlaneseq
      %v2821 = vshrl.u32 %v2820, 7
      %v2822 = vsub.s32 3, %v2821
      %v2823 = vrot.slane %v2653, %v2822
      %v2824 = vlaneseq
      %v2825 = vshrl.u32 %v2824, 7
      %v2826 = vsub.s32 7, %v2825
      %v2827 = vrot.slane %v2653, %v2826
      %v2828 = vlaneseq
      %v2829 = vshrl.u32 %v2828, 7
      %v2830 = vsub.s32 3, %v2829
      %v2831 = vrot.slane %v2654, %v2830
      %v2835 = vlaneseq
      %v2836 = vshrl.u32 %v2835, 7
      %v2837 = vsub.s32 3, %v2836
      %v2838 = vrot.slane %v2823, %v2837
      %v2839 = vlaneseq
      %v2840 = vshrl.u32 %v2839, 7
      %v2841 = vsub.s32 3, %v2840
      %v2842 = vrot.slane %v2827, %v2841
      %v2843 = vlaneseq
      %v2844 = vshrl.u32 %v2843, 7
      %v2845 = vsub.s32 3, %v2844
      %v2846 = vrot.slane %v2831, %v2845
      %v2847 = vmul.f32 %v2818, %v2838
      %v2848 = vmul.f32 %v2818, %v2842
      %v2849 = vmul.f32 %v2818, %v2846
      %2853 = vrot.lane.b32.xlu0 %v2847, 109
      %v2854 = vpop.permute.xlu0 %2853
      %2855 = vrot.lane.b32.xlu0 %v2848, 109
      %v2856 = vpop.permute.xlu0 %2855
      %2857 = vrot.lane.b32.xlu0 %v2849, 109
      %v2858 = vpop.permute.xlu0 %2857
      %v2859 = vsel %vm402, %v2854, %v2856
      %v2860 = vsel %vm402, %v2856, %v2858
      %v2865 = vadd.f32 %v2812, %v2854
      %v2866 = vadd.f32 %v2813, %v2859
      %v2867 = vadd.f32 %v2814, %v2860
      %v2868 = vadd.f32 %v2815, %v2858
      %v2869 = vld [vmem:[#allocation2 + $0x4] sm:$0xff]
      %v2870 = vld [vmem:[#allocation2 + $0xc] sm:$0xff]
      %2871 = vset.pattern.permute.xlu0 20
      %2872 = vperm.xlu0 %2871, %v2079
      %v2873 = vpop.permute.xlu0 %2872
      %v2877 = vlaneseq
      %v2878 = vshrl.u32 %v2877, 7
      %v2879 = vsub.s32 0, %v2878
      %v2880 = vrot.slane %v2869, %v2879
      %v2881 = vlaneseq
      %v2882 = vshrl.u32 %v2881, 7
      %v2883 = vsub.s32 4, %v2882
      %v2884 = vrot.slane %v2869, %v2883
      %v2885 = vlaneseq
      %v2886 = vshrl.u32 %v2885, 7
      %v2887 = vsub.s32 0, %v2886
      %v2888 = vrot.slane %v2870, %v2887
      %v2889 = vlaneseq
      %v2890 = vshrl.u32 %v2889, 7
      %v2891 = vsub.s32 4, %v2890
      %v2892 = vrot.slane %v2870, %v2891
      %v2897 = vlaneseq
      %v2898 = vshrl.u32 %v2897, 7
      %v2899 = vsub.s32 0, %v2898
      %v2900 = vrot.slane %v2880, %v2899
      %v2901 = vlaneseq
      %v2902 = vshrl.u32 %v2901, 7
      %v2903 = vsub.s32 0, %v2902
      %v2904 = vrot.slane %v2884, %v2903
      %v2905 = vlaneseq
      %v2906 = vshrl.u32 %v2905, 7
      %v2907 = vsub.s32 0, %v2906
      %v2908 = vrot.slane %v2888, %v2907
      %v2909 = vlaneseq
      %v2910 = vshrl.u32 %v2909, 7
      %v2911 = vsub.s32 0, %v2910
      %v2912 = vrot.slane %v2892, %v2911
      %v2913 = vmul.f32 %v2873, %v2900
      %v2914 = vmul.f32 %v2873, %v2904
      %v2915 = vmul.f32 %v2873, %v2908
      %v2916 = vmul.f32 %v2873, %v2912
      %2921 = vrot.lane.b32.xlu0 %v2913, 108
      %v2922 = vpop.permute.xlu0 %2921
      %2923 = vrot.lane.b32.xlu0 %v2914, 108
      %v2924 = vpop.permute.xlu0 %2923
      %2925 = vrot.lane.b32.xlu0 %v2915, 108
      %v2926 = vpop.permute.xlu0 %2925
      %2927 = vrot.lane.b32.xlu0 %v2916, 108
      %v2928 = vpop.permute.xlu0 %2927
      %v2929 = vsel %vm456, %v2922, %v2924
      %v2930 = vsel %vm456, %v2924, %v2926
      %v2931 = vsel %vm456, %v2926, %v2928
      %v2936 = vadd.f32 %v2865, %v2922
      %v2937 = vadd.f32 %v2866, %v2929
      %v2938 = vadd.f32 %v2867, %v2930
      %v2939 = vadd.f32 %v2868, %v2931
      %2940 = vset.pattern.permute.xlu0 21
      %2941 = vperm.xlu0 %2940, %v2079
      %v2942 = vpop.permute.xlu0 %2941
      %v2944 = vlaneseq
      %v2945 = vshrl.u32 %v2944, 7
      %v2946 = vsub.s32 1, %v2945
      %v2947 = vrot.slane %v2869, %v2946
      %v2948 = vlaneseq
      %v2949 = vshrl.u32 %v2948, 7
      %v2950 = vsub.s32 5, %v2949
      %v2951 = vrot.slane %v2869, %v2950
      %v2952 = vlaneseq
      %v2953 = vshrl.u32 %v2952, 7
      %v2954 = vsub.s32 1, %v2953
      %v2955 = vrot.slane %v2870, %v2954
      %v2956 = vlaneseq
      %v2957 = vshrl.u32 %v2956, 7
      %v2958 = vsub.s32 5, %v2957
      %v2959 = vrot.slane %v2870, %v2958
      %v2964 = vlaneseq
      %v2965 = vshrl.u32 %v2964, 7
      %v2966 = vsub.s32 1, %v2965
      %v2967 = vrot.slane %v2947, %v2966
      %v2968 = vlaneseq
      %v2969 = vshrl.u32 %v2968, 7
      %v2970 = vsub.s32 1, %v2969
      %v2971 = vrot.slane %v2951, %v2970
      %v2972 = vlaneseq
      %v2973 = vshrl.u32 %v2972, 7
      %v2974 = vsub.s32 1, %v2973
      %v2975 = vrot.slane %v2955, %v2974
      %v2976 = vlaneseq
      %v2977 = vshrl.u32 %v2976, 7
      %v2978 = vsub.s32 1, %v2977
      %v2979 = vrot.slane %v2959, %v2978
      %v2980 = vmul.f32 %v2942, %v2967
      %v2981 = vmul.f32 %v2942, %v2971
      %v2982 = vmul.f32 %v2942, %v2975
      %v2983 = vmul.f32 %v2942, %v2979
      %2988 = vrot.lane.b32.xlu0 %v2980, 108
      %v2989 = vpop.permute.xlu0 %2988
      %2990 = vrot.lane.b32.xlu0 %v2981, 108
      %v2991 = vpop.permute.xlu0 %2990
      %2992 = vrot.lane.b32.xlu0 %v2982, 108
      %v2993 = vpop.permute.xlu0 %2992
      %2994 = vrot.lane.b32.xlu0 %v2983, 108
      %v2995 = vpop.permute.xlu0 %2994
      %v2996 = vsel %vm456, %v2989, %v2991
      %v2997 = vsel %vm456, %v2991, %v2993
      %v2998 = vsel %vm456, %v2993, %v2995
      %v3003 = vadd.f32 %v2936, %v2989
      %v3004 = vadd.f32 %v2937, %v2996
      %v3005 = vadd.f32 %v2938, %v2997
      %v3006 = vadd.f32 %v2939, %v2998
      %3007 = vset.pattern.permute.xlu0 22
      %3008 = vperm.xlu0 %3007, %v2079
      %v3009 = vpop.permute.xlu0 %3008
      %v3011 = vlaneseq
      %v3012 = vshrl.u32 %v3011, 7
      %v3013 = vsub.s32 2, %v3012
      %v3014 = vrot.slane %v2869, %v3013
      %v3015 = vlaneseq
      %v3016 = vshrl.u32 %v3015, 7
      %v3017 = vsub.s32 6, %v3016
      %v3018 = vrot.slane %v2869, %v3017
      %v3019 = vlaneseq
      %v3020 = vshrl.u32 %v3019, 7
      %v3021 = vsub.s32 2, %v3020
      %v3022 = vrot.slane %v2870, %v3021
      %v3023 = vlaneseq
      %v3024 = vshrl.u32 %v3023, 7
      %v3025 = vsub.s32 6, %v3024
      %v3026 = vrot.slane %v2870, %v3025
      %v3031 = vlaneseq
      %v3032 = vshrl.u32 %v3031, 7
      %v3033 = vsub.s32 2, %v3032
      %v3034 = vrot.slane %v3014, %v3033
      %v3035 = vlaneseq
      %v3036 = vshrl.u32 %v3035, 7
      %v3037 = vsub.s32 2, %v3036
      %v3038 = vrot.slane %v3018, %v3037
      %v3039 = vlaneseq
      %v3040 = vshrl.u32 %v3039, 7
      %v3041 = vsub.s32 2, %v3040
      %v3042 = vrot.slane %v3022, %v3041
      %v3043 = vlaneseq
      %v3044 = vshrl.u32 %v3043, 7
      %v3045 = vsub.s32 2, %v3044
      %v3046 = vrot.slane %v3026, %v3045
      %v3047 = vmul.f32 %v3009, %v3034
      %v3048 = vmul.f32 %v3009, %v3038
      %v3049 = vmul.f32 %v3009, %v3042
      %v3050 = vmul.f32 %v3009, %v3046
      %3055 = vrot.lane.b32.xlu0 %v3047, 108
      %v3056 = vpop.permute.xlu0 %3055
      %3057 = vrot.lane.b32.xlu0 %v3048, 108
      %v3058 = vpop.permute.xlu0 %3057
      %3059 = vrot.lane.b32.xlu0 %v3049, 108
      %v3060 = vpop.permute.xlu0 %3059
      %3061 = vrot.lane.b32.xlu0 %v3050, 108
      %v3062 = vpop.permute.xlu0 %3061
      %v3063 = vsel %vm456, %v3056, %v3058
      %v3064 = vsel %vm456, %v3058, %v3060
      %v3065 = vsel %vm456, %v3060, %v3062
      %v3070 = vadd.f32 %v3003, %v3056
      %v3071 = vadd.f32 %v3004, %v3063
      %v3072 = vadd.f32 %v3005, %v3064
      %v3073 = vadd.f32 %v3006, %v3065
      %3074 = vset.pattern.permute.xlu0 23
      %3075 = vperm.xlu0 %3074, %v2079
      %v3076 = vpop.permute.xlu0 %3075
      %v3078 = vlaneseq
      %v3079 = vshrl.u32 %v3078, 7
      %v3080 = vsub.s32 3, %v3079
      %v3081 = vrot.slane %v2869, %v3080
      %v3082 = vlaneseq
      %v3083 = vshrl.u32 %v3082, 7
      %v3084 = vsub.s32 7, %v3083
      %v3085 = vrot.slane %v2869, %v3084
      %v3086 = vlaneseq
      %v3087 = vshrl.u32 %v3086, 7
      %v3088 = vsub.s32 3, %v3087
      %v3089 = vrot.slane %v2870, %v3088
      %v3090 = vlaneseq
      %v3091 = vshrl.u32 %v3090, 7
      %v3092 = vsub.s32 7, %v3091
      %v3093 = vrot.slane %v2870, %v3092
      %v3098 = vlaneseq
      %v3099 = vshrl.u32 %v3098, 7
      %v3100 = vsub.s32 3, %v3099
      %v3101 = vrot.slane %v3081, %v3100
      %v3102 = vlaneseq
      %v3103 = vshrl.u32 %v3102, 7
      %v3104 = vsub.s32 3, %v3103
      %v3105 = vrot.slane %v3085, %v3104
      %v3106 = vlaneseq
      %v3107 = vshrl.u32 %v3106, 7
      %v3108 = vsub.s32 3, %v3107
      %v3109 = vrot.slane %v3089, %v3108
      %v3110 = vlaneseq
      %v3111 = vshrl.u32 %v3110, 7
      %v3112 = vsub.s32 3, %v3111
      %v3113 = vrot.slane %v3093, %v3112
      %v3114 = vmul.f32 %v3076, %v3101
      %v3115 = vmul.f32 %v3076, %v3105
      %v3116 = vmul.f32 %v3076, %v3109
      %v3117 = vmul.f32 %v3076, %v3113
      %3122 = vrot.lane.b32.xlu0 %v3114, 108
      %v3123 = vpop.permute.xlu0 %3122
      %3124 = vrot.lane.b32.xlu0 %v3115, 108
      %v3125 = vpop.permute.xlu0 %3124
      %3126 = vrot.lane.b32.xlu0 %v3116, 108
      %v3127 = vpop.permute.xlu0 %3126
      %3128 = vrot.lane.b32.xlu0 %v3117, 108
      %v3129 = vpop.permute.xlu0 %3128
      %v3130 = vsel %vm456, %v3123, %v3125
      %v3131 = vsel %vm456, %v3125, %v3127
      %v3132 = vsel %vm456, %v3127, %v3129
      %v3137 = vadd.f32 %v3070, %v3123
      %v3138 = vadd.f32 %v3071, %v3130
      %v3139 = vadd.f32 %v3072, %v3131
      %v3140 = vadd.f32 %v3073, %v3132
      %3141 = vset.pattern.permute.xlu0 24
      %3142 = vperm.xlu0 %3141, %v2079
      %v3143 = vpop.permute.xlu0 %3142
      %v3145 = vmul.f32 %v3143, %v2900
      %v3146 = vmul.f32 %v3143, %v2904
      %v3147 = vmul.f32 %v3143, %v2908
      %v3148 = vmul.f32 %v3143, %v2912
      %3153 = vrot.lane.b32.xlu0 %v3145, 92
      %v3154 = vpop.permute.xlu0 %3153
      %3155 = vrot.lane.b32.xlu0 %v3146, 92
      %v3156 = vpop.permute.xlu0 %3155
      %3157 = vrot.lane.b32.xlu0 %v3147, 92
      %v3158 = vpop.permute.xlu0 %3157
      %3159 = vrot.lane.b32.xlu0 %v3148, 92
      %v3160 = vpop.permute.xlu0 %3159
      %v3161 = vsel %vm488, %v3154, %v3156
      %v3162 = vsel %vm488, %v3156, %v3158
      %v3163 = vsel %vm488, %v3158, %v3160
      %v3168 = vadd.f32 %v3137, %v3154
      %v3169 = vadd.f32 %v3138, %v3161
      %v3170 = vadd.f32 %v3139, %v3162
      %v3171 = vadd.f32 %v3140, %v3163
      %3172 = vset.pattern.permute.xlu0 25
      %3173 = vperm.xlu0 %3172, %v2079
      %v3174 = vpop.permute.xlu0 %3173
      %v3176 = vmul.f32 %v3174, %v2967
      %v3177 = vmul.f32 %v3174, %v2971
      %v3178 = vmul.f32 %v3174, %v2975
      %v3179 = vmul.f32 %v3174, %v2979
      %3184 = vrot.lane.b32.xlu0 %v3176, 92
      %v3185 = vpop.permute.xlu0 %3184
      %3186 = vrot.lane.b32.xlu0 %v3177, 92
      %v3187 = vpop.permute.xlu0 %3186
      %3188 = vrot.lane.b32.xlu0 %v3178, 92
      %v3189 = vpop.permute.xlu0 %3188
      %3190 = vrot.lane.b32.xlu0 %v3179, 92
      %v3191 = vpop.permute.xlu0 %3190
      %v3192 = vsel %vm488, %v3185, %v3187
      %v3193 = vsel %vm488, %v3187, %v3189
      %v3194 = vsel %vm488, %v3189, %v3191
      %v3199 = vadd.f32 %v3168, %v3185
      %v3200 = vadd.f32 %v3169, %v3192
      %v3201 = vadd.f32 %v3170, %v3193
      %v3202 = vadd.f32 %v3171, %v3194
      %3203 = vset.pattern.permute.xlu0 26
      %3204 = vperm.xlu0 %3203, %v2079
      %v3205 = vpop.permute.xlu0 %3204
      %v3207 = vmul.f32 %v3205, %v3034
      %v3208 = vmul.f32 %v3205, %v3038
      %v3209 = vmul.f32 %v3205, %v3042
      %v3210 = vmul.f32 %v3205, %v3046
      %3215 = vrot.lane.b32.xlu0 %v3207, 92
      %v3216 = vpop.permute.xlu0 %3215
      %3217 = vrot.lane.b32.xlu0 %v3208, 92
      %v3218 = vpop.permute.xlu0 %3217
      %3219 = vrot.lane.b32.xlu0 %v3209, 92
      %v3220 = vpop.permute.xlu0 %3219
      %3221 = vrot.lane.b32.xlu0 %v3210, 92
      %v3222 = vpop.permute.xlu0 %3221
      %v3223 = vsel %vm488, %v3216, %v3218
      %v3224 = vsel %vm488, %v3218, %v3220
      %v3225 = vsel %vm488, %v3220, %v3222
      %v3230 = vadd.f32 %v3199, %v3216
      %v3231 = vadd.f32 %v3200, %v3223
      %v3232 = vadd.f32 %v3201, %v3224
      %v3233 = vadd.f32 %v3202, %v3225
      %3234 = vset.pattern.permute.xlu0 27
      %3235 = vperm.xlu0 %3234, %v2079
      %v3236 = vpop.permute.xlu0 %3235
      %v3238 = vmul.f32 %v3236, %v3101
      %v3239 = vmul.f32 %v3236, %v3105
      %v3240 = vmul.f32 %v3236, %v3109
      %v3241 = vmul.f32 %v3236, %v3113
      %3246 = vrot.lane.b32.xlu0 %v3238, 92
      %v3247 = vpop.permute.xlu0 %3246
      %3248 = vrot.lane.b32.xlu0 %v3239, 92
      %v3249 = vpop.permute.xlu0 %3248
      %3250 = vrot.lane.b32.xlu0 %v3240, 92
      %v3251 = vpop.permute.xlu0 %3250
      %3252 = vrot.lane.b32.xlu0 %v3241, 92
      %v3253 = vpop.permute.xlu0 %3252
      %v3254 = vsel %vm488, %v3247, %v3249
      %v3255 = vsel %vm488, %v3249, %v3251
      %v3256 = vsel %vm488, %v3251, %v3253
      %v3261 = vadd.f32 %v3230, %v3247
      %v3262 = vadd.f32 %v3231, %v3254
      %v3263 = vadd.f32 %v3232, %v3255
      %v3264 = vadd.f32 %v3233, %v3256
      %3265 = vset.pattern.permute.xlu0 28
      %3266 = vperm.xlu0 %3265, %v2079
      %v3267 = vpop.permute.xlu0 %3266
      %v3269 = vmul.f32 %v3267, %v2900
      %v3270 = vmul.f32 %v3267, %v2904
      %v3271 = vmul.f32 %v3267, %v2908
      %v3272 = vmul.f32 %v3267, %v2912
      %3277 = vrot.lane.b32.xlu0 %v3269, 91
      %v3278 = vpop.permute.xlu0 %3277
      %3279 = vrot.lane.b32.xlu0 %v3270, 91
      %v3280 = vpop.permute.xlu0 %3279
      %3281 = vrot.lane.b32.xlu0 %v3271, 91
      %v3282 = vpop.permute.xlu0 %3281
      %3283 = vrot.lane.b32.xlu0 %v3272, 91
      %v3284 = vpop.permute.xlu0 %3283
      %v3285 = vsel %vm520, %v3278, %v3280
      %v3286 = vsel %vm520, %v3280, %v3282
      %v3287 = vsel %vm520, %v3282, %v3284
      %v3292 = vadd.f32 %v3261, %v3278
      %v3293 = vadd.f32 %v3262, %v3285
      %v3294 = vadd.f32 %v3263, %v3286
      %v3295 = vadd.f32 %v3264, %v3287
      %3296 = vset.pattern.permute.xlu0 29
      %3297 = vperm.xlu0 %3296, %v2079
      %v3298 = vpop.permute.xlu0 %3297
      %v3300 = vmul.f32 %v3298, %v2967
      %v3301 = vmul.f32 %v3298, %v2971
      %v3302 = vmul.f32 %v3298, %v2975
      %v3303 = vmul.f32 %v3298, %v2979
      %3308 = vrot.lane.b32.xlu0 %v3300, 91
      %v3309 = vpop.permute.xlu0 %3308
      %3310 = vrot.lane.b32.xlu0 %v3301, 91
      %v3311 = vpop.permute.xlu0 %3310
      %3312 = vrot.lane.b32.xlu0 %v3302, 91
      %v3313 = vpop.permute.xlu0 %3312
      %3314 = vrot.lane.b32.xlu0 %v3303, 91
      %v3315 = vpop.permute.xlu0 %3314
      %v3316 = vsel %vm520, %v3309, %v3311
      %v3317 = vsel %vm520, %v3311, %v3313
      %v3318 = vsel %vm520, %v3313, %v3315
      %v3323 = vadd.f32 %v3292, %v3309
      %v3324 = vadd.f32 %v3293, %v3316
      %v3325 = vadd.f32 %v3294, %v3317
      %v3326 = vadd.f32 %v3295, %v3318
      %3327 = vset.pattern.permute.xlu0 30
      %3328 = vperm.xlu0 %3327, %v2079
      %v3329 = vpop.permute.xlu0 %3328
      %v3331 = vmul.f32 %v3329, %v3034
      %v3332 = vmul.f32 %v3329, %v3038
      %v3333 = vmul.f32 %v3329, %v3042
      %v3334 = vmul.f32 %v3329, %v3046
      %3339 = vrot.lane.b32.xlu0 %v3331, 91
      %v3340 = vpop.permute.xlu0 %3339
      %3341 = vrot.lane.b32.xlu0 %v3332, 91
      %v3342 = vpop.permute.xlu0 %3341
      %3343 = vrot.lane.b32.xlu0 %v3333, 91
      %v3344 = vpop.permute.xlu0 %3343
      %3345 = vrot.lane.b32.xlu0 %v3334, 91
      %v3346 = vpop.permute.xlu0 %3345
      %v3347 = vsel %vm520, %v3340, %v3342
      %v3348 = vsel %vm520, %v3342, %v3344
      %v3349 = vsel %vm520, %v3344, %v3346
      %v3354 = vadd.f32 %v3323, %v3340
      %v3355 = vadd.f32 %v3324, %v3347
      %v3356 = vadd.f32 %v3325, %v3348
      %v3357 = vadd.f32 %v3326, %v3349
      %3358 = vset.pattern.permute.xlu0 31
      %3359 = vperm.xlu0 %3358, %v2079
      %v3360 = vpop.permute.xlu0 %3359
      %v3362 = vmul.f32 %v3360, %v3101
      %v3363 = vmul.f32 %v3360, %v3105
      %v3364 = vmul.f32 %v3360, %v3109
      %v3365 = vmul.f32 %v3360, %v3113
      %3370 = vrot.lane.b32.xlu0 %v3362, 91
      %v3371 = vpop.permute.xlu0 %3370
      %3372 = vrot.lane.b32.xlu0 %v3363, 91
      %v3373 = vpop.permute.xlu0 %3372
      %3374 = vrot.lane.b32.xlu0 %v3364, 91
      %v3375 = vpop.permute.xlu0 %3374
      %3376 = vrot.lane.b32.xlu0 %v3365, 91
      %v3377 = vpop.permute.xlu0 %3376
      %v3378 = vsel %vm520, %v3371, %v3373
      %v3379 = vsel %vm520, %v3373, %v3375
      %v3380 = vsel %vm520, %v3375, %v3377
      %v3385 = vadd.f32 %v3354, %v3371
      %v3386 = vadd.f32 %v3355, %v3378
      %v3387 = vadd.f32 %v3356, %v3379
      %v3388 = vadd.f32 %v3357, %v3380
      %3389 = vset.pattern.permute.xlu0 32
      %3390 = vperm.xlu0 %3389, %v2079
      %v3391 = vpop.permute.xlu0 %3390
      %v3393 = vmul.f32 %v3391, %v2900
      %v3394 = vmul.f32 %v3391, %v2904
      %v3395 = vmul.f32 %v3391, %v2908
      %v3396 = vmul.f32 %v3391, %v2912
      %3401 = vrot.lane.b32.xlu0 %v3393, 90
      %v3402 = vpop.permute.xlu0 %3401
      %3403 = vrot.lane.b32.xlu0 %v3394, 90
      %v3404 = vpop.permute.xlu0 %3403
      %3405 = vrot.lane.b32.xlu0 %v3395, 90
      %v3406 = vpop.permute.xlu0 %3405
      %3407 = vrot.lane.b32.xlu0 %v3396, 90
      %v3408 = vpop.permute.xlu0 %3407
      %v3409 = vsel %vm552, %v3402, %v3404
      %v3410 = vsel %vm552, %v3404, %v3406
      %v3411 = vsel %vm552, %v3406, %v3408
      %v3416 = vadd.f32 %v3385, %v3402
      %v3417 = vadd.f32 %v3386, %v3409
      %v3418 = vadd.f32 %v3387, %v3410
      %v3419 = vadd.f32 %v3388, %v3411
      %3420 = vset.pattern.permute.xlu0 33
      %3421 = vperm.xlu0 %3420, %v2079
      %v3422 = vpop.permute.xlu0 %3421
      %v3424 = vmul.f32 %v3422, %v2967
      %v3425 = vmul.f32 %v3422, %v2971
      %v3426 = vmul.f32 %v3422, %v2975
      %v3427 = vmul.f32 %v3422, %v2979
      %3432 = vrot.lane.b32.xlu0 %v3424, 90
      %v3433 = vpop.permute.xlu0 %3432
      %3434 = vrot.lane.b32.xlu0 %v3425, 90
      %v3435 = vpop.permute.xlu0 %3434
      %3436 = vrot.lane.b32.xlu0 %v3426, 90
      %v3437 = vpop.permute.xlu0 %3436
      %3438 = vrot.lane.b32.xlu0 %v3427, 90
      %v3439 = vpop.permute.xlu0 %3438
      %v3440 = vsel %vm552, %v3433, %v3435
      %v3441 = vsel %vm552, %v3435, %v3437
      %v3442 = vsel %vm552, %v3437, %v3439
      %v3447 = vadd.f32 %v3416, %v3433
      %v3448 = vadd.f32 %v3417, %v3440
      %v3449 = vadd.f32 %v3418, %v3441
      %v3450 = vadd.f32 %v3419, %v3442
      %3451 = vset.pattern.permute.xlu0 34
      %3452 = vperm.xlu0 %3451, %v2079
      %v3453 = vpop.permute.xlu0 %3452
      %v3455 = vmul.f32 %v3453, %v3034
      %v3456 = vmul.f32 %v3453, %v3038
      %v3457 = vmul.f32 %v3453, %v3042
      %v3458 = vmul.f32 %v3453, %v3046
      %3463 = vrot.lane.b32.xlu0 %v3455, 90
      %v3464 = vpop.permute.xlu0 %3463
      %3465 = vrot.lane.b32.xlu0 %v3456, 90
      %v3466 = vpop.permute.xlu0 %3465
      %3467 = vrot.lane.b32.xlu0 %v3457, 90
      %v3468 = vpop.permute.xlu0 %3467
      %3469 = vrot.lane.b32.xlu0 %v3458, 90
      %v3470 = vpop.permute.xlu0 %3469
      %v3471 = vsel %vm552, %v3464, %v3466
      %v3472 = vsel %vm552, %v3466, %v3468
      %v3473 = vsel %vm552, %v3468, %v3470
      %v3478 = vadd.f32 %v3447, %v3464
      %v3479 = vadd.f32 %v3448, %v3471
      %v3480 = vadd.f32 %v3449, %v3472
      %v3481 = vadd.f32 %v3450, %v3473
      %3482 = vset.pattern.permute.xlu0 35
      %3483 = vperm.xlu0 %3482, %v2079
      %v3484 = vpop.permute.xlu0 %3483
      %v3486 = vmul.f32 %v3484, %v3101
      %v3487 = vmul.f32 %v3484, %v3105
      %v3488 = vmul.f32 %v3484, %v3109
      %v3489 = vmul.f32 %v3484, %v3113
      %3494 = vrot.lane.b32.xlu0 %v3486, 90
      %v3495 = vpop.permute.xlu0 %3494
      %3496 = vrot.lane.b32.xlu0 %v3487, 90
      %v3497 = vpop.permute.xlu0 %3496
      %3498 = vrot.lane.b32.xlu0 %v3488, 90
      %v3499 = vpop.permute.xlu0 %3498
      %3500 = vrot.lane.b32.xlu0 %v3489, 90
      %v3501 = vpop.permute.xlu0 %3500
      %v3502 = vsel %vm552, %v3495, %v3497
      %v3503 = vsel %vm552, %v3497, %v3499
      %v3504 = vsel %vm552, %v3499, %v3501
      %v3509 = vadd.f32 %v3478, %v3495
      %v3510 = vadd.f32 %v3479, %v3502
      %v3511 = vadd.f32 %v3480, %v3503
      %v3512 = vadd.f32 %v3481, %v3504
      %v3517 = vcombine.low %v3509, %v3510
      %v3518 = vcombine.low %v3511, %v3512
      %3519 = vrot.lane.b32.xlu0 %v3517, 19
      %v3520 = vpop.permute.xlu0 %3519
      %3521 = vrot.lane.b32.xlu0 %v3518, 19
      %v3522 = vpop.permute.xlu0 %3521
      %v3523 = vrot.slane %v3520, 4
      %v3524 = vrot.slane %v3522, 4
      %v3525 = vsel %vm609, %v3523, %v3524
      %v3526 = vsel %vm611, %v3520, %v3525
      %v3527 = vsel %vm611, %v3522, %v3524
      %3530 = vst [vmem:[%s221] sm:$0x77] %v3526
      %3531 = vst [vmem:[%s221 + $0x8] sm:$0x7] %v3527
      %p3532 = scmp.lt.s32.totalorder %s16, 1
      %s3533 = scalar_select %p3532, %s16, 1
      %s3534 = smul.addr %s3533, 3
      %s3535 = smul.addr %s3534, 4
      %s3536 = scalar_lea.vmem %s5, %s3535
      // Predicated region
      $region41: #{basenet_forward.1} parent=39 // pred_check
        %p3537 = pneg %p144
      $region42: #{basenet_forward.1} parent=39 // pred_check_branch
        %3539 = sbr.rel (%p3537) target = $region44
      $region43: #{basenet_forward.1} parent=39 // pred_region
        _
      $region44: #{basenet_forward.1} parent=39 // pred_fallthru
        _
    $region40: #{basenet_forward.1} parent=5 // pred_fallthru
      _
    %p3540 = scmp.le.s32.totalorder 2, %s11
    // Predicated region
    $region45: #{basenet_forward.1} parent=5 // pred_check
      %p3541 = pneg %p3540
    $region46: #{basenet_forward.1} parent=5 // pred_check_branch
      %3543 = sbr.rel (%p3541) target = $region48
    $region47: #{basenet_forward.1} parent=5 // pred_region
      %s3544 = ssub.s32 %s11, 2
      // Predicated region
      $region49: #{basenet_forward.1} parent=47 // pred_check
        %p3545 = pneg %p150
      $region50: #{basenet_forward.1} parent=47 // pred_check_branch
        %3547 = sbr.rel (%p3545) target = $region52
      $region51: #{basenet_forward.1} parent=47 // pred_region
        %p3548 = scmp.lt.s32.totalorder %s17, 1
        %s3549 = scalar_select %p3548, %s17, 1
        %s3550 = smul.addr %s3549, 3
        %s3551 = smul.addr %s3550, 4
        %s3552 = scalar_lea.vmem %s5, %s3551
      $region52: #{basenet_forward.1} parent=47 // pred_fallthru
        _
    $region48: #{basenet_forward.1} parent=5 // pred_fallthru
      _
  $region6: #{basenet_forward.1} parent=0 // loop_footer
    %s15 = sadd.s32 1, %s11
  $region7: #{basenet_forward.1} parent=0 // loop_footer_branch
    %10 = sbr.rel target = $region3
  $region8: #{basenet_forward.1} parent=0 // loop_exit
    _

</llo_original>
